<compile_context>
chip_gen: v7x
topology: tpu7x:2x2x1
jax: 0.10.0
libtpu: 0.0.40
codegen_flags: <defaults>
</compile_context>

<pallas_src>
import jax
import jax.numpy as jnp
import numpy as np
from jax import lax
from jax.experimental import pallas as pl
from jax.experimental.pallas import tpu as pltpu

EPS = 1e-5


# ----------------------------------------------------------------------------
# In-kernel helpers
# ----------------------------------------------------------------------------
def _instance_norm_relu(acc):
    """InstanceNorm2d(affine=False, eps=1e-5) + ReLU on a channel-major
    (C, H*W) tile: mean/var are lane reductions, all VALU work is lane-dense."""
    mean = jnp.mean(acc, axis=1, keepdims=True)
    cen = acc - mean
    var = jnp.mean(cen * cen, axis=1, keepdims=True)          # biased variance
    return jnp.maximum(cen * lax.rsqrt(var + EPS), 0.0)


def _make_upconv_kernel(H2, W2, C1o, C2, Co, OFF):
    """Builds the fused UpConv kernel for static spatial / channel sizes."""
    P = H2 * W2
    Cin1 = C1o + C2

    def kernel(x1_ref, x2_ref, wup_ref, bup_ref, s_ref, m_ref,
               w1_ref, w2_ref, o_ref, xscr_ref):
        # ---- 3x3 conv (reflection padded) as 9 shift-window matmuls --------
        def conv3x3(cin, w_ref):
            # boundary masks (cin, P), precomputed in the wrapper as 0/1 f32
            col0 = m_ref[0, 0:cin, :] > 0.5
            colW = m_ref[1, 0:cin, :] > 0.5
            row0 = m_ref[2, 0:cin, :] > 0.5
            rowH = m_ref[3, 0:cin, :] > 0.5

            def rd(a, b):
                # flattened image shifted by (a rows, b cols): a lane-offset
                # load from the staging scratch (interior starts at lane OFF).
                s = OFF + a * W2 + b
                return xscr_ref[0:cin, s:s + P]

            def shifted(sy, sx):
                # value[ci, i*W2 + j] = x[ci, reflect(i+sy), reflect(j+sx)]
                v = rd(sy, sx)
                if sx != 0:
                    cm = col0 if sx < 0 else colW
                    v = jnp.where(cm, rd(sy, -sx), v)
                if sy != 0:
                    v2 = rd(-sy, sx)
                    if sx != 0:
                        v2 = jnp.where(cm, rd(-sy, -sx), v2)
                    rm = row0 if sy < 0 else rowH
                    v = jnp.where(rm, v2, v)
                return v

            acc = jnp.zeros((Co, P), jnp.float32)
            for ky in range(3):
                for kx in range(3):
                    acc = acc + jnp.dot(w_ref[ky * 3 + kx],
                                        shifted(ky - 1, kx - 1),
                                        preferred_element_type=jnp.float32)
            return acc

        # ---- ConvTranspose2d(k=2, s=2) + F.pad --------------------------------
        # One matmul over all coarse pixels, then the sub-pixel interleave and
        # the zero pad as 4 scatter matmuls against constant 0/1 matrices.
        x1 = x1_ref[0]                                          # (C1, H1*W1)
        y = jnp.dot(wup_ref[...], x1,
                    preferred_element_type=jnp.float32) + bup_ref[...]
        x1u = jnp.zeros((C1o, P), jnp.float32)
        for k in range(4):
            x1u = x1u + jnp.dot(y[k * C1o:(k + 1) * C1o, :], s_ref[k],
                                preferred_element_type=jnp.float32)

        # ---- stage [x1_up ; x2] (the torch.cat is never materialized in HBM);
        #      stores are 128-lane aligned, full-width and unmasked.
        xscr_ref[0:C1o, OFF:OFF + P] = x1u
        xscr_ref[C1o:Cin1, OFF:OFF + P] = x2_ref[0]

        # ---- conv1 -> InstanceNorm -> ReLU (conv bias cancelled by the mean)
        y1 = _instance_norm_relu(conv3x3(Cin1, w1_ref))         # (Co, P)

        # ---- conv2 on the in-VMEM activation ----------------------------------
        xscr_ref[0:Co, OFF:OFF + P] = y1
        y2 = _instance_norm_relu(conv3x3(Co, w2_ref))

        # ---- lane-dense final store: (Co, H2*W2) == NCHW layout ---------------
        o_ref[0] = y2

    return kernel


# ----------------------------------------------------------------------------
# Wrapper: all weight re-layouts / constants hoisted, no HBM transposes at all
# ----------------------------------------------------------------------------
def up_conv_pallas(x1_nchw, x2_nchw, params):
    """UpConv.forward(x1, x2) with NCHW inputs/outputs (PyTorch convention)."""
    B, C1, H1, W1 = x1_nchw.shape
    _, C2, H2, W2 = x2_nchw.shape
    P1, P2 = H1 * W1, H2 * W2

    up_w, up_b = params["up_w"], params["up_b"]
    w1, w2 = params["w1"], params["w2"]
    C1o = up_w.shape[1]                    # ConvTranspose2d out channels (= in_ch1)
    Co = w1.shape[0]                       # DoubleConv out channels
    Cin1 = C1o + C2

    # NCHW -> (B, C, H*W) is a free reshape (channel-major compute layout).
    x1 = x1_nchw.reshape(B, C1, P1).astype(jnp.float32)
    x2 = x2_nchw.reshape(B, C2, P2).astype(jnp.float32)

    # ---- static constants (trace-time numpy) -------------------------------
    dy, dx = H2 - 2 * H1, W2 - 2 * W1
    pad_t, pad_l = dy // 2, dx // 2

    # Sub-pixel scatter matrices: S[k=2*ki+kj, q=(i,j), p] = 1 where
    # p = (pad_t + 2i + ki)*W2 + (pad_l + 2j + kj).  Columns outside the valid
    # region stay zero => F.pad's zero border (without the deconv bias), free.
    ii, jj = np.meshgrid(np.arange(H1), np.arange(W1), indexing="ij")
    q = (ii * W1 + jj).reshape(-1)
    S = np.zeros((4, P1, P2), np.float32)
    for ki in range(2):
        for kj in range(2):
            p = ((pad_t + 2 * ii + ki) * W2 + (pad_l + 2 * jj + kj)).reshape(-1)
            S[2 * ki + kj, q, p] = 1.0

    # Reflection boundary masks over the flattened pixel axis.
    Cmax = max(Cin1, Co)
    pp = np.arange(P2)
    col, row = pp % W2, pp // W2
    base = np.stack([col == 0, col == W2 - 1,
                     row == 0, row == H2 - 1]).astype(np.float32)   # (4, P2)
    masks = np.ascontiguousarray(
        np.broadcast_to(base[:, None, :], (4, Cmax, P2)))

    # Weight re-layouts for channel-major matmuls (hoisted out of the kernel).
    # ConvTranspose2d weight (in, out, kH, kW) -> (4*C1o, C1), row = k*C1o+co.
    wup_cm = jnp.transpose(up_w, (2, 3, 1, 0)).reshape(4 * C1o, C1)
    bup_cm = jnp.tile(up_b, 4).reshape(4 * C1o, 1)
    # Conv2d weight (Co, Cin, 3, 3) -> (9, Co, Cin), leading idx = ky*3+kx.
    w1_cm = jnp.transpose(w1, (2, 3, 0, 1)).reshape(9, Co, Cin1)
    w2_cm = jnp.transpose(w2, (2, 3, 0, 1)).reshape(9, Co, Co)
    # params["b1"] / params["b2"] intentionally NOT passed: InstanceNorm2d with
    # affine=False and instance statistics cancels per-channel conv biases.

    # Staging scratch: flattened image centered at a 128-aligned lane offset so
    # the stores are dense; shifted windows are cheap lane-offset loads.
    OFF = ((W2 + 1 + 127) // 128) * 128

    kernel = _make_upconv_kernel(H2, W2, C1o, C2, Co, OFF)

    out = pl.pallas_call(
        kernel,
        out_shape=jax.ShapeDtypeStruct((B, Co, P2), jnp.float32),
        grid=(B,),
        in_specs=[
            pl.BlockSpec((1, C1, P1), lambda b: (b, 0, 0)),
            pl.BlockSpec((1, C2, P2), lambda b: (b, 0, 0)),
            pl.BlockSpec((4 * C1o, C1), lambda b: (0, 0)),
            pl.BlockSpec((4 * C1o, 1), lambda b: (0, 0)),
            pl.BlockSpec((4, P1, P2), lambda b: (0, 0, 0)),
            pl.BlockSpec((4, Cmax, P2), lambda b: (0, 0, 0)),
            pl.BlockSpec((9, Co, Cin1), lambda b: (0, 0, 0)),
            pl.BlockSpec((9, Co, Co), lambda b: (0, 0, 0)),
        ],
        out_specs=pl.BlockSpec((1, Co, P2), lambda b: (b, 0, 0)),
        scratch_shapes=[pltpu.VMEM((Cmax, P2 + 2 * OFF), jnp.float32)],
        compiler_params=pltpu.CompilerParams(
            dimension_semantics=("parallel",)),
    )(x1, x2, wup_cm, bup_cm, jnp.asarray(S), jnp.asarray(masks), w1_cm, w2_cm)

    # (B, Co, H2*W2) is already NCHW up to a free reshape.
    return out.reshape(B, Co, H2, W2)


# ----------------------------------------------------------------------------
# Pure-JAX reference (mirrors the PyTorch module, biases included) for checking
# ----------------------------------------------------------------------------
def _ref_conv3_in_relu(x, w, b):
    xp = jnp.pad(x, ((0, 0), (1, 1), (1, 1), (0, 0)), mode="reflect")
    wk = jnp.transpose(w, (2, 3, 1, 0))                      # HWIO
    y = lax.conv_general_dilated(
        xp, wk, window_strides=(1, 1), padding="VALID",
        dimension_numbers=("NHWC", "HWIO", "NHWC"),
        precision=lax.Precision.HIGHEST) + b
    mean = jnp.mean(y, axis=(1, 2), keepdims=True)
    var = jnp.mean((y - mean) ** 2, axis=(1, 2), keepdims=True)
    return jnp.maximum((y - mean) * lax.rsqrt(var + EPS), 0.0)


def _ref_upconv(x1_nchw, x2_nchw, p):
    x1 = jnp.transpose(x1_nchw, (0, 2, 3, 1)).astype(jnp.float32)
    x2 = jnp.transpose(x2_nchw, (0, 2, 3, 1)).astype(jnp.float32)
    B, H1, W1, _ = x1.shape
    Cup = p["up_w"].shape[1]
    up = jnp.zeros((B, 2 * H1, 2 * W1, Cup), jnp.float32)
    for kh in range(2):
        for kw in range(2):
            v = jnp.einsum("bhwc,cd->bhwd", x1, p["up_w"][:, :, kh, kw],
                           precision=lax.Precision.HIGHEST)
            up = up.at[:, kh::2, kw::2, :].set(v)
    up = up + p["up_b"]
    dy = x2.shape[1] - up.shape[1]
    dx = x2.shape[2] - up.shape[2]
    up = jnp.pad(up, ((0, 0), (dy // 2, dy - dy // 2),
                      (dx // 2, dx - dx // 2), (0, 0)))
    x = jnp.concatenate([up, x2], axis=-1)
    x = _ref_conv3_in_relu(x, p["w1"], p["b1"])
    x = _ref_conv3_in_relu(x, p["w2"], p["b2"])
    return jnp.transpose(x, (0, 3, 1, 2))


# ----------------------------------------------------------------------------
# Deterministic parameter init (shapes follow the nn.Module __init__)
# ----------------------------------------------------------------------------
def init_upconv_params(key, in_ch1, in_ch2, out_ch):
    k = jax.random.split(key, 6)
    s = 0.1
    return {
        # nn.ConvTranspose2d(in_ch1, in_ch1, 2, 2): weight (in, out, kH, kW)
        "up_w": s * jax.random.normal(k[0], (in_ch1, in_ch1, 2, 2), jnp.float32),
        "up_b": s * jax.random.normal(k[1], (in_ch1,), jnp.float32),
        # DoubleConv(in_ch1 + in_ch2, out_ch): nn.Conv2d weights (out, in, 3, 3)
        "w1": s * jax.random.normal(k[2], (out_ch, in_ch1 + in_ch2, 3, 3), jnp.float32),
        "b1": s * jax.random.normal(k[3], (out_ch,), jnp.float32),
        "w2": s * jax.random.normal(k[4], (out_ch, out_ch, 3, 3), jnp.float32),
        "b2": s * jax.random.normal(k[5], (out_ch,), jnp.float32),
    }


if __name__ == "__main__":
    key = jax.random.PRNGKey(0)
    kp, kx1, kx2 = jax.random.split(key, 3)

    # UpConv(in_ch1=8, in_ch2=8, out_ch=8); x1 is the coarse feature map,
    # x2 the skip connection at 2x the spatial resolution (NCHW, like PyTorch).
    in_ch1, in_ch2, out_ch = 8, 8, 8
    B = 2
    x1 = jax.random.normal(kx1, (B, in_ch1, 8, 8), jnp.float32)
    x2 = jax.random.normal(kx2, (B, in_ch2, 16, 16), jnp.float32)
    params = init_upconv_params(kp, in_ch1, in_ch2, out_ch)

    out = jax.jit(up_conv_pallas)(x1, x2, params)
    out = jax.block_until_ready(out)
    assert out.shape == (B, out_ch, 16, 16), out.shape

    ref = jax.block_until_ready(_ref_upconv(x1, x2, params))
    max_err = float(jnp.max(jnp.abs(out - ref)))
    # All-f32 path: expected error ~1e-5; bound kept a bit above a worst-case
    # reduced-precision MXU mode while still catching any layout/indexing bug
    # (those produce O(1) errors after InstanceNorm).
    assert max_err < 2e-3, f"max abs err vs reference = {max_err}"

    print("KERNEL_OK")
</pallas_src>

<mosaic_0001>
module attributes {stable_mosaic.version = 11 : i64} {
  func.func @kernel(%arg0: i32, %arg1: memref<1x8x64xf32, #tpu.memory_space<vmem>>, %arg2: memref<1x8x256xf32, #tpu.memory_space<vmem>>, %arg3: memref<32x8xf32, #tpu.memory_space<vmem>>, %arg4: memref<32x1xf32, #tpu.memory_space<vmem>>, %arg5: memref<4x64x256xf32, #tpu.memory_space<vmem>>, %arg6: memref<4x16x256xf32, #tpu.memory_space<vmem>>, %arg7: memref<9x8x16xf32, #tpu.memory_space<vmem>>, %arg8: memref<9x8x8xf32, #tpu.memory_space<vmem>>, %arg9: memref<1x8x256xf32, #tpu.memory_space<vmem>>, %arg10: memref<16x512xf32, #tpu.memory_space<vmem>>) attributes {dimension_semantics = [#tpu.dimension_semantics<parallel>], iteration_bounds = array<i64: 2>, scalar_prefetch = 0 : i64, scratch_operands = 1 : i64, tpu.core_type = #tpu.core_type<tc>, window_params = [{transform_indices = @transform_0, window_bounds = array<i64: 1, 8, 64>}, {transform_indices = @transform_1, window_bounds = array<i64: 1, 8, 256>}, {pipeline_mode = #tpu.pipeline_mode<synchronous>, transform_indices = @transform_2, window_bounds = array<i64: 32, 8>}, {pipeline_mode = #tpu.pipeline_mode<synchronous>, transform_indices = @transform_3, window_bounds = array<i64: 32, 1>}, {pipeline_mode = #tpu.pipeline_mode<synchronous>, transform_indices = @transform_4, window_bounds = array<i64: 4, 64, 256>}, {pipeline_mode = #tpu.pipeline_mode<synchronous>, transform_indices = @transform_5, window_bounds = array<i64: 4, 16, 256>}, {pipeline_mode = #tpu.pipeline_mode<synchronous>, transform_indices = @transform_6, window_bounds = array<i64: 9, 8, 16>}, {pipeline_mode = #tpu.pipeline_mode<synchronous>, transform_indices = @transform_7, window_bounds = array<i64: 9, 8, 8>}, {transform_indices = @transform_8, window_bounds = array<i64: 1, 8, 256>}]} {
    %c0 = arith.constant 0 : index
    %c0_0 = arith.constant 0 : index
    %c0_1 = arith.constant 0 : index
    %0 = vector.load %arg1[%c0, %c0_0, %c0_1] : memref<1x8x64xf32, #tpu.memory_space<vmem>>, vector<1x8x64xf32>
    %1 = vector.shape_cast %0 : vector<1x8x64xf32> to vector<8x64xf32>
    %c0_2 = arith.constant 0 : index
    %c0_3 = arith.constant 0 : index
    %2 = vector.load %arg3[%c0_2, %c0_3] : memref<32x8xf32, #tpu.memory_space<vmem>>, vector<32x8xf32>
    %cst = arith.constant dense<0.000000e+00> : vector<32x64xf32>
    %3 = tpu.matmul %2, %1, %cst {dimension_numbers = #tpu.dot_dimension_numbers<[1], [0], [0], [1], [0, 0, 1, 1], [], []>} : vector<32x8xf32>, vector<8x64xf32>, vector<32x64xf32> -> vector<32x64xf32>
    %c0_4 = arith.constant 0 : index
    %c0_5 = arith.constant 0 : index
    %4 = vector.load %arg4[%c0_4, %c0_5] : memref<32x1xf32, #tpu.memory_space<vmem>>, vector<32x1xf32>
    %5 = vector.broadcast %4 : vector<32x1xf32> to vector<32x64xf32>
    %6 = arith.addf %3, %5 : vector<32x64xf32>
    %cst_6 = arith.constant 0.000000e+00 : f32
    %7 = vector.broadcast %cst_6 : f32 to vector<8x256xf32>
    %8 = vector.extract_strided_slice %6 {offsets = [0, 0], sizes = [8, 64], strides = [1, 1]} : vector<32x64xf32> to vector<8x64xf32>
    %c0_7 = arith.constant 0 : index
    %c0_8 = arith.constant 0 : index
    %c0_9 = arith.constant 0 : index
    %9 = vector.load %arg5[%c0_7, %c0_8, %c0_9] : memref<4x64x256xf32, #tpu.memory_space<vmem>>, vector<1x64x256xf32>
    %10 = vector.shape_cast %9 : vector<1x64x256xf32> to vector<64x256xf32>
    %cst_10 = arith.constant dense<0.000000e+00> : vector<8x256xf32>
    %11 = tpu.matmul %8, %10, %cst_10 {dimension_numbers = #tpu.dot_dimension_numbers<[1], [0], [0], [1], [0, 0, 1, 1], [], []>} : vector<8x64xf32>, vector<64x256xf32>, vector<8x256xf32> -> vector<8x256xf32>
    %12 = arith.addf %7, %11 : vector<8x256xf32>
    %13 = vector.extract_strided_slice %6 {offsets = [8, 0], sizes = [8, 64], strides = [1, 1]} : vector<32x64xf32> to vector<8x64xf32>
    %c1 = arith.constant 1 : index
    %c0_11 = arith.constant 0 : index
    %c0_12 = arith.constant 0 : index
    %14 = vector.load %arg5[%c1, %c0_11, %c0_12] : memref<4x64x256xf32, #tpu.memory_space<vmem>>, vector<1x64x256xf32>
    %15 = vector.shape_cast %14 : vector<1x64x256xf32> to vector<64x256xf32>
    %cst_13 = arith.constant dense<0.000000e+00> : vector<8x256xf32>
    %16 = tpu.matmul %13, %15, %cst_13 {dimension_numbers = #tpu.dot_dimension_numbers<[1], [0], [0], [1], [0, 0, 1, 1], [], []>} : vector<8x64xf32>, vector<64x256xf32>, vector<8x256xf32> -> vector<8x256xf32>
    %17 = arith.addf %12, %16 : vector<8x256xf32>
    %18 = vector.extract_strided_slice %6 {offsets = [16, 0], sizes = [8, 64], strides = [1, 1]} : vector<32x64xf32> to vector<8x64xf32>
    %c2 = arith.constant 2 : index
    %c0_14 = arith.constant 0 : index
    %c0_15 = arith.constant 0 : index
    %19 = vector.load %arg5[%c2, %c0_14, %c0_15] : memref<4x64x256xf32, #tpu.memory_space<vmem>>, vector<1x64x256xf32>
    %20 = vector.shape_cast %19 : vector<1x64x256xf32> to vector<64x256xf32>
    %cst_16 = arith.constant dense<0.000000e+00> : vector<8x256xf32>
    %21 = tpu.matmul %18, %20, %cst_16 {dimension_numbers = #tpu.dot_dimension_numbers<[1], [0], [0], [1], [0, 0, 1, 1], [], []>} : vector<8x64xf32>, vector<64x256xf32>, vector<8x256xf32> -> vector<8x256xf32>
    %22 = arith.addf %17, %21 : vector<8x256xf32>
    %23 = vector.extract_strided_slice %6 {offsets = [24, 0], sizes = [8, 64], strides = [1, 1]} : vector<32x64xf32> to vector<8x64xf32>
    %c3 = arith.constant 3 : index
    %c0_17 = arith.constant 0 : index
    %c0_18 = arith.constant 0 : index
    %24 = vector.load %arg5[%c3, %c0_17, %c0_18] : memref<4x64x256xf32, #tpu.memory_space<vmem>>, vector<1x64x256xf32>
    %25 = vector.shape_cast %24 : vector<1x64x256xf32> to vector<64x256xf32>
    %cst_19 = arith.constant dense<0.000000e+00> : vector<8x256xf32>
    %26 = tpu.matmul %23, %25, %cst_19 {dimension_numbers = #tpu.dot_dimension_numbers<[1], [0], [0], [1], [0, 0, 1, 1], [], []>} : vector<8x64xf32>, vector<64x256xf32>, vector<8x256xf32> -> vector<8x256xf32>
    %27 = arith.addf %22, %26 : vector<8x256xf32>
    %c0_20 = arith.constant 0 : index
    %c128 = arith.constant 128 : index
    %28 = vector.load %arg10[%c0_20, %c128] : memref<16x512xf32, #tpu.memory_space<vmem>>, vector<8x256xf32>
    tpu.vector_store %arg10[%c0_20, %c128], %27 {strides = array<i32>} : memref<16x512xf32, #tpu.memory_space<vmem>>, vector<8x256xf32>,
    %c0_21 = arith.constant 0 : index
    %c0_22 = arith.constant 0 : index
    %c0_23 = arith.constant 0 : index
    %29 = vector.load %arg2[%c0_21, %c0_22, %c0_23] : memref<1x8x256xf32, #tpu.memory_space<vmem>>, vector<1x8x256xf32>
    %30 = vector.shape_cast %29 : vector<1x8x256xf32> to vector<8x256xf32>
    %c8 = arith.constant 8 : index
    %c128_24 = arith.constant 128 : index
    %31 = vector.load %arg10[%c8, %c128_24] : memref<16x512xf32, #tpu.memory_space<vmem>>, vector<8x256xf32>
    tpu.vector_store %arg10[%c8, %c128_24], %30 {strides = array<i32>} : memref<16x512xf32, #tpu.memory_space<vmem>>, vector<8x256xf32>,
    %c0_25 = arith.constant 0 : index
    %c0_26 = arith.constant 0 : index
    %c0_27 = arith.constant 0 : index
    %32 = vector.load %arg6[%c0_25, %c0_26, %c0_27] : memref<4x16x256xf32, #tpu.memory_space<vmem>>, vector<1x16x256xf32>
    %33 = vector.shape_cast %32 : vector<1x16x256xf32> to vector<16x256xf32>
    %cst_28 = arith.constant 5.000000e-01 : f32
    %34 = vector.broadcast %cst_28 : f32 to vector<16x256xf32>
    %35 = arith.cmpf ogt, %33, %34 : vector<16x256xf32>
    %c1_29 = arith.constant 1 : index
    %c0_30 = arith.constant 0 : index
    %c0_31 = arith.constant 0 : index
    %36 = vector.load %arg6[%c1_29, %c0_30, %c0_31] : memref<4x16x256xf32, #tpu.memory_space<vmem>>, vector<1x16x256xf32>
    %37 = vector.shape_cast %36 : vector<1x16x256xf32> to vector<16x256xf32>
    %cst_32 = arith.constant 5.000000e-01 : f32
    %38 = vector.broadcast %cst_32 : f32 to vector<16x256xf32>
    %39 = arith.cmpf ogt, %37, %38 : vector<16x256xf32>
    %c2_33 = arith.constant 2 : index
    %c0_34 = arith.constant 0 : index
    %c0_35 = arith.constant 0 : index
    %40 = vector.load %arg6[%c2_33, %c0_34, %c0_35] : memref<4x16x256xf32, #tpu.memory_space<vmem>>, vector<1x16x256xf32>
    %41 = vector.shape_cast %40 : vector<1x16x256xf32> to vector<16x256xf32>
    %cst_36 = arith.constant 5.000000e-01 : f32
    %42 = vector.broadcast %cst_36 : f32 to vector<16x256xf32>
    %43 = arith.cmpf ogt, %41, %42 : vector<16x256xf32>
    %c3_37 = arith.constant 3 : index
    %c0_38 = arith.constant 0 : index
    %c0_39 = arith.constant 0 : index
    %44 = vector.load %arg6[%c3_37, %c0_38, %c0_39] : memref<4x16x256xf32, #tpu.memory_space<vmem>>, vector<1x16x256xf32>
    %45 = vector.shape_cast %44 : vector<1x16x256xf32> to vector<16x256xf32>
    %cst_40 = arith.constant 5.000000e-01 : f32
    %46 = vector.broadcast %cst_40 : f32 to vector<16x256xf32>
    %47 = arith.cmpf ogt, %45, %46 : vector<16x256xf32>
    %cst_41 = arith.constant 0.000000e+00 : f32
    %48 = vector.broadcast %cst_41 : f32 to vector<8x256xf32>
    %c0_42 = arith.constant 0 : index
    %c0_43 = arith.constant 0 : index
    %c0_44 = arith.constant 0 : index
    %49 = vector.load %arg7[%c0_42, %c0_43, %c0_44] : memref<9x8x16xf32, #tpu.memory_space<vmem>>, vector<1x8x16xf32>
    %50 = vector.shape_cast %49 : vector<1x8x16xf32> to vector<8x16xf32>
    %c0_45 = arith.constant 0 : index
    %c111 = arith.constant 111 : index
    %51 = vector.load %arg10[%c0_45, %c111] : memref<16x512xf32, #tpu.memory_space<vmem>>, vector<16x256xf32>
    %c0_46 = arith.constant 0 : index
    %c113 = arith.constant 113 : index
    %52 = vector.load %arg10[%c0_46, %c113] : memref<16x512xf32, #tpu.memory_space<vmem>>, vector<16x256xf32>
    %53 = arith.select %35, %52, %51 : vector<16x256xi1>, vector<16x256xf32>
    %c0_47 = arith.constant 0 : index
    %c143 = arith.constant 143 : index
    %54 = vector.load %arg10[%c0_47, %c143] : memref<16x512xf32, #tpu.memory_space<vmem>>, vector<16x256xf32>
    %c0_48 = arith.constant 0 : index
    %c145 = arith.constant 145 : index
    %55 = vector.load %arg10[%c0_48, %c145] : memref<16x512xf32, #tpu.memory_space<vmem>>, vector<16x256xf32>
    %56 = arith.select %35, %55, %54 : vector<16x256xi1>, vector<16x256xf32>
    %57 = arith.select %43, %56, %53 : vector<16x256xi1>, vector<16x256xf32>
    %cst_49 = arith.constant dense<0.000000e+00> : vector<8x256xf32>
    %58 = tpu.matmul %50, %57, %cst_49 {dimension_numbers = #tpu.dot_dimension_numbers<[1], [0], [0], [1], [0, 0, 1, 1], [], []>} : vector<8x16xf32>, vector<16x256xf32>, vector<8x256xf32> -> vector<8x256xf32>
    %59 = arith.addf %48, %58 : vector<8x256xf32>
    %c1_50 = arith.constant 1 : index
    %c0_51 = arith.constant 0 : index
    %c0_52 = arith.constant 0 : index
    %60 = vector.load %arg7[%c1_50, %c0_51, %c0_52] : memref<9x8x16xf32, #tpu.memory_space<vmem>>, vector<1x8x16xf32>
    %61 = vector.shape_cast %60 : vector<1x8x16xf32> to vector<8x16xf32>
    %c0_53 = arith.constant 0 : index
    %c112 = arith.constant 112 : index
    %62 = vector.load %arg10[%c0_53, %c112] : memref<16x512xf32, #tpu.memory_space<vmem>>, vector<16x256xf32>
    %c0_54 = arith.constant 0 : index
    %c144 = arith.constant 144 : index
    %63 = vector.load %arg10[%c0_54, %c144] : memref<16x512xf32, #tpu.memory_space<vmem>>, vector<16x256xf32>
    %64 = arith.select %43, %63, %62 : vector<16x256xi1>, vector<16x256xf32>
    %cst_55 = arith.constant dense<0.000000e+00> : vector<8x256xf32>
    %65 = tpu.matmul %61, %64, %cst_55 {dimension_numbers = #tpu.dot_dimension_numbers<[1], [0], [0], [1], [0, 0, 1, 1], [], []>} : vector<8x16xf32>, vector<16x256xf32>, vector<8x256xf32> -> vector<8x256xf32>
    %66 = arith.addf %59, %65 : vector<8x256xf32>
    %c2_56 = arith.constant 2 : index
    %c0_57 = arith.constant 0 : index
    %c0_58 = arith.constant 0 : index
    %67 = vector.load %arg7[%c2_56, %c0_57, %c0_58] : memref<9x8x16xf32, #tpu.memory_space<vmem>>, vector<1x8x16xf32>
    %68 = vector.shape_cast %67 : vector<1x8x16xf32> to vector<8x16xf32>
    %c0_59 = arith.constant 0 : index
    %c113_60 = arith.constant 113 : index
    %69 = vector.load %arg10[%c0_59, %c113_60] : memref<16x512xf32, #tpu.memory_space<vmem>>, vector<16x256xf32>
    %c0_61 = arith.constant 0 : index
    %c111_62 = arith.constant 111 : index
    %70 = vector.load %arg10[%c0_61, %c111_62] : memref<16x512xf32, #tpu.memory_space<vmem>>, vector<16x256xf32>
    %71 = arith.select %39, %70, %69 : vector<16x256xi1>, vector<16x256xf32>
    %c0_63 = arith.constant 0 : index
    %c145_64 = arith.constant 145 : index
    %72 = vector.load %arg10[%c0_63, %c145_64] : memref<16x512xf32, #tpu.memory_space<vmem>>, vector<16x256xf32>
    %c0_65 = arith.constant 0 : index
    %c143_66 = arith.constant 143 : index
    %73 = vector.load %arg10[%c0_65, %c143_66] : memref<16x512xf32, #tpu.memory_space<vmem>>, vector<16x256xf32>
    %74 = arith.select %39, %73, %72 : vector<16x256xi1>, vector<16x256xf32>
    %75 = arith.select %43, %74, %71 : vector<16x256xi1>, vector<16x256xf32>
    %cst_67 = arith.constant dense<0.000000e+00> : vector<8x256xf32>
    %76 = tpu.matmul %68, %75, %cst_67 {dimension_numbers = #tpu.dot_dimension_numbers<[1], [0], [0], [1], [0, 0, 1, 1], [], []>} : vector<8x16xf32>, vector<16x256xf32>, vector<8x256xf32> -> vector<8x256xf32>
    %77 = arith.addf %66, %76 : vector<8x256xf32>
    %c3_68 = arith.constant 3 : index
    %c0_69 = arith.constant 0 : index
    %c0_70 = arith.constant 0 : index
    %78 = vector.load %arg7[%c3_68, %c0_69, %c0_70] : memref<9x8x16xf32, #tpu.memory_space<vmem>>, vector<1x8x16xf32>
    %79 = vector.shape_cast %78 : vector<1x8x16xf32> to vector<8x16xf32>
    %c0_71 = arith.constant 0 : index
    %c127 = arith.constant 127 : index
    %80 = vector.load %arg10[%c0_71, %c127] : memref<16x512xf32, #tpu.memory_space<vmem>>, vector<16x256xf32>
    %c0_72 = arith.constant 0 : index
    %c129 = arith.constant 129 : index
    %81 = vector.load %arg10[%c0_72, %c129] : memref<16x512xf32, #tpu.memory_space<vmem>>, vector<16x256xf32>
    %82 = arith.select %35, %81, %80 : vector<16x256xi1>, vector<16x256xf32>
    %cst_73 = arith.constant dense<0.000000e+00> : vector<8x256xf32>
    %83 = tpu.matmul %79, %82, %cst_73 {dimension_numbers = #tpu.dot_dimension_numbers<[1], [0], [0], [1], [0, 0, 1, 1], [], []>} : vector<8x16xf32>, vector<16x256xf32>, vector<8x256xf32> -> vector<8x256xf32>
    %84 = arith.addf %77, %83 : vector<8x256xf32>
    %c4 = arith.constant 4 : index
    %c0_74 = arith.constant 0 : index
    %c0_75 = arith.constant 0 : index
    %85 = vector.load %arg7[%c4, %c0_74, %c0_75] : memref<9x8x16xf32, #tpu.memory_space<vmem>>, vector<1x8x16xf32>
    %86 = vector.shape_cast %85 : vector<1x8x16xf32> to vector<8x16xf32>
    %c0_76 = arith.constant 0 : index
    %c128_77 = arith.constant 128 : index
    %87 = vector.load %arg10[%c0_76, %c128_77] : memref<16x512xf32, #tpu.memory_space<vmem>>, vector<16x256xf32>
    %cst_78 = arith.constant dense<0.000000e+00> : vector<8x256xf32>
    %88 = tpu.matmul %86, %87, %cst_78 {dimension_numbers = #tpu.dot_dimension_numbers<[1], [0], [0], [1], [0, 0, 1, 1], [], []>} : vector<8x16xf32>, vector<16x256xf32>, vector<8x256xf32> -> vector<8x256xf32>
    %89 = arith.addf %84, %88 : vector<8x256xf32>
    %c5 = arith.constant 5 : index
    %c0_79 = arith.constant 0 : index
    %c0_80 = arith.constant 0 : index
    %90 = vector.load %arg7[%c5, %c0_79, %c0_80] : memref<9x8x16xf32, #tpu.memory_space<vmem>>, vector<1x8x16xf32>
    %91 = vector.shape_cast %90 : vector<1x8x16xf32> to vector<8x16xf32>
    %c0_81 = arith.constant 0 : index
    %c129_82 = arith.constant 129 : index
    %92 = vector.load %arg10[%c0_81, %c129_82] : memref<16x512xf32, #tpu.memory_space<vmem>>, vector<16x256xf32>
    %c0_83 = arith.constant 0 : index
    %c127_84 = arith.constant 127 : index
    %93 = vector.load %arg10[%c0_83, %c127_84] : memref<16x512xf32, #tpu.memory_space<vmem>>, vector<16x256xf32>
    %94 = arith.select %39, %93, %92 : vector<16x256xi1>, vector<16x256xf32>
    %cst_85 = arith.constant dense<0.000000e+00> : vector<8x256xf32>
    %95 = tpu.matmul %91, %94, %cst_85 {dimension_numbers = #tpu.dot_dimension_numbers<[1], [0], [0], [1], [0, 0, 1, 1], [], []>} : vector<8x16xf32>, vector<16x256xf32>, vector<8x256xf32> -> vector<8x256xf32>
    %96 = arith.addf %89, %95 : vector<8x256xf32>
    %c6 = arith.constant 6 : index
    %c0_86 = arith.constant 0 : index
    %c0_87 = arith.constant 0 : index
    %97 = vector.load %arg7[%c6, %c0_86, %c0_87] : memref<9x8x16xf32, #tpu.memory_space<vmem>>, vector<1x8x16xf32>
    %98 = vector.shape_cast %97 : vector<1x8x16xf32> to vector<8x16xf32>
    %c0_88 = arith.constant 0 : index
    %c143_89 = arith.constant 143 : index
    %99 = vector.load %arg10[%c0_88, %c143_89] : memref<16x512xf32, #tpu.memory_space<vmem>>, vector<16x256xf32>
    %c0_90 = arith.constant 0 : index
    %c145_91 = arith.constant 145 : index
    %100 = vector.load %arg10[%c0_90, %c145_91] : memref<16x512xf32, #tpu.memory_space<vmem>>, vector<16x256xf32>
    %101 = arith.select %35, %100, %99 : vector<16x256xi1>, vector<16x256xf32>
    %c0_92 = arith.constant 0 : index
    %c111_93 = arith.constant 111 : index
    %102 = vector.load %arg10[%c0_92, %c111_93] : memref<16x512xf32, #tpu.memory_space<vmem>>, vector<16x256xf32>
    %c0_94 = arith.constant 0 : index
    %c113_95 = arith.constant 113 : index
    %103 = vector.load %arg10[%c0_94, %c113_95] : memref<16x512xf32, #tpu.memory_space<vmem>>, vector<16x256xf32>
    %104 = arith.select %35, %103, %102 : vector<16x256xi1>, vector<16x256xf32>
    %105 = arith.select %47, %104, %101 : vector<16x256xi1>, vector<16x256xf32>
    %cst_96 = arith.constant dense<0.000000e+00> : vector<8x256xf32>
    %106 = tpu.matmul %98, %105, %cst_96 {dimension_numbers = #tpu.dot_dimension_numbers<[1], [0], [0], [1], [0, 0, 1, 1], [], []>} : vector<8x16xf32>, vector<16x256xf32>, vector<8x256xf32> -> vector<8x256xf32>
    %107 = arith.addf %96, %106 : vector<8x256xf32>
    %c7 = arith.constant 7 : index
    %c0_97 = arith.constant 0 : index
    %c0_98 = arith.constant 0 : index
    %108 = vector.load %arg7[%c7, %c0_97, %c0_98] : memref<9x8x16xf32, #tpu.memory_space<vmem>>, vector<1x8x16xf32>
    %109 = vector.shape_cast %108 : vector<1x8x16xf32> to vector<8x16xf32>
    %c0_99 = arith.constant 0 : index
    %c144_100 = arith.constant 144 : index
    %110 = vector.load %arg10[%c0_99, %c144_100] : memref<16x512xf32, #tpu.memory_space<vmem>>, vector<16x256xf32>
    %c0_101 = arith.constant 0 : index
    %c112_102 = arith.constant 112 : index
    %111 = vector.load %arg10[%c0_101, %c112_102] : memref<16x512xf32, #tpu.memory_space<vmem>>, vector<16x256xf32>
    %112 = arith.select %47, %111, %110 : vector<16x256xi1>, vector<16x256xf32>
    %cst_103 = arith.constant dense<0.000000e+00> : vector<8x256xf32>
    %113 = tpu.matmul %109, %112, %cst_103 {dimension_numbers = #tpu.dot_dimension_numbers<[1], [0], [0], [1], [0, 0, 1, 1], [], []>} : vector<8x16xf32>, vector<16x256xf32>, vector<8x256xf32> -> vector<8x256xf32>
    %114 = arith.addf %107, %113 : vector<8x256xf32>
    %c8_104 = arith.constant 8 : index
    %c0_105 = arith.constant 0 : index
    %c0_106 = arith.constant 0 : index
    %115 = vector.load %arg7[%c8_104, %c0_105, %c0_106] : memref<9x8x16xf32, #tpu.memory_space<vmem>>, vector<1x8x16xf32>
    %116 = vector.shape_cast %115 : vector<1x8x16xf32> to vector<8x16xf32>
    %c0_107 = arith.constant 0 : index
    %c145_108 = arith.constant 145 : index
    %117 = vector.load %arg10[%c0_107, %c145_108] : memref<16x512xf32, #tpu.memory_space<vmem>>, vector<16x256xf32>
    %c0_109 = arith.constant 0 : index
    %c143_110 = arith.constant 143 : index
    %118 = vector.load %arg10[%c0_109, %c143_110] : memref<16x512xf32, #tpu.memory_space<vmem>>, vector<16x256xf32>
    %119 = arith.select %39, %118, %117 : vector<16x256xi1>, vector<16x256xf32>
    %c0_111 = arith.constant 0 : index
    %c113_112 = arith.constant 113 : index
    %120 = vector.load %arg10[%c0_111, %c113_112] : memref<16x512xf32, #tpu.memory_space<vmem>>, vector<16x256xf32>
    %c0_113 = arith.constant 0 : index
    %c111_114 = arith.constant 111 : index
    %121 = vector.load %arg10[%c0_113, %c111_114] : memref<16x512xf32, #tpu.memory_space<vmem>>, vector<16x256xf32>
    %122 = arith.select %39, %121, %120 : vector<16x256xi1>, vector<16x256xf32>
    %123 = arith.select %47, %122, %119 : vector<16x256xi1>, vector<16x256xf32>
    %cst_115 = arith.constant dense<0.000000e+00> : vector<8x256xf32>
    %124 = tpu.matmul %116, %123, %cst_115 {dimension_numbers = #tpu.dot_dimension_numbers<[1], [0], [0], [1], [0, 0, 1, 1], [], []>} : vector<8x16xf32>, vector<16x256xf32>, vector<8x256xf32> -> vector<8x256xf32>
    %125 = arith.addf %114, %124 : vector<8x256xf32>
    %cst_116 = arith.constant dense<0.000000e+00> : vector<8xf32>
    %126 = vector.multi_reduction <add>, %125, %cst_116 [1] : vector<8x256xf32> to vector<8xf32>
    %127 = vector.shape_cast %126 : vector<8xf32> to vector<8x1xf32>
    %cst_117 = arith.constant 2.560000e+02 : f32
    %128 = vector.broadcast %cst_117 : f32 to vector<8x1xf32>
    %129 = arith.divf %127, %128 : vector<8x1xf32>
    %130 = vector.broadcast %129 : vector<8x1xf32> to vector<8x256xf32>
    %131 = arith.subf %125, %130 : vector<8x256xf32>
    %132 = arith.mulf %131, %131 : vector<8x256xf32>
    %cst_118 = arith.constant dense<0.000000e+00> : vector<8xf32>
    %133 = vector.multi_reduction <add>, %132, %cst_118 [1] : vector<8x256xf32> to vector<8xf32>
    %134 = vector.shape_cast %133 : vector<8xf32> to vector<8x1xf32>
    %cst_119 = arith.constant 2.560000e+02 : f32
    %135 = vector.broadcast %cst_119 : f32 to vector<8x1xf32>
    %136 = arith.divf %134, %135 : vector<8x1xf32>
    %cst_120 = arith.constant 9.99999974E-6 : f32
    %137 = vector.broadcast %cst_120 : f32 to vector<8x1xf32>
    %138 = arith.addf %136, %137 : vector<8x1xf32>
    %139 = math.rsqrt %138 : vector<8x1xf32>
    %140 = vector.broadcast %139 : vector<8x1xf32> to vector<8x256xf32>
    %141 = arith.mulf %131, %140 : vector<8x256xf32>
    %cst_121 = arith.constant 0.000000e+00 : f32
    %142 = vector.broadcast %cst_121 : f32 to vector<8x256xf32>
    %143 = arith.maximumf %141, %142 : vector<8x256xf32>
    %c0_122 = arith.constant 0 : index
    %c128_123 = arith.constant 128 : index
    %144 = vector.load %arg10[%c0_122, %c128_123] : memref<16x512xf32, #tpu.memory_space<vmem>>, vector<8x256xf32>
    tpu.vector_store %arg10[%c0_122, %c128_123], %143 {strides = array<i32>} : memref<16x512xf32, #tpu.memory_space<vmem>>, vector<8x256xf32>,
    %c0_124 = arith.constant 0 : index
    %c0_125 = arith.constant 0 : index
    %c0_126 = arith.constant 0 : index
    %145 = vector.load %arg6[%c0_124, %c0_125, %c0_126] : memref<4x16x256xf32, #tpu.memory_space<vmem>>, vector<1x8x256xf32>
    %146 = vector.shape_cast %145 : vector<1x8x256xf32> to vector<8x256xf32>
    %cst_127 = arith.constant 5.000000e-01 : f32
    %147 = vector.broadcast %cst_127 : f32 to vector<8x256xf32>
    %148 = arith.cmpf ogt, %146, %147 : vector<8x256xf32>
    %c1_128 = arith.constant 1 : index
    %c0_129 = arith.constant 0 : index
    %c0_130 = arith.constant 0 : index
    %149 = vector.load %arg6[%c1_128, %c0_129, %c0_130] : memref<4x16x256xf32, #tpu.memory_space<vmem>>, vector<1x8x256xf32>
    %150 = vector.shape_cast %149 : vector<1x8x256xf32> to vector<8x256xf32>
    %cst_131 = arith.constant 5.000000e-01 : f32
    %151 = vector.broadcast %cst_131 : f32 to vector<8x256xf32>
    %152 = arith.cmpf ogt, %150, %151 : vector<8x256xf32>
    %c2_132 = arith.constant 2 : index
    %c0_133 = arith.constant 0 : index
    %c0_134 = arith.constant 0 : index
    %153 = vector.load %arg6[%c2_132, %c0_133, %c0_134] : memref<4x16x256xf32, #tpu.memory_space<vmem>>, vector<1x8x256xf32>
    %154 = vector.shape_cast %153 : vector<1x8x256xf32> to vector<8x256xf32>
    %cst_135 = arith.constant 5.000000e-01 : f32
    %155 = vector.broadcast %cst_135 : f32 to vector<8x256xf32>
    %156 = arith.cmpf ogt, %154, %155 : vector<8x256xf32>
    %c3_136 = arith.constant 3 : index
    %c0_137 = arith.constant 0 : index
    %c0_138 = arith.constant 0 : index
    %157 = vector.load %arg6[%c3_136, %c0_137, %c0_138] : memref<4x16x256xf32, #tpu.memory_space<vmem>>, vector<1x8x256xf32>
    %158 = vector.shape_cast %157 : vector<1x8x256xf32> to vector<8x256xf32>
    %cst_139 = arith.constant 5.000000e-01 : f32
    %159 = vector.broadcast %cst_139 : f32 to vector<8x256xf32>
    %160 = arith.cmpf ogt, %158, %159 : vector<8x256xf32>
    %cst_140 = arith.constant 0.000000e+00 : f32
    %161 = vector.broadcast %cst_140 : f32 to vector<8x256xf32>
    %c0_141 = arith.constant 0 : index
    %c0_142 = arith.constant 0 : index
    %c0_143 = arith.constant 0 : index
    %162 = vector.load %arg8[%c0_141, %c0_142, %c0_143] : memref<9x8x8xf32, #tpu.memory_space<vmem>>, vector<1x8x8xf32>
    %163 = vector.shape_cast %162 : vector<1x8x8xf32> to vector<8x8xf32>
    %c0_144 = arith.constant 0 : index
    %c111_145 = arith.constant 111 : index
    %164 = vector.load %arg10[%c0_144, %c111_145] : memref<16x512xf32, #tpu.memory_space<vmem>>, vector<8x256xf32>
    %c0_146 = arith.constant 0 : index
    %c113_147 = arith.constant 113 : index
    %165 = vector.load %arg10[%c0_146, %c113_147] : memref<16x512xf32, #tpu.memory_space<vmem>>, vector<8x256xf32>
    %166 = arith.select %148, %165, %164 : vector<8x256xi1>, vector<8x256xf32>
    %c0_148 = arith.constant 0 : index
    %c143_149 = arith.constant 143 : index
    %167 = vector.load %arg10[%c0_148, %c143_149] : memref<16x512xf32, #tpu.memory_space<vmem>>, vector<8x256xf32>
    %c0_150 = arith.constant 0 : index
    %c145_151 = arith.constant 145 : index
    %168 = vector.load %arg10[%c0_150, %c145_151] : memref<16x512xf32, #tpu.memory_space<vmem>>, vector<8x256xf32>
    %169 = arith.select %148, %168, %167 : vector<8x256xi1>, vector<8x256xf32>
    %170 = arith.select %156, %169, %166 : vector<8x256xi1>, vector<8x256xf32>
    %cst_152 = arith.constant dense<0.000000e+00> : vector<8x256xf32>
    %171 = tpu.matmul %163, %170, %cst_152 {dimension_numbers = #tpu.dot_dimension_numbers<[1], [0], [0], [1], [0, 0, 1, 1], [], []>} : vector<8x8xf32>, vector<8x256xf32>, vector<8x256xf32> -> vector<8x256xf32>
    %172 = arith.addf %161, %171 : vector<8x256xf32>
    %c1_153 = arith.constant 1 : index
    %c0_154 = arith.constant 0 : index
    %c0_155 = arith.constant 0 : index
    %173 = vector.load %arg8[%c1_153, %c0_154, %c0_155] : memref<9x8x8xf32, #tpu.memory_space<vmem>>, vector<1x8x8xf32>
    %174 = vector.shape_cast %173 : vector<1x8x8xf32> to vector<8x8xf32>
    %c0_156 = arith.constant 0 : index
    %c112_157 = arith.constant 112 : index
    %175 = vector.load %arg10[%c0_156, %c112_157] : memref<16x512xf32, #tpu.memory_space<vmem>>, vector<8x256xf32>
    %c0_158 = arith.constant 0 : index
    %c144_159 = arith.constant 144 : index
    %176 = vector.load %arg10[%c0_158, %c144_159] : memref<16x512xf32, #tpu.memory_space<vmem>>, vector<8x256xf32>
    %177 = arith.select %156, %176, %175 : vector<8x256xi1>, vector<8x256xf32>
    %cst_160 = arith.constant dense<0.000000e+00> : vector<8x256xf32>
    %178 = tpu.matmul %174, %177, %cst_160 {dimension_numbers = #tpu.dot_dimension_numbers<[1], [0], [0], [1], [0, 0, 1, 1], [], []>} : vector<8x8xf32>, vector<8x256xf32>, vector<8x256xf32> -> vector<8x256xf32>
    %179 = arith.addf %172, %178 : vector<8x256xf32>
    %c2_161 = arith.constant 2 : index
    %c0_162 = arith.constant 0 : index
    %c0_163 = arith.constant 0 : index
    %180 = vector.load %arg8[%c2_161, %c0_162, %c0_163] : memref<9x8x8xf32, #tpu.memory_space<vmem>>, vector<1x8x8xf32>
    %181 = vector.shape_cast %180 : vector<1x8x8xf32> to vector<8x8xf32>
    %c0_164 = arith.constant 0 : index
    %c113_165 = arith.constant 113 : index
    %182 = vector.load %arg10[%c0_164, %c113_165] : memref<16x512xf32, #tpu.memory_space<vmem>>, vector<8x256xf32>
    %c0_166 = arith.constant 0 : index
    %c111_167 = arith.constant 111 : index
    %183 = vector.load %arg10[%c0_166, %c111_167] : memref<16x512xf32, #tpu.memory_space<vmem>>, vector<8x256xf32>
    %184 = arith.select %152, %183, %182 : vector<8x256xi1>, vector<8x256xf32>
    %c0_168 = arith.constant 0 : index
    %c145_169 = arith.constant 145 : index
    %185 = vector.load %arg10[%c0_168, %c145_169] : memref<16x512xf32, #tpu.memory_space<vmem>>, vector<8x256xf32>
    %c0_170 = arith.constant 0 : index
    %c143_171 = arith.constant 143 : index
    %186 = vector.load %arg10[%c0_170, %c143_171] : memref<16x512xf32, #tpu.memory_space<vmem>>, vector<8x256xf32>
    %187 = arith.select %152, %186, %185 : vector<8x256xi1>, vector<8x256xf32>
    %188 = arith.select %156, %187, %184 : vector<8x256xi1>, vector<8x256xf32>
    %cst_172 = arith.constant dense<0.000000e+00> : vector<8x256xf32>
    %189 = tpu.matmul %181, %188, %cst_172 {dimension_numbers = #tpu.dot_dimension_numbers<[1], [0], [0], [1], [0, 0, 1, 1], [], []>} : vector<8x8xf32>, vector<8x256xf32>, vector<8x256xf32> -> vector<8x256xf32>
    %190 = arith.addf %179, %189 : vector<8x256xf32>
    %c3_173 = arith.constant 3 : index
    %c0_174 = arith.constant 0 : index
    %c0_175 = arith.constant 0 : index
    %191 = vector.load %arg8[%c3_173, %c0_174, %c0_175] : memref<9x8x8xf32, #tpu.memory_space<vmem>>, vector<1x8x8xf32>
    %192 = vector.shape_cast %191 : vector<1x8x8xf32> to vector<8x8xf32>
    %c0_176 = arith.constant 0 : index
    %c127_177 = arith.constant 127 : index
    %193 = vector.load %arg10[%c0_176, %c127_177] : memref<16x512xf32, #tpu.memory_space<vmem>>, vector<8x256xf32>
    %c0_178 = arith.constant 0 : index
    %c129_179 = arith.constant 129 : index
    %194 = vector.load %arg10[%c0_178, %c129_179] : memref<16x512xf32, #tpu.memory_space<vmem>>, vector<8x256xf32>
    %195 = arith.select %148, %194, %193 : vector<8x256xi1>, vector<8x256xf32>
    %cst_180 = arith.constant dense<0.000000e+00> : vector<8x256xf32>
    %196 = tpu.matmul %192, %195, %cst_180 {dimension_numbers = #tpu.dot_dimension_numbers<[1], [0], [0], [1], [0, 0, 1, 1], [], []>} : vector<8x8xf32>, vector<8x256xf32>, vector<8x256xf32> -> vector<8x256xf32>
    %197 = arith.addf %190, %196 : vector<8x256xf32>
    %c4_181 = arith.constant 4 : index
    %c0_182 = arith.constant 0 : index
    %c0_183 = arith.constant 0 : index
    %198 = vector.load %arg8[%c4_181, %c0_182, %c0_183] : memref<9x8x8xf32, #tpu.memory_space<vmem>>, vector<1x8x8xf32>
    %199 = vector.shape_cast %198 : vector<1x8x8xf32> to vector<8x8xf32>
    %c0_184 = arith.constant 0 : index
    %c128_185 = arith.constant 128 : index
    %200 = vector.load %arg10[%c0_184, %c128_185] : memref<16x512xf32, #tpu.memory_space<vmem>>, vector<8x256xf32>
    %cst_186 = arith.constant dense<0.000000e+00> : vector<8x256xf32>
    %201 = tpu.matmul %199, %200, %cst_186 {dimension_numbers = #tpu.dot_dimension_numbers<[1], [0], [0], [1], [0, 0, 1, 1], [], []>} : vector<8x8xf32>, vector<8x256xf32>, vector<8x256xf32> -> vector<8x256xf32>
    %202 = arith.addf %197, %201 : vector<8x256xf32>
    %c5_187 = arith.constant 5 : index
    %c0_188 = arith.constant 0 : index
    %c0_189 = arith.constant 0 : index
    %203 = vector.load %arg8[%c5_187, %c0_188, %c0_189] : memref<9x8x8xf32, #tpu.memory_space<vmem>>, vector<1x8x8xf32>
    %204 = vector.shape_cast %203 : vector<1x8x8xf32> to vector<8x8xf32>
    %c0_190 = arith.constant 0 : index
    %c129_191 = arith.constant 129 : index
    %205 = vector.load %arg10[%c0_190, %c129_191] : memref<16x512xf32, #tpu.memory_space<vmem>>, vector<8x256xf32>
    %c0_192 = arith.constant 0 : index
    %c127_193 = arith.constant 127 : index
    %206 = vector.load %arg10[%c0_192, %c127_193] : memref<16x512xf32, #tpu.memory_space<vmem>>, vector<8x256xf32>
    %207 = arith.select %152, %206, %205 : vector<8x256xi1>, vector<8x256xf32>
    %cst_194 = arith.constant dense<0.000000e+00> : vector<8x256xf32>
    %208 = tpu.matmul %204, %207, %cst_194 {dimension_numbers = #tpu.dot_dimension_numbers<[1], [0], [0], [1], [0, 0, 1, 1], [], []>} : vector<8x8xf32>, vector<8x256xf32>, vector<8x256xf32> -> vector<8x256xf32>
    %209 = arith.addf %202, %208 : vector<8x256xf32>
    %c6_195 = arith.constant 6 : index
    %c0_196 = arith.constant 0 : index
    %c0_197 = arith.constant 0 : index
    %210 = vector.load %arg8[%c6_195, %c0_196, %c0_197] : memref<9x8x8xf32, #tpu.memory_space<vmem>>, vector<1x8x8xf32>
    %211 = vector.shape_cast %210 : vector<1x8x8xf32> to vector<8x8xf32>
    %c0_198 = arith.constant 0 : index
    %c143_199 = arith.constant 143 : index
    %212 = vector.load %arg10[%c0_198, %c143_199] : memref<16x512xf32, #tpu.memory_space<vmem>>, vector<8x256xf32>
    %c0_200 = arith.constant 0 : index
    %c145_201 = arith.constant 145 : index
    %213 = vector.load %arg10[%c0_200, %c145_201] : memref<16x512xf32, #tpu.memory_space<vmem>>, vector<8x256xf32>
    %214 = arith.select %148, %213, %212 : vector<8x256xi1>, vector<8x256xf32>
    %c0_202 = arith.constant 0 : index
    %c111_203 = arith.constant 111 : index
    %215 = vector.load %arg10[%c0_202, %c111_203] : memref<16x512xf32, #tpu.memory_space<vmem>>, vector<8x256xf32>
    %c0_204 = arith.constant 0 : index
    %c113_205 = arith.constant 113 : index
    %216 = vector.load %arg10[%c0_204, %c113_205] : memref<16x512xf32, #tpu.memory_space<vmem>>, vector<8x256xf32>
    %217 = arith.select %148, %216, %215 : vector<8x256xi1>, vector<8x256xf32>
    %218 = arith.select %160, %217, %214 : vector<8x256xi1>, vector<8x256xf32>
    %cst_206 = arith.constant dense<0.000000e+00> : vector<8x256xf32>
    %219 = tpu.matmul %211, %218, %cst_206 {dimension_numbers = #tpu.dot_dimension_numbers<[1], [0], [0], [1], [0, 0, 1, 1], [], []>} : vector<8x8xf32>, vector<8x256xf32>, vector<8x256xf32> -> vector<8x256xf32>
    %220 = arith.addf %209, %219 : vector<8x256xf32>
    %c7_207 = arith.constant 7 : index
    %c0_208 = arith.constant 0 : index
    %c0_209 = arith.constant 0 : index
    %221 = vector.load %arg8[%c7_207, %c0_208, %c0_209] : memref<9x8x8xf32, #tpu.memory_space<vmem>>, vector<1x8x8xf32>
    %222 = vector.shape_cast %221 : vector<1x8x8xf32> to vector<8x8xf32>
    %c0_210 = arith.constant 0 : index
    %c144_211 = arith.constant 144 : index
    %223 = vector.load %arg10[%c0_210, %c144_211] : memref<16x512xf32, #tpu.memory_space<vmem>>, vector<8x256xf32>
    %c0_212 = arith.constant 0 : index
    %c112_213 = arith.constant 112 : index
    %224 = vector.load %arg10[%c0_212, %c112_213] : memref<16x512xf32, #tpu.memory_space<vmem>>, vector<8x256xf32>
    %225 = arith.select %160, %224, %223 : vector<8x256xi1>, vector<8x256xf32>
    %cst_214 = arith.constant dense<0.000000e+00> : vector<8x256xf32>
    %226 = tpu.matmul %222, %225, %cst_214 {dimension_numbers = #tpu.dot_dimension_numbers<[1], [0], [0], [1], [0, 0, 1, 1], [], []>} : vector<8x8xf32>, vector<8x256xf32>, vector<8x256xf32> -> vector<8x256xf32>
    %227 = arith.addf %220, %226 : vector<8x256xf32>
    %c8_215 = arith.constant 8 : index
    %c0_216 = arith.constant 0 : index
    %c0_217 = arith.constant 0 : index
    %228 = vector.load %arg8[%c8_215, %c0_216, %c0_217] : memref<9x8x8xf32, #tpu.memory_space<vmem>>, vector<1x8x8xf32>
    %229 = vector.shape_cast %228 : vector<1x8x8xf32> to vector<8x8xf32>
    %c0_218 = arith.constant 0 : index
    %c145_219 = arith.constant 145 : index
    %230 = vector.load %arg10[%c0_218, %c145_219] : memref<16x512xf32, #tpu.memory_space<vmem>>, vector<8x256xf32>
    %c0_220 = arith.constant 0 : index
    %c143_221 = arith.constant 143 : index
    %231 = vector.load %arg10[%c0_220, %c143_221] : memref<16x512xf32, #tpu.memory_space<vmem>>, vector<8x256xf32>
    %232 = arith.select %152, %231, %230 : vector<8x256xi1>, vector<8x256xf32>
    %c0_222 = arith.constant 0 : index
    %c113_223 = arith.constant 113 : index
    %233 = vector.load %arg10[%c0_222, %c113_223] : memref<16x512xf32, #tpu.memory_space<vmem>>, vector<8x256xf32>
    %c0_224 = arith.constant 0 : index
    %c111_225 = arith.constant 111 : index
    %234 = vector.load %arg10[%c0_224, %c111_225] : memref<16x512xf32, #tpu.memory_space<vmem>>, vector<8x256xf32>
    %235 = arith.select %152, %234, %233 : vector<8x256xi1>, vector<8x256xf32>
    %236 = arith.select %160, %235, %232 : vector<8x256xi1>, vector<8x256xf32>
    %cst_226 = arith.constant dense<0.000000e+00> : vector<8x256xf32>
    %237 = tpu.matmul %229, %236, %cst_226 {dimension_numbers = #tpu.dot_dimension_numbers<[1], [0], [0], [1], [0, 0, 1, 1], [], []>} : vector<8x8xf32>, vector<8x256xf32>, vector<8x256xf32> -> vector<8x256xf32>
    %238 = arith.addf %227, %237 : vector<8x256xf32>
    %cst_227 = arith.constant dense<0.000000e+00> : vector<8xf32>
    %239 = vector.multi_reduction <add>, %238, %cst_227 [1] : vector<8x256xf32> to vector<8xf32>
    %240 = vector.shape_cast %239 : vector<8xf32> to vector<8x1xf32>
    %cst_228 = arith.constant 2.560000e+02 : f32
    %241 = vector.broadcast %cst_228 : f32 to vector<8x1xf32>
    %242 = arith.divf %240, %241 : vector<8x1xf32>
    %243 = vector.broadcast %242 : vector<8x1xf32> to vector<8x256xf32>
    %244 = arith.subf %238, %243 : vector<8x256xf32>
    %245 = arith.mulf %244, %244 : vector<8x256xf32>
    %cst_229 = arith.constant dense<0.000000e+00> : vector<8xf32>
    %246 = vector.multi_reduction <add>, %245, %cst_229 [1] : vector<8x256xf32> to vector<8xf32>
    %247 = vector.shape_cast %246 : vector<8xf32> to vector<8x1xf32>
    %cst_230 = arith.constant 2.560000e+02 : f32
    %248 = vector.broadcast %cst_230 : f32 to vector<8x1xf32>
    %249 = arith.divf %247, %248 : vector<8x1xf32>
    %cst_231 = arith.constant 9.99999974E-6 : f32
    %250 = vector.broadcast %cst_231 : f32 to vector<8x1xf32>
    %251 = arith.addf %249, %250 : vector<8x1xf32>
    %252 = math.rsqrt %251 : vector<8x1xf32>
    %253 = vector.broadcast %252 : vector<8x1xf32> to vector<8x256xf32>
    %254 = arith.mulf %244, %253 : vector<8x256xf32>
    %cst_232 = arith.constant 0.000000e+00 : f32
    %255 = vector.broadcast %cst_232 : f32 to vector<8x256xf32>
    %256 = arith.maximumf %254, %255 : vector<8x256xf32>
    %c0_233 = arith.constant 0 : index
    %c0_234 = arith.constant 0 : index
    %c0_235 = arith.constant 0 : index
    %257 = vector.load %arg9[%c0_233, %c0_234, %c0_235] : memref<1x8x256xf32, #tpu.memory_space<vmem>>, vector<1x8x256xf32>
    %258 = vector.shape_cast %257 : vector<1x8x256xf32> to vector<8x256xf32>
    %259 = vector.shape_cast %256 : vector<8x256xf32> to vector<1x8x256xf32>
    tpu.vector_store %arg9[%c0_233, %c0_234, %c0_235], %259 {strides = array<i32>} : memref<1x8x256xf32, #tpu.memory_space<vmem>>, vector<1x8x256xf32>,
    return
  }
  func.func @transform_0(%arg0: i32) -> (i32, i32, i32) {
    %c0_i32 = arith.constant 0 : i32
    %c0_i32_0 = arith.constant 0 : i32
    %c0_i32_1 = arith.constant 0 : i32
    return %arg0, %c0_i32, %c0_i32_0 : i32, i32, i32
  }
  func.func @transform_1(%arg0: i32) -> (i32, i32, i32) {
    %c0_i32 = arith.constant 0 : i32
    %c0_i32_0 = arith.constant 0 : i32
    %c0_i32_1 = arith.constant 0 : i32
    return %arg0, %c0_i32, %c0_i32_0 : i32, i32, i32
  }
  func.func @transform_2(%arg0: i32) -> (i32, i32) {
    %c0_i32 = arith.constant 0 : i32
    %c0_i32_0 = arith.constant 0 : i32
    %c0_i32_1 = arith.constant 0 : i32
    return %c0_i32, %c0_i32_0 : i32, i32
  }
  func.func @transform_3(%arg0: i32) -> (i32, i32) {
    %c0_i32 = arith.constant 0 : i32
    %c0_i32_0 = arith.constant 0 : i32
    %c0_i32_1 = arith.constant 0 : i32
    return %c0_i32, %c0_i32_0 : i32, i32
  }
  func.func @transform_4(%arg0: i32) -> (i32, i32, i32) {
    %c0_i32 = arith.constant 0 : i32
    %c0_i32_0 = arith.constant 0 : i32
    %c0_i32_1 = arith.constant 0 : i32
    %c0_i32_2 = arith.constant 0 : i32
    return %c0_i32, %c0_i32_0, %c0_i32_1 : i32, i32, i32
  }
  func.func @transform_5(%arg0: i32) -> (i32, i32, i32) {
    %c0_i32 = arith.constant 0 : i32
    %c0_i32_0 = arith.constant 0 : i32
    %c0_i32_1 = arith.constant 0 : i32
    %c0_i32_2 = arith.constant 0 : i32
    return %c0_i32, %c0_i32_0, %c0_i32_1 : i32, i32, i32
  }
  func.func @transform_6(%arg0: i32) -> (i32, i32, i32) {
    %c0_i32 = arith.constant 0 : i32
    %c0_i32_0 = arith.constant 0 : i32
    %c0_i32_1 = arith.constant 0 : i32
    %c0_i32_2 = arith.constant 0 : i32
    return %c0_i32, %c0_i32_0, %c0_i32_1 : i32, i32, i32
  }
  func.func @transform_7(%arg0: i32) -> (i32, i32, i32) {
    %c0_i32 = arith.constant 0 : i32
    %c0_i32_0 = arith.constant 0 : i32
    %c0_i32_1 = arith.constant 0 : i32
    %c0_i32_2 = arith.constant 0 : i32
    return %c0_i32, %c0_i32_0, %c0_i32_1 : i32, i32, i32
  }
  func.func @transform_8(%arg0: i32) -> (i32, i32, i32) {
    %c0_i32 = arith.constant 0 : i32
    %c0_i32_0 = arith.constant 0 : i32
    %c0_i32_1 = arith.constant 0 : i32
    return %arg0, %c0_i32, %c0_i32_0 : i32, i32, i32
  }
}

</mosaic_0001>

<llo_original>
// kernel: tile.8
$region0: #{tile.8}
  #allocation2 [shape = 's32[1]{0}', space=sflag, size = 0x4, scoped, tag = 'scoped memory for tile.8']
  %s0 = inlined_call_operand.hbm [shape: f32[8], index: 0, kind: input, shape index: {}]
  %s1 = inlined_call_operand.vmem [shape: f32[4,8], index: 1, kind: output, shape index: {}]
  $region1: #{tile.8} parent=0
    #allocation0 [shape = 'u8[512]{0}', space=vmem, size = 0x400, scoped, tag = 'operand span for operand 0']
    #allocation1 [shape = 's32[1]{0}', space=sflag, size = 0x4, scoped, tag = 'scoped memory for tile.8']
    %2 = vsyncpa [#allocation1], 0
    // Predicated region
    $region2: #{tile.8} parent=1 // pred_check
      _
    $region3: #{tile.8} parent=1 // pred_check_branch
      %4 = sbr.rel (0) target = $region5
    $region4: #{tile.8} parent=1 // pred_region
      %s6 = ssub.s32 16, 16
      %7 = vsyncadd [#allocation1], %s6
      %s9 = sshll.u32 [#allocation0], 4
      %s10 = int_to_ptr.vmem [resolvable:$true] %s9
      %12 = dma.hbm_to_vmem [thread:$0]  %s0, 16, %s10, [#allocation1]
    $region5: #{tile.8} parent=1 // pred_fallthru
      _
    // Predicated region
    $region6: #{tile.8} parent=1 // pred_check
      _
    $region7: #{tile.8} parent=1 // pred_check_branch
      %14 = sbr.rel (0) target = $region9
    $region8: #{tile.8} parent=1 // pred_region
      %15 = dma.done [#allocation1], 16
    $region9: #{tile.8} parent=1 // pred_fallthru
      _
    %v16 = vld [vmem:[#allocation0] ss:$0 sm:$0xff]
    %17 = vst [vmem:[%s1] sm:$0xf] %v16
    %18 = vsyncpa [#allocation1], 1

// kernel: tile.0
$region0: #{tile.0}
  %s0 = inlined_call_operand.vmem [shape: f32[4,8], index: 0, kind: input, shape index: {}]
  %s1 = inlined_call_operand.vmem [shape: f32[32,1], index: 1, kind: output, shape index: {}]
  $region1: #{tile.0} parent=0
    #allocation0 [shape = 'u8[4096]{0}', space=vmem, size = 0x1000, scoped, tag = 'scoped mem for input reshape']
    %s3 = sshllo.u32 0, 4
    %v4 = vld [vmem:[%s0] sm:%s3]
    %5 = vst [vmem:[#allocation0] sm:%s3] %v4
    %v6 = vld [vmem:[#allocation0] sm:$0xf]
    %vm7 = vcmask 7168
    %8 = vst.msk [vmem:[%s1] ss:$8 sm:$0xf] %vm7, %v6
    %v9 = vld [vmem:[#allocation0] sm:$0xf]
    %10 = vrot.lane.b32.xlu0 %v9, 127
    %v11 = vpop.permute.xlu0 %10
    %vm12 = vcmask 7168
    %s13 = scalar_lea.vmem %s1, 1
    %14 = vst.msk [vmem:[%s13] ss:$8 sm:$0xf] %vm12, %v11
    %v15 = vld [vmem:[#allocation0] sm:$0xf]
    %16 = vrot.lane.b32.xlu0 %v15, 126
    %v17 = vpop.permute.xlu0 %16
    %vm18 = vcmask 7168
    %s19 = scalar_lea.vmem %s1, 2
    %20 = vst.msk [vmem:[%s19] ss:$8 sm:$0xf] %vm18, %v17
    %v21 = vld [vmem:[#allocation0] sm:$0xf]
    %22 = vrot.lane.b32.xlu0 %v21, 125
    %v23 = vpop.permute.xlu0 %22
    %vm24 = vcmask 7168
    %s25 = scalar_lea.vmem %s1, 3
    %26 = vst.msk [vmem:[%s25] ss:$8 sm:$0xf] %vm24, %v23
    %v27 = vld [vmem:[#allocation0] sm:$0xf]
    %28 = vrot.lane.b32.xlu0 %v27, 124
    %v29 = vpop.permute.xlu0 %28
    %vm30 = vcmask 7168
    %s31 = scalar_lea.vmem %s1, 4
    %32 = vst.msk [vmem:[%s31] ss:$8 sm:$0xf] %vm30, %v29
    %v33 = vld [vmem:[#allocation0] sm:$0xf]
    %34 = vrot.lane.b32.xlu0 %v33, 123
    %v35 = vpop.permute.xlu0 %34
    %vm36 = vcmask 7168
    %s37 = scalar_lea.vmem %s1, 5
    %38 = vst.msk [vmem:[%s37] ss:$8 sm:$0xf] %vm36, %v35
    %v39 = vld [vmem:[#allocation0] sm:$0xf]
    %40 = vrot.lane.b32.xlu0 %v39, 122
    %v41 = vpop.permute.xlu0 %40
    %vm42 = vcmask 7168
    %s43 = scalar_lea.vmem %s1, 6
    %44 = vst.msk [vmem:[%s43] ss:$8 sm:$0xf] %vm42, %v41
    %v45 = vld [vmem:[#allocation0] sm:$0xf]
    %46 = vrot.lane.b32.xlu0 %v45, 121
    %v47 = vpop.permute.xlu0 %46
    %vm48 = vcmask 7168
    %s49 = scalar_lea.vmem %s1, 7
    %50 = vst.msk [vmem:[%s49] ss:$8 sm:$0xf] %vm48, %v47

// kernel: up_conv_pallas.1
$region0: #{up_conv_pallas.1}
  #allocation0 [shape = 'u32[]', space=smem, size = 0x4, offset = 0x4, fixed_abs, tag = 'smem constant byte address 0x4 - core index']
  #allocation1 [shape = 'u32[144,128]{1,0:T(1,128)}', space=vmem, size = 0x12000, scoped, tag = 'internal scratch']
  #allocation2 [shape = 'f32[16,512]{1,0:T(8,128)}', space=vmem, size = 0x8000, scoped, tag = 'scratch operand']
  %s0 = inlined_call_operand.vmem [shape: f32[2,8,64], index: 0, kind: input, shape index: {}]
  %s1 = inlined_call_operand.vmem [shape: f32[2,8,256], index: 1, kind: input, shape index: {}]
  %s2 = inlined_call_operand.vmem [shape: f32[32,8], index: 2, kind: input, shape index: {}]
  %s3 = inlined_call_operand.vmem [shape: f32[32,1], index: 3, kind: input, shape index: {}]
  %s4 = inlined_call_operand.vmem [shape: f32[4,64,256], index: 4, kind: input, shape index: {}]
  %s5 = inlined_call_operand.hbm [shape: f32[4,16,256], index: 5, kind: input, shape index: {}]
  %s6 = inlined_call_operand.hbm [shape: f32[9,8,16], index: 6, kind: input, shape index: {}]
  %s7 = inlined_call_operand.hbm [shape: f32[9,8,8], index: 7, kind: input, shape index: {}]
  %s8 = inlined_call_operand.vmem [shape: f32[2,8,256], index: 8, kind: output, shape index: {}]
  %s9 = sld [smem:[#allocation0]]
  $region77: #{up_conv_pallas.1} parent=0
    _
  %s11 = ssub.s32 1, %s9
  %s12 = scalar_select 0, %s11, %s9
  $region1: #{up_conv_pallas.1} parent=0
    #allocation3 [shape = 'u8[65536]{0}', space=vmem, size = 0x10000, scoped, tag = 'input window, operand 5, single buffered']
    #allocation4 [shape = 's32[2]{0}', space=sflag, size = 0x8, scoped, tag = 'scoped memory for up_conv_pallas.1']
    #allocation5 [shape = 'u8[36864]{0}', space=vmem, size = 0x9000, scoped, tag = 'input window, operand 6, single buffered']
    #allocation6 [shape = 's32[1]{0}', space=sflag, size = 0x4, scoped, tag = 'scoped memory for up_conv_pallas.1']
    #allocation7 [shape = 'u8[36864]{0}', space=vmem, size = 0x9000, scoped, tag = 'input window, operand 7, single buffered']
    %13 = vsyncpa [#allocation4], 0
    %14 = vsyncpa [#allocation6], 0
    loop: start=0, step=1, limit=4
    $region2: #{up_conv_pallas.1} parent=1 // loop_pre_header
      _
    $region3: #{up_conv_pallas.1} parent=1 // loop_header
      %s16 = sphi 0, %s20
      %p17 = scmp.ge.s32.totalorder %s16, 4
      %s26 = sphi 0, %s28
      %s29 = sphi 0, %s26
      %s30 = sphi 0, %s29
      %s46 = sphi 0, %s30
      %s52 = sphi 0, %s54
      %s55 = sphi 0, %s52
      %s56 = sphi 0, %s55
      %s72 = sphi 0, %s56
      %s76 = sphi 0, %s76
      %s78 = sphi 0, %s76
      %s79 = sphi 0, %s78
      %s93 = sphi 0, %s79
      %s97 = sphi 0, %s97
      %s99 = sphi 0, %s97
      %s100 = sphi 0, %s99
      %s114 = sphi 0, %s100
      %s118 = sphi 0, %s118
      %s120 = sphi 0, %s118
      %s121 = sphi 0, %s120
      %s135 = sphi 0, %s121
      %s139 = sphi 0, %s139
      %s141 = sphi 0, %s139
      %s142 = sphi 0, %s141
      %s156 = sphi 0, %s142
      %s160 = sphi 0, %s160
      %s162 = sphi 0, %s160
      %s163 = sphi 0, %s162
      %s177 = sphi 0, %s163
      %s181 = sphi 0, %s181
      %s183 = sphi 0, %s181
      %s184 = sphi 0, %s183
      %s198 = sphi 0, %s184
      %s204 = sphi 0, %s206
      %s207 = sphi 0, %s204
      %s208 = sphi 0, %s207
      %s224 = sphi 0, %s208
    $region4: #{up_conv_pallas.1} parent=1 // loop_header_branch
      %19 = sbr.rel (%p17) target = $region8
    $region5: #{up_conv_pallas.1} parent=1 // loop_body
      %s21 = ssub.s32 %s16, 1
      %s22 = ssub.s32 %s16, 2
      %s23 = sadd.s32 %s16, 1
      %s24 = ssub.s32 %s16, %s23
      %p25 = scmp.eq.s32.totalorder %s24, 0
      %s27 = sadd.s32 %s26, 1
      %s28 = scalar_select %p25, %s26, %s27
      %p31 = pneg %p25
      %p32 = scmp.eq.s32.totalorder %s16, 1
      %p33 = por %p31, %p32
      %p34 = scmp.ne.s32.totalorder %s26, %s29
      %p35 = scmp.eq.s32.totalorder %s16, 0
      %p36 = por %p34, %p35
      %p37 = scmp.ne.s32.totalorder %s26, %s29
      %p38 = scmp.eq.s32.totalorder %s21, 1
      %p39 = por %p37, %p38
      %p40 = scmp.ne.s32.totalorder %s29, %s30
      %p41 = scmp.eq.s32.totalorder %s21, 0
      %p42 = por %p40, %p41
      %p43 = scmp.ne.s32.totalorder %s29, %s30
      %p44 = scmp.eq.s32.totalorder %s22, 1
      %p45 = por %p43, %p44
      %p47 = scmp.ne.s32.totalorder %s30, %s46
      %p48 = scmp.eq.s32.totalorder %s22, 0
      %p49 = por %p47, %p48
      %s50 = ssub.s32 %s16, %s23
      %p51 = scmp.eq.s32.totalorder %s50, 0
      %s53 = sadd.s32 %s52, 1
      %s54 = scalar_select %p51, %s52, %s53
      %p57 = pneg %p51
      %p58 = scmp.eq.s32.totalorder %s16, 1
      %p59 = por %p57, %p58
      %p60 = scmp.ne.s32.totalorder %s52, %s55
      %p61 = scmp.eq.s32.totalorder %s16, 0
      %p62 = por %p60, %p61
      %p63 = scmp.ne.s32.totalorder %s52, %s55
      %p64 = scmp.eq.s32.totalorder %s21, 1
      %p65 = por %p63, %p64
      %p66 = scmp.ne.s32.totalorder %s55, %s56
      %p67 = scmp.eq.s32.totalorder %s21, 0
      %p68 = por %p66, %p67
      %p69 = scmp.ne.s32.totalorder %s55, %s56
      %p70 = scmp.eq.s32.totalorder %s22, 1
      %p71 = por %p69, %p70
      %p73 = scmp.ne.s32.totalorder %s56, %s72
      %p74 = scmp.eq.s32.totalorder %s22, 0
      %p75 = por %p73, %p74
      %s77 = sadd.s32 %s76, 1
      %p80 = scmp.eq.s32.totalorder %s16, 1
      %p81 = scmp.ne.s32.totalorder %s76, %s78
      %p82 = scmp.eq.s32.totalorder %s16, 0
      %p83 = por %p81, %p82
      %p84 = scmp.ne.s32.totalorder %s76, %s78
      %p85 = scmp.eq.s32.totalorder %s21, 1
      %p86 = por %p84, %p85
      %p87 = scmp.ne.s32.totalorder %s78, %s79
      %p88 = scmp.eq.s32.totalorder %s21, 0
      %p89 = por %p87, %p88
      %p90 = scmp.ne.s32.totalorder %s78, %s79
      %p91 = scmp.eq.s32.totalorder %s22, 1
      %p92 = por %p90, %p91
      %p94 = scmp.ne.s32.totalorder %s79, %s93
      %p95 = scmp.eq.s32.totalorder %s22, 0
      %p96 = por %p94, %p95
      %s98 = sadd.s32 %s97, 1
      %p101 = scmp.eq.s32.totalorder %s16, 1
      %p102 = scmp.ne.s32.totalorder %s97, %s99
      %p103 = scmp.eq.s32.totalorder %s16, 0
      %p104 = por %p102, %p103
      %p105 = scmp.ne.s32.totalorder %s97, %s99
      %p106 = scmp.eq.s32.totalorder %s21, 1
      %p107 = por %p105, %p106
      %p108 = scmp.ne.s32.totalorder %s99, %s100
      %p109 = scmp.eq.s32.totalorder %s21, 0
      %p110 = por %p108, %p109
      %p111 = scmp.ne.s32.totalorder %s99, %s100
      %p112 = scmp.eq.s32.totalorder %s22, 1
      %p113 = por %p111, %p112
      %p115 = scmp.ne.s32.totalorder %s100, %s114
      %p116 = scmp.eq.s32.totalorder %s22, 0
      %p117 = por %p115, %p116
      %s119 = sadd.s32 %s118, 1
      %p122 = scmp.eq.s32.totalorder %s16, 1
      %p123 = scmp.ne.s32.totalorder %s118, %s120
      %p124 = scmp.eq.s32.totalorder %s16, 0
      %p125 = por %p123, %p124
      %p126 = scmp.ne.s32.totalorder %s118, %s120
      %p127 = scmp.eq.s32.totalorder %s21, 1
      %p128 = por %p126, %p127
      %p129 = scmp.ne.s32.totalorder %s120, %s121
      %p130 = scmp.eq.s32.totalorder %s21, 0
      %p131 = por %p129, %p130
      %p132 = scmp.ne.s32.totalorder %s120, %s121
      %p133 = scmp.eq.s32.totalorder %s22, 1
      %p134 = por %p132, %p133
      %p136 = scmp.ne.s32.totalorder %s121, %s135
      %p137 = scmp.eq.s32.totalorder %s22, 0
      %p138 = por %p136, %p137
      %s140 = sadd.s32 %s139, 1
      %p143 = scmp.eq.s32.totalorder %s16, 1
      %p144 = scmp.ne.s32.totalorder %s139, %s141
      %p145 = scmp.eq.s32.totalorder %s16, 0
      %p146 = por %p144, %p145
      %p147 = scmp.ne.s32.totalorder %s139, %s141
      %p148 = scmp.eq.s32.totalorder %s21, 1
      %p149 = por %p147, %p148
      %p150 = scmp.ne.s32.totalorder %s141, %s142
      %p151 = scmp.eq.s32.totalorder %s21, 0
      %p152 = por %p150, %p151
      %p153 = scmp.ne.s32.totalorder %s141, %s142
      %p154 = scmp.eq.s32.totalorder %s22, 1
      %p155 = por %p153, %p154
      %p157 = scmp.ne.s32.totalorder %s142, %s156
      %p158 = scmp.eq.s32.totalorder %s22, 0
      %p159 = por %p157, %p158
      %s161 = sadd.s32 %s160, 1
      %p164 = scmp.eq.s32.totalorder %s16, 1
      %p165 = scmp.ne.s32.totalorder %s160, %s162
      %p166 = scmp.eq.s32.totalorder %s16, 0
      %p167 = por %p165, %p166
      %p168 = scmp.ne.s32.totalorder %s160, %s162
      %p169 = scmp.eq.s32.totalorder %s21, 1
      %p170 = por %p168, %p169
      %p171 = scmp.ne.s32.totalorder %s162, %s163
      %p172 = scmp.eq.s32.totalorder %s21, 0
      %p173 = por %p171, %p172
      %p174 = scmp.ne.s32.totalorder %s162, %s163
      %p175 = scmp.eq.s32.totalorder %s22, 1
      %p176 = por %p174, %p175
      %p178 = scmp.ne.s32.totalorder %s163, %s177
      %p179 = scmp.eq.s32.totalorder %s22, 0
      %p180 = por %p178, %p179
      %s182 = sadd.s32 %s181, 1
      %p185 = scmp.eq.s32.totalorder %s16, 1
      %p186 = scmp.ne.s32.totalorder %s181, %s183
      %p187 = scmp.eq.s32.totalorder %s16, 0
      %p188 = por %p186, %p187
      %p189 = scmp.ne.s32.totalorder %s181, %s183
      %p190 = scmp.eq.s32.totalorder %s21, 1
      %p191 = por %p189, %p190
      %p192 = scmp.ne.s32.totalorder %s183, %s184
      %p193 = scmp.eq.s32.totalorder %s21, 0
      %p194 = por %p192, %p193
      %p195 = scmp.ne.s32.totalorder %s183, %s184
      %p196 = scmp.eq.s32.totalorder %s22, 1
      %p197 = por %p195, %p196
      %p199 = scmp.ne.s32.totalorder %s184, %s198
      %p200 = scmp.eq.s32.totalorder %s22, 0
      %p201 = por %p199, %p200
      %s202 = ssub.s32 %s16, %s23
      %p203 = scmp.eq.s32.totalorder %s202, 0
      %s205 = sadd.s32 %s204, 1
      %s206 = scalar_select %p203, %s204, %s205
      %p209 = pneg %p203
      %p210 = scmp.eq.s32.totalorder %s16, 1
      %p211 = por %p209, %p210
      %p212 = scmp.ne.s32.totalorder %s204, %s207
      %p213 = scmp.eq.s32.totalorder %s16, 0
      %p214 = por %p212, %p213
      %p215 = scmp.ne.s32.totalorder %s204, %s207
      %p216 = scmp.eq.s32.totalorder %s21, 1
      %p217 = por %p215, %p216
      %p218 = scmp.ne.s32.totalorder %s207, %s208
      %p219 = scmp.eq.s32.totalorder %s21, 0
      %p220 = por %p218, %p219
      %p221 = scmp.ne.s32.totalorder %s207, %s208
      %p222 = scmp.eq.s32.totalorder %s22, 1
      %p223 = por %p221, %p222
      %p225 = scmp.ne.s32.totalorder %s208, %s224
      %p226 = scmp.eq.s32.totalorder %s22, 0
      %p227 = por %p225, %p226
      %p228 = scmp.le.s32.totalorder 1, %s16
      %p229 = scmp.lt.s32.totalorder %s16, 3
      %p230 = pnand %p228, %p229
      %p231 = pneg %p230
      // Predicated region
      $region9: #{up_conv_pallas.1} parent=5 // pred_check
        _
      $region10: #{up_conv_pallas.1} parent=5 // pred_check_branch
        %233 = sbr.rel (%p230) target = $region12
      $region11: #{up_conv_pallas.1} parent=5 // pred_region
        %s234 = ssub.s32 %s16, 1
        // Predicated region
        $region13: #{up_conv_pallas.1} parent=11 // pred_check
          %p235 = pneg %p89
        $region14: #{up_conv_pallas.1} parent=11 // pred_check_branch
          %237 = sbr.rel (%p235) target = $region16
        $region15: #{up_conv_pallas.1} parent=11 // pred_region
          _
        $region16: #{up_conv_pallas.1} parent=11 // pred_fallthru
          _
        // Predicated region
        $region17: #{up_conv_pallas.1} parent=11 // pred_check
          %p238 = pneg %p110
        $region18: #{up_conv_pallas.1} parent=11 // pred_check_branch
          %240 = sbr.rel (%p238) target = $region20
        $region19: #{up_conv_pallas.1} parent=11 // pred_region
          _
        $region20: #{up_conv_pallas.1} parent=11 // pred_fallthru
          _
        // Predicated region
        $region21: #{up_conv_pallas.1} parent=11 // pred_check
          %p241 = pneg %p131
        $region22: #{up_conv_pallas.1} parent=11 // pred_check_branch
          %243 = sbr.rel (%p241) target = $region24
        $region23: #{up_conv_pallas.1} parent=11 // pred_region
          _
        $region24: #{up_conv_pallas.1} parent=11 // pred_fallthru
          _
        // Predicated region
        $region25: #{up_conv_pallas.1} parent=11 // pred_check
          %p244 = pneg %p152
        $region26: #{up_conv_pallas.1} parent=11 // pred_check_branch
          %246 = sbr.rel (%p244) target = $region28
        $region27: #{up_conv_pallas.1} parent=11 // pred_region
          %s248 = ssub.s32 2048, 2048
          %249 = vsyncadd [#allocation4], %s248
          %s250 = sshll.u32 [#allocation3], 4
          %s251 = int_to_ptr.vmem [resolvable:$true] %s250
          %256 = dma.hbm_to_vmem [thread:$0]  %s5, 2048, %s251, [#allocation4], 256, 256, 16
        $region28: #{up_conv_pallas.1} parent=11 // pred_fallthru
          _
        // Predicated region
        $region29: #{up_conv_pallas.1} parent=11 // pred_check
          %p257 = pneg %p173
        $region30: #{up_conv_pallas.1} parent=11 // pred_check_branch
          %259 = sbr.rel (%p257) target = $region32
        $region31: #{up_conv_pallas.1} parent=11 // pred_region
          %s261 = ssub.s32 1152, 1152
          %262 = vsyncadd [#allocation6], %s261
          %s263 = sshll.u32 [#allocation5], 4
          %s264 = int_to_ptr.vmem [resolvable:$true] %s263
          %269 = dma.hbm_to_vmem [thread:$0]  %s6, 1152, %s264, [#allocation6], 128, 128, 8
        $region32: #{up_conv_pallas.1} parent=11 // pred_fallthru
          _
        // Predicated region
        $region33: #{up_conv_pallas.1} parent=11 // pred_check
          %p270 = pneg %p194
        $region34: #{up_conv_pallas.1} parent=11 // pred_check_branch
          %272 = sbr.rel (%p270) target = $region36
        $region35: #{up_conv_pallas.1} parent=11 // pred_region
          %s274 = ssub.s32 1152, 1152
          %275 = vsyncadd [#allocation6], %s274
          %s276 = sshll.u32 [#allocation7], 4
          %s277 = int_to_ptr.vmem [resolvable:$true] %s276
          %282 = dma.hbm_to_vmem [thread:$0]  %s7, 1152, %s277, [#allocation6], 128, 128, 8
        $region36: #{up_conv_pallas.1} parent=11 // pred_fallthru
          _
      $region12: #{up_conv_pallas.1} parent=5 // pred_fallthru
        _
      %p283 = scmp.lt.s32.totalorder %s16, 2
      // Predicated region
      $region37: #{up_conv_pallas.1} parent=5 // pred_check
        %p284 = pneg %p283
      $region38: #{up_conv_pallas.1} parent=5 // pred_check_branch
        %286 = sbr.rel (%p284) target = $region40
      $region39: #{up_conv_pallas.1} parent=5 // pred_region
        // Predicated region
        $region41: #{up_conv_pallas.1} parent=39 // pred_check
          %p287 = pneg %p36
        $region42: #{up_conv_pallas.1} parent=39 // pred_check_branch
          %289 = sbr.rel (%p287) target = $region44
        $region43: #{up_conv_pallas.1} parent=39 // pred_region
          %p290 = scmp.lt.s32.totalorder %s16, 1
          %s291 = scalar_select %p290, %s16, 1
          %s292 = smul.addr %s291, 8
          %s293 = scalar_lea.vmem %s0, %s292
        $region44: #{up_conv_pallas.1} parent=39 // pred_fallthru
          _
        // Predicated region
        $region45: #{up_conv_pallas.1} parent=39 // pred_check
          %p294 = pneg %p62
        $region46: #{up_conv_pallas.1} parent=39 // pred_check_branch
          %296 = sbr.rel (%p294) target = $region48
        $region47: #{up_conv_pallas.1} parent=39 // pred_region
          %p297 = scmp.lt.s32.totalorder %s16, 1
          %s298 = scalar_select %p297, %s16, 1
          %s299 = smul.addr %s298, 2
          %s300 = smul.addr %s299, 8
          %s301 = scalar_lea.vmem %s1, %s300
        $region48: #{up_conv_pallas.1} parent=39 // pred_fallthru
          _
      $region40: #{up_conv_pallas.1} parent=5 // pred_fallthru
        _
      %p302 = scmp.le.s32.totalorder 1, %s16
      %p303 = scmp.lt.s32.totalorder %s16, 3
      %p304 = pnand %p302, %p303
      %p305 = pneg %p304
      // Predicated region
      $region49: #{up_conv_pallas.1} parent=5 // pred_check
        _
      $region50: #{up_conv_pallas.1} parent=5 // pred_check_branch
        %307 = sbr.rel (%p304) target = $region52
      $region51: #{up_conv_pallas.1} parent=5 // pred_region
        %s308 = ssub.s32 %s16, 1
        // Predicated region
        $region53: #{up_conv_pallas.1} parent=51 // pred_check
          %p309 = pneg %p152
        $region54: #{up_conv_pallas.1} parent=51 // pred_check_branch
          %311 = sbr.rel (%p309) target = $region56
        $region55: #{up_conv_pallas.1} parent=51 // pred_region
          %312 = dma.done [#allocation4], 2048
        $region56: #{up_conv_pallas.1} parent=51 // pred_fallthru
          _
        // Predicated region
        $region57: #{up_conv_pallas.1} parent=51 // pred_check
          %p313 = pneg %p173
        $region58: #{up_conv_pallas.1} parent=51 // pred_check_branch
          %315 = sbr.rel (%p313) target = $region60
        $region59: #{up_conv_pallas.1} parent=51 // pred_region
          %316 = dma.done [#allocation6], 1152
        $region60: #{up_conv_pallas.1} parent=51 // pred_fallthru
          _
        // Predicated region
        $region61: #{up_conv_pallas.1} parent=51 // pred_check
          %p317 = pneg %p194
        $region62: #{up_conv_pallas.1} parent=51 // pred_check_branch
          %319 = sbr.rel (%p317) target = $region64
        $region63: #{up_conv_pallas.1} parent=51 // pred_region
          %320 = dma.done [#allocation6], 1152
        $region64: #{up_conv_pallas.1} parent=51 // pred_fallthru
          _
        %p321 = scmp.lt.s32.totalorder %s21, 1
        %s322 = scalar_select %p321, %s21, 1
        %s323 = smul.addr %s322, 8
        %s324 = scalar_lea.vmem %s0, %s323
        %p325 = pneg %p42
        %p326 = pneg %p39
        %p327 = scmp.lt.s32.totalorder %s21, 1
        %s328 = scalar_select %p327, %s21, 1
        %s329 = smul.addr %s328, 2
        %s330 = smul.addr %s329, 8
        %s331 = scalar_lea.vmem %s1, %s330
        %p332 = pneg %p68
        %p333 = pneg %p65
        %p334 = pneg %p89
        %p335 = pneg %p86
        %p336 = pneg %p110
        %p337 = pneg %p107
        %p338 = pneg %p131
        %p339 = pneg %p128
        %p340 = pneg %p152
        %p341 = pneg %p149
        %p342 = pneg %p173
        %p343 = pneg %p170
        %p344 = pneg %p194
        %p345 = pneg %p191
        %p346 = pneg %p220
        %p347 = pneg %p217
        %p348 = scmp.lt.s32.totalorder %s21, 1
        %s349 = scalar_select %p348, %s21, 1
        %s350 = smul.addr %s349, 2
        %s351 = smul.addr %s350, 8
        %s352 = scalar_lea.vmem %s8, %s351
        %p353 = scmp.lt.s32.totalorder %s21, 1
        %s354 = scalar_select %p353, %s21, 1
        %s355 = smul.addr %s354, 8
        %s356 = scalar_lea.vmem %s0, %s355
        %p357 = scmp.lt.s32.totalorder %s21, 1
        %s358 = scalar_select %p357, %s21, 1
        %s359 = smul.addr %s358, 2
        %s360 = smul.addr %s359, 8
        %s361 = scalar_lea.vmem %s1, %s360
        %p362 = scmp.lt.s32.totalorder %s21, 1
        %s363 = scalar_select %p362, %s21, 1
        %s364 = smul.addr %s363, 2
        %s365 = smul.addr %s364, 8
        %s366 = scalar_lea.vmem %s8, %s365
        %v367 = vld [vmem:[%s356] sm:$0xff]
        %v368 = vld [vmem:[%s2] sm:$0xff]
        %v369 = vld [vmem:[%s2 + $0x8] sm:$0xff]
        %v370 = vld [vmem:[%s2 + $0x10] sm:$0xff]
        %v371 = vld [vmem:[%s2 + $0x18] sm:$0xff]
        %v372 = vld [vmem:[%s3] sm:$0xff]
        %v373 = vld [vmem:[%s3 + $0x8] sm:$0xff]
        %v374 = vld [vmem:[%s3 + $0x10] sm:$0xff]
        %v375 = vld [vmem:[%s3 + $0x18] sm:$0xff]
        %377 = vset.pattern.permute.xlu0 0
        %378 = vperm.xlu0 %377, %v372
        %v379 = vpop.permute.xlu0 %378
        %382 = vset.pattern.permute.xlu0 0
        %383 = vperm.xlu0 %382, %v373
        %v384 = vpop.permute.xlu0 %383
        %387 = vset.pattern.permute.xlu0 0
        %388 = vperm.xlu0 %387, %v374
        %v389 = vpop.permute.xlu0 %388
        %392 = vset.pattern.permute.xlu0 0
        %393 = vperm.xlu0 %392, %v375
        %v394 = vpop.permute.xlu0 %393
        %vm396 = vcmask 64512
        %v398 = vsel %vm396, %v368, 0
        %v401 = vsel %vm396, %v369, 0
        %v404 = vsel %vm396, %v370, 0
        %v407 = vsel %vm396, %v371, 0
        %409 = vmatprep.subr.mxu0 0.0
        %410 = vmatpush1.msra.mxu0 %v367
        %411 = vmatprep.subr.mxu0 0.0
        %412 = vmatpush1.msra.mxu0 0.0
        %413 = vmatprep.subr.mxu0 0.0
        %414 = vmatpush1.msra.mxu0 0.0
        %415 = vmatprep.subr.mxu0 0.0
        %416 = vmatpush1.msra.mxu0 0.0
        %417 = vmatprep.subr.mxu0 0.0
        %418 = vmatpush1.msra.mxu0 0.0
        %419 = vmatprep.subr.mxu0 0.0
        %420 = vmatpush1.msra.mxu0 0.0
        %421 = vmatprep.subr.mxu0 0.0
        %422 = vmatpush1.msra.mxu0 0.0
        %423 = vmatprep.subr.mxu0 0.0
        %424 = vmatpush1.msra.mxu0 0.0
        %425 = vmatprep.subr.mxu0 0.0
        %426 = vmatpush1.msra.mxu0 0.0
        %427 = vmatprep.subr.mxu0 0.0
        %428 = vmatpush1.msra.mxu0 0.0
        %429 = vmatprep.subr.mxu0 0.0
        %430 = vmatpush1.msra.mxu0 0.0
        %431 = vmatprep.subr.mxu0 0.0
        %432 = vmatpush1.msra.mxu0 0.0
        %433 = vmatprep.subr.mxu0 0.0
        %434 = vmatpush1.msra.mxu0 0.0
        %435 = vmatprep.subr.mxu0 0.0
        %436 = vmatpush1.msra.mxu0 0.0
        %437 = vmatprep.subr.mxu0 0.0
        %438 = vmatpush1.msra.mxu0 0.0
        %439 = vmatprep.subr.mxu0 0.0
        %440 = vmatpush1.msra.mxu0 0.0
        %441 = vmatprep.subr.mxu0 0.0
        %442 = vmatpush1.msra.mxu0 0.0
        %443 = vmatprep.subr.mxu0 0.0
        %444 = vmatpush1.msra.mxu0 0.0
        %445 = vmatprep.subr.mxu0 0.0
        %446 = vmatpush1.msra.mxu0 0.0
        %447 = vmatprep.subr.mxu0 0.0
        %448 = vmatpush1.msra.mxu0 0.0
        %449 = vmatprep.subr.mxu0 0.0
        %450 = vmatpush1.msra.mxu0 0.0
        %451 = vmatprep.subr.mxu0 0.0
        %452 = vmatpush1.msra.mxu0 0.0
        %453 = vmatprep.subr.mxu0 0.0
        %454 = vmatpush1.msra.mxu0 0.0
        %455 = vmatprep.subr.mxu0 0.0
        %456 = vmatpush1.msra.mxu0 0.0
        %457 = vmatprep.subr.mxu0 0.0
        %458 = vmatpush1.msra.mxu0 0.0
        %459 = vmatprep.subr.mxu0 0.0
        %460 = vmatpush1.msra.mxu0 0.0
        %461 = vmatprep.subr.mxu0 0.0
        %462 = vmatpush1.msra.mxu0 0.0
        %463 = vmatprep.subr.mxu0 0.0
        %464 = vmatpush1.msra.mxu0 0.0
        %465 = vmatprep.subr.mxu0 0.0
        %466 = vmatpush1.msra.mxu0 0.0
        %467 = vmatprep.subr.mxu0 0.0
        %468 = vmatpush1.msra.mxu0 0.0
        %469 = vmatprep.subr.mxu0 0.0
        %470 = vmatpush1.msra.mxu0 0.0
        %471 = vmatprep.subr.mxu0 0.0
        %472 = vmatpush1.msra.mxu0 0.0
        %473 = vmatprep.mubr.f32.mxu0 0.0
        %474 = vmatmul.mubr.f32.gmra.mrb[0].mxu0 %v398
        %v475 = vpop.f32.mrb[0].mxu0
        %v476 = vadd.f32 %v379, %v475
        %v477 = vpop.f32.mrb[0].mxu0
        %478 = vmatprep.mubr.f32.mxu0 0.0
        %479 = vmatmul.mubr.f32.gmra.mrb[0].mxu0 %v401
        %v480 = vpop.f32.mrb[0].mxu0
        %v481 = vadd.f32 %v384, %v480
        %v482 = vpop.f32.mrb[0].mxu0
        %483 = vmatprep.mubr.f32.mxu0 0.0
        %484 = vmatmul.mubr.f32.gmra.mrb[0].mxu0 %v404
        %v485 = vpop.f32.mrb[0].mxu0
        %v486 = vadd.f32 %v389, %v485
        %v487 = vpop.f32.mrb[0].mxu0
        %488 = vmatprep.mubr.f32.mxu0 0.0
        %489 = vmatmul.mubr.f32.gmra.mrb[0].mxu0 %v407
        %v490 = vpop.f32.mrb[0].mxu0
        %v491 = vadd.f32 %v394, %v490
        %v492 = vpop.f32.mrb[0].mxu0
        %493 = vdwg.mxu0
        %v494 = vld [vmem:[%s4] sm:$0xff]
        %v495 = vld [vmem:[%s4 + $0x8] sm:$0xff]
        %v496 = vld [vmem:[%s4 + $0x10] sm:$0xff]
        %v497 = vld [vmem:[%s4 + $0x18] sm:$0xff]
        %v498 = vld [vmem:[%s4 + $0x20] sm:$0xff]
        %v499 = vld [vmem:[%s4 + $0x28] sm:$0xff]
        %v500 = vld [vmem:[%s4 + $0x30] sm:$0xff]
        %v501 = vld [vmem:[%s4 + $0x38] sm:$0xff]
        %v502 = vld [vmem:[%s4 + $0x40] sm:$0xff]
        %v503 = vld [vmem:[%s4 + $0x48] sm:$0xff]
        %v504 = vld [vmem:[%s4 + $0x50] sm:$0xff]
        %v505 = vld [vmem:[%s4 + $0x58] sm:$0xff]
        %v506 = vld [vmem:[%s4 + $0x60] sm:$0xff]
        %v507 = vld [vmem:[%s4 + $0x68] sm:$0xff]
        %v508 = vld [vmem:[%s4 + $0x70] sm:$0xff]
        %v509 = vld [vmem:[%s4 + $0x78] sm:$0xff]
        %s510 = scalar_lea.vmem %s4, 128
        %v511 = vld [vmem:[%s510] sm:$0xff]
        %v512 = vld [vmem:[%s510 + $0x8] sm:$0xff]
        %v513 = vld [vmem:[%s510 + $0x10] sm:$0xff]
        %v514 = vld [vmem:[%s510 + $0x18] sm:$0xff]
        %v515 = vld [vmem:[%s510 + $0x20] sm:$0xff]
        %v516 = vld [vmem:[%s510 + $0x28] sm:$0xff]
        %v517 = vld [vmem:[%s510 + $0x30] sm:$0xff]
        %v518 = vld [vmem:[%s510 + $0x38] sm:$0xff]
        %v519 = vld [vmem:[%s510 + $0x40] sm:$0xff]
        %v520 = vld [vmem:[%s510 + $0x48] sm:$0xff]
        %v521 = vld [vmem:[%s510 + $0x50] sm:$0xff]
        %v522 = vld [vmem:[%s510 + $0x58] sm:$0xff]
        %v523 = vld [vmem:[%s510 + $0x60] sm:$0xff]
        %v524 = vld [vmem:[%s510 + $0x68] sm:$0xff]
        %v525 = vld [vmem:[%s510 + $0x70] sm:$0xff]
        %v526 = vld [vmem:[%s510 + $0x78] sm:$0xff]
        %vm527 = vcmask 523264
        %v529 = vsel %vm527, %v481, 0
        %531 = vmatprep.subr.mxu0 %v512
        %532 = vmatpush1.msra.mxu0 %v511
        %533 = vmatprep.subr.mxu0 %v514
        %534 = vmatpush1.msra.mxu0 %v513
        %535 = vmatprep.subr.mxu0 %v516
        %536 = vmatpush1.msra.mxu0 %v515
        %537 = vmatprep.subr.mxu0 %v518
        %538 = vmatpush1.msra.mxu0 %v517
        %539 = vmatprep.subr.mxu0 %v520
        %540 = vmatpush1.msra.mxu0 %v519
        %541 = vmatprep.subr.mxu0 %v522
        %542 = vmatpush1.msra.mxu0 %v521
        %543 = vmatprep.subr.mxu0 %v524
        %544 = vmatpush1.msra.mxu0 %v523
        %545 = vmatprep.subr.mxu0 %v526
        %546 = vmatpush1.msra.mxu0 %v525
        %547 = vmatprep.subr.mxu0 0.0
        %548 = vmatpush1.msra.mxu0 0.0
        %549 = vmatprep.subr.mxu0 0.0
        %550 = vmatpush1.msra.mxu0 0.0
        %551 = vmatprep.subr.mxu0 0.0
        %552 = vmatpush1.msra.mxu0 0.0
        %553 = vmatprep.subr.mxu0 0.0
        %554 = vmatpush1.msra.mxu0 0.0
        %555 = vmatprep.subr.mxu0 0.0
        %556 = vmatpush1.msra.mxu0 0.0
        %557 = vmatprep.subr.mxu0 0.0
        %558 = vmatpush1.msra.mxu0 0.0
        %559 = vmatprep.subr.mxu0 0.0
        %560 = vmatpush1.msra.mxu0 0.0
        %561 = vmatprep.subr.mxu0 0.0
        %562 = vmatpush1.msra.mxu0 0.0
        %563 = vmatprep.subr.mxu0 0.0
        %564 = vmatpush1.msra.mxu0 0.0
        %565 = vmatprep.subr.mxu0 0.0
        %566 = vmatpush1.msra.mxu0 0.0
        %567 = vmatprep.subr.mxu0 0.0
        %568 = vmatpush1.msra.mxu0 0.0
        %569 = vmatprep.subr.mxu0 0.0
        %570 = vmatpush1.msra.mxu0 0.0
        %571 = vmatprep.subr.mxu0 0.0
        %572 = vmatpush1.msra.mxu0 0.0
        %573 = vmatprep.subr.mxu0 0.0
        %574 = vmatpush1.msra.mxu0 0.0
        %575 = vmatprep.subr.mxu0 0.0
        %576 = vmatpush1.msra.mxu0 0.0
        %577 = vmatprep.subr.mxu0 0.0
        %578 = vmatpush1.msra.mxu0 0.0
        %579 = vmatprep.subr.mxu0 0.0
        %580 = vmatpush1.msra.mxu0 0.0
        %581 = vmatprep.subr.mxu0 0.0
        %582 = vmatpush1.msra.mxu0 0.0
        %583 = vmatprep.subr.mxu0 0.0
        %584 = vmatpush1.msra.mxu0 0.0
        %585 = vmatprep.subr.mxu0 0.0
        %586 = vmatpush1.msra.mxu0 0.0
        %587 = vmatprep.subr.mxu0 0.0
        %588 = vmatpush1.msra.mxu0 0.0
        %589 = vmatprep.subr.mxu0 0.0
        %590 = vmatpush1.msra.mxu0 0.0
        %591 = vmatprep.subr.mxu0 0.0
        %592 = vmatpush1.msra.mxu0 0.0
        %593 = vmatprep.subr.mxu0 0.0
        %594 = vmatpush1.msra.mxu0 0.0
        %595 = vmatprep.mubr.f32.mxu0 0.0
        %596 = vmatmul.mubr.f32.gmra.mrb[0].mxu0 %v529
        %v597 = vpop.f32.mrb[0].mxu0
        %v598 = vadd.f32 0.0, %v597
        %v599 = vpop.f32.mrb[0].mxu0
        %v600 = vadd.f32 0.0, %v599
        %601 = vdwg.mxu0
        %v603 = vsel %vm527, %v476, 0
        %605 = vmatprep.subr.mxu0 %v495
        %606 = vmatpush1.msra.mxu0 %v494
        %607 = vmatprep.subr.mxu0 %v497
        %608 = vmatpush1.msra.mxu0 %v496
        %609 = vmatprep.subr.mxu0 %v499
        %610 = vmatpush1.msra.mxu0 %v498
        %611 = vmatprep.subr.mxu0 %v501
        %612 = vmatpush1.msra.mxu0 %v500
        %613 = vmatprep.subr.mxu0 %v503
        %614 = vmatpush1.msra.mxu0 %v502
        %615 = vmatprep.subr.mxu0 %v505
        %616 = vmatpush1.msra.mxu0 %v504
        %617 = vmatprep.subr.mxu0 %v507
        %618 = vmatpush1.msra.mxu0 %v506
        %619 = vmatprep.subr.mxu0 %v509
        %620 = vmatpush1.msra.mxu0 %v508
        %621 = vmatprep.subr.mxu0 0.0
        %622 = vmatpush1.msra.mxu0 0.0
        %623 = vmatprep.subr.mxu0 0.0
        %624 = vmatpush1.msra.mxu0 0.0
        %625 = vmatprep.subr.mxu0 0.0
        %626 = vmatpush1.msra.mxu0 0.0
        %627 = vmatprep.subr.mxu0 0.0
        %628 = vmatpush1.msra.mxu0 0.0
        %629 = vmatprep.subr.mxu0 0.0
        %630 = vmatpush1.msra.mxu0 0.0
        %631 = vmatprep.subr.mxu0 0.0
        %632 = vmatpush1.msra.mxu0 0.0
        %633 = vmatprep.subr.mxu0 0.0
        %634 = vmatpush1.msra.mxu0 0.0
        %635 = vmatprep.subr.mxu0 0.0
        %636 = vmatpush1.msra.mxu0 0.0
        %637 = vmatprep.subr.mxu0 0.0
        %638 = vmatpush1.msra.mxu0 0.0
        %639 = vmatprep.subr.mxu0 0.0
        %640 = vmatpush1.msra.mxu0 0.0
        %641 = vmatprep.subr.mxu0 0.0
        %642 = vmatpush1.msra.mxu0 0.0
        %643 = vmatprep.subr.mxu0 0.0
        %644 = vmatpush1.msra.mxu0 0.0
        %645 = vmatprep.subr.mxu0 0.0
        %646 = vmatpush1.msra.mxu0 0.0
        %647 = vmatprep.subr.mxu0 0.0
        %648 = vmatpush1.msra.mxu0 0.0
        %649 = vmatprep.subr.mxu0 0.0
        %650 = vmatpush1.msra.mxu0 0.0
        %651 = vmatprep.subr.mxu0 0.0
        %652 = vmatpush1.msra.mxu0 0.0
        %653 = vmatprep.subr.mxu0 0.0
        %654 = vmatpush1.msra.mxu0 0.0
        %655 = vmatprep.subr.mxu0 0.0
        %656 = vmatpush1.msra.mxu0 0.0
        %657 = vmatprep.subr.mxu0 0.0
        %658 = vmatpush1.msra.mxu0 0.0
        %659 = vmatprep.subr.mxu0 0.0
        %660 = vmatpush1.msra.mxu0 0.0
        %661 = vmatprep.subr.mxu0 0.0
        %662 = vmatpush1.msra.mxu0 0.0
        %663 = vmatprep.subr.mxu0 0.0
        %664 = vmatpush1.msra.mxu0 0.0
        %665 = vmatprep.subr.mxu0 0.0
        %666 = vmatpush1.msra.mxu0 0.0
        %667 = vmatprep.subr.mxu0 0.0
        %668 = vmatpush1.msra.mxu0 0.0
        %669 = vmatprep.mubr.f32.mxu0 0.0
        %670 = vmatmul.mubr.f32.gmra.mrb[0].mxu0 %v603
        %v671 = vpop.f32.mrb[0].mxu0
        %v672 = vadd.f32 %v598, %v671
        %v673 = vpop.f32.mrb[0].mxu0
        %v674 = vadd.f32 %v600, %v673
        %675 = vdwg.mxu0
        %s676 = scalar_lea.vmem %s4, 256
        %v677 = vld [vmem:[%s676] sm:$0xff]
        %v678 = vld [vmem:[%s676 + $0x8] sm:$0xff]
        %v679 = vld [vmem:[%s676 + $0x10] sm:$0xff]
        %v680 = vld [vmem:[%s676 + $0x18] sm:$0xff]
        %v681 = vld [vmem:[%s676 + $0x20] sm:$0xff]
        %v682 = vld [vmem:[%s676 + $0x28] sm:$0xff]
        %v683 = vld [vmem:[%s676 + $0x30] sm:$0xff]
        %v684 = vld [vmem:[%s676 + $0x38] sm:$0xff]
        %v685 = vld [vmem:[%s676 + $0x40] sm:$0xff]
        %v686 = vld [vmem:[%s676 + $0x48] sm:$0xff]
        %v687 = vld [vmem:[%s676 + $0x50] sm:$0xff]
        %v688 = vld [vmem:[%s676 + $0x58] sm:$0xff]
        %v689 = vld [vmem:[%s676 + $0x60] sm:$0xff]
        %v690 = vld [vmem:[%s676 + $0x68] sm:$0xff]
        %v691 = vld [vmem:[%s676 + $0x70] sm:$0xff]
        %v692 = vld [vmem:[%s676 + $0x78] sm:$0xff]
        %v694 = vsel %vm527, %v486, 0
        %696 = vmatprep.subr.mxu0 %v678
        %697 = vmatpush1.msra.mxu0 %v677
        %698 = vmatprep.subr.mxu0 %v680
        %699 = vmatpush1.msra.mxu0 %v679
        %700 = vmatprep.subr.mxu0 %v682
        %701 = vmatpush1.msra.mxu0 %v681
        %702 = vmatprep.subr.mxu0 %v684
        %703 = vmatpush1.msra.mxu0 %v683
        %704 = vmatprep.subr.mxu0 %v686
        %705 = vmatpush1.msra.mxu0 %v685
        %706 = vmatprep.subr.mxu0 %v688
        %707 = vmatpush1.msra.mxu0 %v687
        %708 = vmatprep.subr.mxu0 %v690
        %709 = vmatpush1.msra.mxu0 %v689
        %710 = vmatprep.subr.mxu0 %v692
        %711 = vmatpush1.msra.mxu0 %v691
        %712 = vmatprep.subr.mxu0 0.0
        %713 = vmatpush1.msra.mxu0 0.0
        %714 = vmatprep.subr.mxu0 0.0
        %715 = vmatpush1.msra.mxu0 0.0
        %716 = vmatprep.subr.mxu0 0.0
        %717 = vmatpush1.msra.mxu0 0.0
        %718 = vmatprep.subr.mxu0 0.0
        %719 = vmatpush1.msra.mxu0 0.0
        %720 = vmatprep.subr.mxu0 0.0
        %721 = vmatpush1.msra.mxu0 0.0
        %722 = vmatprep.subr.mxu0 0.0
        %723 = vmatpush1.msra.mxu0 0.0
        %724 = vmatprep.subr.mxu0 0.0
        %725 = vmatpush1.msra.mxu0 0.0
        %726 = vmatprep.subr.mxu0 0.0
        %727 = vmatpush1.msra.mxu0 0.0
        %728 = vmatprep.subr.mxu0 0.0
        %729 = vmatpush1.msra.mxu0 0.0
        %730 = vmatprep.subr.mxu0 0.0
        %731 = vmatpush1.msra.mxu0 0.0
        %732 = vmatprep.subr.mxu0 0.0
        %733 = vmatpush1.msra.mxu0 0.0
        %734 = vmatprep.subr.mxu0 0.0
        %735 = vmatpush1.msra.mxu0 0.0
        %736 = vmatprep.subr.mxu0 0.0
        %737 = vmatpush1.msra.mxu0 0.0
        %738 = vmatprep.subr.mxu0 0.0
        %739 = vmatpush1.msra.mxu0 0.0
        %740 = vmatprep.subr.mxu0 0.0
        %741 = vmatpush1.msra.mxu0 0.0
        %742 = vmatprep.subr.mxu0 0.0
        %743 = vmatpush1.msra.mxu0 0.0
        %744 = vmatprep.subr.mxu0 0.0
        %745 = vmatpush1.msra.mxu0 0.0
        %746 = vmatprep.subr.mxu0 0.0
        %747 = vmatpush1.msra.mxu0 0.0
        %748 = vmatprep.subr.mxu0 0.0
        %749 = vmatpush1.msra.mxu0 0.0
        %750 = vmatprep.subr.mxu0 0.0
        %751 = vmatpush1.msra.mxu0 0.0
        %752 = vmatprep.subr.mxu0 0.0
        %753 = vmatpush1.msra.mxu0 0.0
        %754 = vmatprep.subr.mxu0 0.0
        %755 = vmatpush1.msra.mxu0 0.0
        %756 = vmatprep.subr.mxu0 0.0
        %757 = vmatpush1.msra.mxu0 0.0
        %758 = vmatprep.subr.mxu0 0.0
        %759 = vmatpush1.msra.mxu0 0.0
        %760 = vmatprep.mubr.f32.mxu0 0.0
        %761 = vmatmul.mubr.f32.gmra.mrb[0].mxu0 %v694
        %v762 = vpop.f32.mrb[0].mxu0
        %v763 = vadd.f32 0.0, %v762
        %v764 = vpop.f32.mrb[0].mxu0
        %v765 = vadd.f32 0.0, %v764
        %766 = vdwg.mxu0
        %v767 = vadd.f32 %v672, %v763
        %v768 = vadd.f32 %v674, %v765
        %s769 = scalar_lea.vmem %s4, 384
        %v770 = vld [vmem:[%s769] sm:$0xff]
        %v771 = vld [vmem:[%s769 + $0x8] sm:$0xff]
        %v772 = vld [vmem:[%s769 + $0x10] sm:$0xff]
        %v773 = vld [vmem:[%s769 + $0x18] sm:$0xff]
        %v774 = vld [vmem:[%s769 + $0x20] sm:$0xff]
        %v775 = vld [vmem:[%s769 + $0x28] sm:$0xff]
        %v776 = vld [vmem:[%s769 + $0x30] sm:$0xff]
        %v777 = vld [vmem:[%s769 + $0x38] sm:$0xff]
        %v778 = vld [vmem:[%s769 + $0x40] sm:$0xff]
        %v779 = vld [vmem:[%s769 + $0x48] sm:$0xff]
        %v780 = vld [vmem:[%s769 + $0x50] sm:$0xff]
        %v781 = vld [vmem:[%s769 + $0x58] sm:$0xff]
        %v782 = vld [vmem:[%s769 + $0x60] sm:$0xff]
        %v783 = vld [vmem:[%s769 + $0x68] sm:$0xff]
        %v784 = vld [vmem:[%s769 + $0x70] sm:$0xff]
        %v785 = vld [vmem:[%s769 + $0x78] sm:$0xff]
        %v787 = vsel %vm527, %v491, 0
        %789 = vmatprep.subr.mxu0 %v771
        %790 = vmatpush1.msra.mxu0 %v770
        %791 = vmatprep.subr.mxu0 %v773
        %792 = vmatpush1.msra.mxu0 %v772
        %793 = vmatprep.subr.mxu0 %v775
        %794 = vmatpush1.msra.mxu0 %v774
        %795 = vmatprep.subr.mxu0 %v777
        %796 = vmatpush1.msra.mxu0 %v776
        %797 = vmatprep.subr.mxu0 %v779
        %798 = vmatpush1.msra.mxu0 %v778
        %799 = vmatprep.subr.mxu0 %v781
        %800 = vmatpush1.msra.mxu0 %v780
        %801 = vmatprep.subr.mxu0 %v783
        %802 = vmatpush1.msra.mxu0 %v782
        %803 = vmatprep.subr.mxu0 %v785
        %804 = vmatpush1.msra.mxu0 %v784
        %805 = vmatprep.subr.mxu0 0.0
        %806 = vmatpush1.msra.mxu0 0.0
        %807 = vmatprep.subr.mxu0 0.0
        %808 = vmatpush1.msra.mxu0 0.0
        %809 = vmatprep.subr.mxu0 0.0
        %810 = vmatpush1.msra.mxu0 0.0
        %811 = vmatprep.subr.mxu0 0.0
        %812 = vmatpush1.msra.mxu0 0.0
        %813 = vmatprep.subr.mxu0 0.0
        %814 = vmatpush1.msra.mxu0 0.0
        %815 = vmatprep.subr.mxu0 0.0
        %816 = vmatpush1.msra.mxu0 0.0
        %817 = vmatprep.subr.mxu0 0.0
        %818 = vmatpush1.msra.mxu0 0.0
        %819 = vmatprep.subr.mxu0 0.0
        %820 = vmatpush1.msra.mxu0 0.0
        %821 = vmatprep.subr.mxu0 0.0
        %822 = vmatpush1.msra.mxu0 0.0
        %823 = vmatprep.subr.mxu0 0.0
        %824 = vmatpush1.msra.mxu0 0.0
        %825 = vmatprep.subr.mxu0 0.0
        %826 = vmatpush1.msra.mxu0 0.0
        %827 = vmatprep.subr.mxu0 0.0
        %828 = vmatpush1.msra.mxu0 0.0
        %829 = vmatprep.subr.mxu0 0.0
        %830 = vmatpush1.msra.mxu0 0.0
        %831 = vmatprep.subr.mxu0 0.0
        %832 = vmatpush1.msra.mxu0 0.0
        %833 = vmatprep.subr.mxu0 0.0
        %834 = vmatpush1.msra.mxu0 0.0
        %835 = vmatprep.subr.mxu0 0.0
        %836 = vmatpush1.msra.mxu0 0.0
        %837 = vmatprep.subr.mxu0 0.0
        %838 = vmatpush1.msra.mxu0 0.0
        %839 = vmatprep.subr.mxu0 0.0
        %840 = vmatpush1.msra.mxu0 0.0
        %841 = vmatprep.subr.mxu0 0.0
        %842 = vmatpush1.msra.mxu0 0.0
        %843 = vmatprep.subr.mxu0 0.0
        %844 = vmatpush1.msra.mxu0 0.0
        %845 = vmatprep.subr.mxu0 0.0
        %846 = vmatpush1.msra.mxu0 0.0
        %847 = vmatprep.subr.mxu0 0.0
        %848 = vmatpush1.msra.mxu0 0.0
        %849 = vmatprep.subr.mxu0 0.0
        %850 = vmatpush1.msra.mxu0 0.0
        %851 = vmatprep.subr.mxu0 0.0
        %852 = vmatpush1.msra.mxu0 0.0
        %853 = vmatprep.mubr.f32.mxu0 0.0
        %854 = vmatmul.mubr.f32.gmra.mrb[0].mxu0 %v787
        %v855 = vpop.f32.mrb[0].mxu0
        %v856 = vadd.f32 0.0, %v855
        %v857 = vpop.f32.mrb[0].mxu0
        %v858 = vadd.f32 0.0, %v857
        %859 = vdwg.mxu0
        %v860 = vadd.f32 %v767, %v856
        %v861 = vadd.f32 %v768, %v858
        %862 = vst [vmem:[#allocation2 + $0x8] sm:$0xff] %v860
        %863 = vst [vmem:[#allocation2 + $0x10] sm:$0xff] %v861
        %v864 = vld [vmem:[%s361] sm:$0xff]
        %v865 = vld [vmem:[%s361 + $0x8] sm:$0xff]
        %866 = vst [vmem:[#allocation2 + $0x28] sm:$0xff] %v864
        %867 = vst [vmem:[#allocation2 + $0x30] sm:$0xff] %v865
        %v868 = vld [vmem:[#allocation3] sm:$0xff]
        %v869 = vld [vmem:[#allocation3 + $0x8] sm:$0xff]
        %v870 = vld [vmem:[#allocation3 + $0x10] sm:$0xff]
        %v871 = vld [vmem:[#allocation3 + $0x18] sm:$0xff]
        %vm872 = vcmp.gt.f32.partialorder %v868, 0.5
        %vm873 = vcmp.gt.f32.partialorder %v869, 0.5
        %vm874 = vcmp.gt.f32.partialorder %v870, 0.5
        %vm875 = vcmp.gt.f32.partialorder %v871, 0.5
        %s876 = scalar_lea.vmem [#allocation3], 32
        %v877 = vld [vmem:[%s876] sm:$0xff]
        %v878 = vld [vmem:[%s876 + $0x8] sm:$0xff]
        %v879 = vld [vmem:[%s876 + $0x10] sm:$0xff]
        %v880 = vld [vmem:[%s876 + $0x18] sm:$0xff]
        %vm881 = vcmp.gt.f32.partialorder %v877, 0.5
        %vm882 = vcmp.gt.f32.partialorder %v878, 0.5
        %vm883 = vcmp.gt.f32.partialorder %v879, 0.5
        %vm884 = vcmp.gt.f32.partialorder %v880, 0.5
        %s885 = scalar_lea.vmem [#allocation3], 64
        %v886 = vld [vmem:[%s885] sm:$0xff]
        %v887 = vld [vmem:[%s885 + $0x8] sm:$0xff]
        %v888 = vld [vmem:[%s885 + $0x10] sm:$0xff]
        %v889 = vld [vmem:[%s885 + $0x18] sm:$0xff]
        %vm890 = vcmp.gt.f32.partialorder %v886, 0.5
        %vm891 = vcmp.gt.f32.partialorder %v887, 0.5
        %vm892 = vcmp.gt.f32.partialorder %v888, 0.5
        %vm893 = vcmp.gt.f32.partialorder %v889, 0.5
        %s894 = scalar_lea.vmem [#allocation3], 96
        %v895 = vld [vmem:[%s894] sm:$0xff]
        %v896 = vld [vmem:[%s894 + $0x8] sm:$0xff]
        %v897 = vld [vmem:[%s894 + $0x10] sm:$0xff]
        %v898 = vld [vmem:[%s894 + $0x18] sm:$0xff]
        %vm899 = vcmp.gt.f32.partialorder %v895, 0.5
        %vm900 = vcmp.gt.f32.partialorder %v896, 0.5
        %vm901 = vcmp.gt.f32.partialorder %v897, 0.5
        %vm902 = vcmp.gt.f32.partialorder %v898, 0.5
        %v903 = vld [vmem:[#allocation5] sm:$0xff]
        %v904 = vld [vmem:[#allocation2] sm:$0xff]
        %v905 = vld [vmem:[#allocation2 + $0x8] sm:$0xff]
        %v906 = vld [vmem:[#allocation2 + $0x10] sm:$0xff]
        %v907 = vld [vmem:[#allocation2 + $0x20] sm:$0xff]
        %v908 = vld [vmem:[#allocation2 + $0x28] sm:$0xff]
        %v909 = vld [vmem:[#allocation2 + $0x30] sm:$0xff]
        %916 = vrot.lane.b32.xlu0 %v904, 15
        %v917 = vpop.permute.xlu0 %916
        %918 = vrot.lane.b32.xlu0 %v905, 15
        %v919 = vpop.permute.xlu0 %918
        %920 = vrot.lane.b32.xlu0 %v906, 15
        %v921 = vpop.permute.xlu0 %920
        %922 = vrot.lane.b32.xlu0 %v907, 15
        %v923 = vpop.permute.xlu0 %922
        %924 = vrot.lane.b32.xlu0 %v908, 15
        %v925 = vpop.permute.xlu0 %924
        %926 = vrot.lane.b32.xlu0 %v909, 15
        %v927 = vpop.permute.xlu0 %926
        %vm928 = vcmask 121856
        %v929 = vsel %vm928, %v917, %v919
        %v930 = vsel %vm928, %v919, %v921
        %v931 = vsel %vm928, %v923, %v925
        %v932 = vsel %vm928, %v925, %v927
        %937 = vrot.lane.b32.xlu0 %v904, 17
        %v938 = vpop.permute.xlu0 %937
        %939 = vrot.lane.b32.xlu0 %v905, 17
        %v940 = vpop.permute.xlu0 %939
        %941 = vrot.lane.b32.xlu0 %v906, 17
        %v942 = vpop.permute.xlu0 %941
        %943 = vrot.lane.b32.xlu0 %v907, 17
        %v944 = vpop.permute.xlu0 %943
        %945 = vrot.lane.b32.xlu0 %v908, 17
        %v946 = vpop.permute.xlu0 %945
        %947 = vrot.lane.b32.xlu0 %v909, 17
        %v948 = vpop.permute.xlu0 %947
        %vm949 = vcmask 138240
        %v950 = vsel %vm949, %v938, %v940
        %v951 = vsel %vm949, %v940, %v942
        %v952 = vsel %vm949, %v944, %v946
        %v953 = vsel %vm949, %v946, %v948
        %v958 = vsel %vm872, %v929, %v950
        %v959 = vsel %vm873, %v930, %v951
        %v960 = vsel %vm874, %v931, %v952
        %v961 = vsel %vm875, %v932, %v953
        %v962 = vld [vmem:[#allocation2 + $0x8] sm:$0xff]
        %v963 = vld [vmem:[#allocation2 + $0x10] sm:$0xff]
        %v964 = vld [vmem:[#allocation2 + $0x18] sm:$0xff]
        %v965 = vld [vmem:[#allocation2 + $0x28] sm:$0xff]
        %v966 = vld [vmem:[#allocation2 + $0x30] sm:$0xff]
        %v967 = vld [vmem:[#allocation2 + $0x38] sm:$0xff]
        %974 = vrot.lane.b32.xlu0 %v962, 111
        %v975 = vpop.permute.xlu0 %974
        %976 = vrot.lane.b32.xlu0 %v963, 111
        %v977 = vpop.permute.xlu0 %976
        %978 = vrot.lane.b32.xlu0 %v964, 111
        %v979 = vpop.permute.xlu0 %978
        %980 = vrot.lane.b32.xlu0 %v965, 111
        %v981 = vpop.permute.xlu0 %980
        %982 = vrot.lane.b32.xlu0 %v966, 111
        %v983 = vpop.permute.xlu0 %982
        %984 = vrot.lane.b32.xlu0 %v967, 111
        %v985 = vpop.permute.xlu0 %984
        %vm986 = vcmask 908288
        %v987 = vsel %vm986, %v975, %v977
        %v988 = vsel %vm986, %v977, %v979
        %v989 = vsel %vm986, %v981, %v983
        %v990 = vsel %vm986, %v983, %v985
        %995 = vrot.lane.b32.xlu0 %v962, 113
        %v996 = vpop.permute.xlu0 %995
        %997 = vrot.lane.b32.xlu0 %v963, 113
        %v998 = vpop.permute.xlu0 %997
        %999 = vrot.lane.b32.xlu0 %v964, 113
        %v1000 = vpop.permute.xlu0 %999
        %1001 = vrot.lane.b32.xlu0 %v965, 113
        %v1002 = vpop.permute.xlu0 %1001
        %1003 = vrot.lane.b32.xlu0 %v966, 113
        %v1004 = vpop.permute.xlu0 %1003
        %1005 = vrot.lane.b32.xlu0 %v967, 113
        %v1006 = vpop.permute.xlu0 %1005
        %vm1007 = vcmask 924672
        %v1008 = vsel %vm1007, %v996, %v998
        %v1009 = vsel %vm1007, %v998, %v1000
        %v1010 = vsel %vm1007, %v1002, %v1004
        %v1011 = vsel %vm1007, %v1004, %v1006
        %v1016 = vsel %vm872, %v987, %v1008
        %v1017 = vsel %vm873, %v988, %v1009
        %v1018 = vsel %vm874, %v989, %v1010
        %v1019 = vsel %vm875, %v990, %v1011
        %v1020 = vsel %vm890, %v1016, %v958
        %v1021 = vsel %vm891, %v1017, %v959
        %v1022 = vsel %vm892, %v1018, %v960
        %v1023 = vsel %vm893, %v1019, %v961
        %s1024 = scalar_lea.vmem [#allocation5], 8
        %v1025 = vld [vmem:[%s1024] sm:$0xff]
        %1026 = vrot.lane.b32.xlu0 %v962, 112
        %v1027 = vpop.permute.xlu0 %1026
        %1028 = vrot.lane.b32.xlu0 %v963, 112
        %v1029 = vpop.permute.xlu0 %1028
        %1030 = vrot.lane.b32.xlu0 %v964, 112
        %v1031 = vpop.permute.xlu0 %1030
        %1032 = vrot.lane.b32.xlu0 %v965, 112
        %v1033 = vpop.permute.xlu0 %1032
        %1034 = vrot.lane.b32.xlu0 %v966, 112
        %v1035 = vpop.permute.xlu0 %1034
        %1036 = vrot.lane.b32.xlu0 %v967, 112
        %v1037 = vpop.permute.xlu0 %1036
        %vm1038 = vcmask 916480
        %v1039 = vsel %vm1038, %v1027, %v1029
        %v1040 = vsel %vm1038, %v1029, %v1031
        %v1041 = vsel %vm1038, %v1033, %v1035
        %v1042 = vsel %vm1038, %v1035, %v1037
        %1047 = vrot.lane.b32.xlu0 %v904, 16
        %v1048 = vpop.permute.xlu0 %1047
        %1049 = vrot.lane.b32.xlu0 %v905, 16
        %v1050 = vpop.permute.xlu0 %1049
        %1051 = vrot.lane.b32.xlu0 %v906, 16
        %v1052 = vpop.permute.xlu0 %1051
        %1053 = vrot.lane.b32.xlu0 %v907, 16
        %v1054 = vpop.permute.xlu0 %1053
        %1055 = vrot.lane.b32.xlu0 %v908, 16
        %v1056 = vpop.permute.xlu0 %1055
        %1057 = vrot.lane.b32.xlu0 %v909, 16
        %v1058 = vpop.permute.xlu0 %1057
        %vm1059 = vcmask 130048
        %v1060 = vsel %vm1059, %v1048, %v1050
        %v1061 = vsel %vm1059, %v1050, %v1052
        %v1062 = vsel %vm1059, %v1054, %v1056
        %v1063 = vsel %vm1059, %v1056, %v1058
        %v1068 = vsel %vm890, %v1039, %v1060
        %v1069 = vsel %vm891, %v1040, %v1061
        %v1070 = vsel %vm892, %v1041, %v1062
        %v1071 = vsel %vm893, %v1042, %v1063
        %v1073 = vsel %vm1059, %v1025, 0
        %1075 = vmatprep.subr.mxu0 %v1069
        %1076 = vmatpush1.msra.mxu0 %v1068
        %1077 = vmatprep.subr.mxu0 %v1071
        %1078 = vmatpush1.msra.mxu0 %v1070
        %1079 = vmatprep.subr.mxu0 0.0
        %1080 = vmatpush1.msra.mxu0 0.0
        %1081 = vmatprep.subr.mxu0 0.0
        %1082 = vmatpush1.msra.mxu0 0.0
        %1083 = vmatprep.subr.mxu0 0.0
        %1084 = vmatpush1.msra.mxu0 0.0
        %1085 = vmatprep.subr.mxu0 0.0
        %1086 = vmatpush1.msra.mxu0 0.0
        %1087 = vmatprep.subr.mxu0 0.0
        %1088 = vmatpush1.msra.mxu0 0.0
        %1089 = vmatprep.subr.mxu0 0.0
        %1090 = vmatpush1.msra.mxu0 0.0
        %1091 = vmatprep.subr.mxu0 0.0
        %1092 = vmatpush1.msra.mxu0 0.0
        %1093 = vmatprep.subr.mxu0 0.0
        %1094 = vmatpush1.msra.mxu0 0.0
        %1095 = vmatprep.subr.mxu0 0.0
        %1096 = vmatpush1.msra.mxu0 0.0
        %1097 = vmatprep.subr.mxu0 0.0
        %1098 = vmatpush1.msra.mxu0 0.0
        %1099 = vmatprep.subr.mxu0 0.0
        %1100 = vmatpush1.msra.mxu0 0.0
        %1101 = vmatprep.subr.mxu0 0.0
        %1102 = vmatpush1.msra.mxu0 0.0
        %1103 = vmatprep.subr.mxu0 0.0
        %1104 = vmatpush1.msra.mxu0 0.0
        %1105 = vmatprep.subr.mxu0 0.0
        %1106 = vmatpush1.msra.mxu0 0.0
        %1107 = vmatprep.subr.mxu0 0.0
        %1108 = vmatpush1.msra.mxu0 0.0
        %1109 = vmatprep.subr.mxu0 0.0
        %1110 = vmatpush1.msra.mxu0 0.0
        %1111 = vmatprep.subr.mxu0 0.0
        %1112 = vmatpush1.msra.mxu0 0.0
        %1113 = vmatprep.subr.mxu0 0.0
        %1114 = vmatpush1.msra.mxu0 0.0
        %1115 = vmatprep.subr.mxu0 0.0
        %1116 = vmatpush1.msra.mxu0 0.0
        %1117 = vmatprep.subr.mxu0 0.0
        %1118 = vmatpush1.msra.mxu0 0.0
        %1119 = vmatprep.subr.mxu0 0.0
        %1120 = vmatpush1.msra.mxu0 0.0
        %1121 = vmatprep.subr.mxu0 0.0
        %1122 = vmatpush1.msra.mxu0 0.0
        %1123 = vmatprep.subr.mxu0 0.0
        %1124 = vmatpush1.msra.mxu0 0.0
        %1125 = vmatprep.subr.mxu0 0.0
        %1126 = vmatpush1.msra.mxu0 0.0
        %1127 = vmatprep.subr.mxu0 0.0
        %1128 = vmatpush1.msra.mxu0 0.0
        %1129 = vmatprep.subr.mxu0 0.0
        %1130 = vmatpush1.msra.mxu0 0.0
        %1131 = vmatprep.subr.mxu0 0.0
        %1132 = vmatpush1.msra.mxu0 0.0
        %1133 = vmatprep.subr.mxu0 0.0
        %1134 = vmatpush1.msra.mxu0 0.0
        %1135 = vmatprep.subr.mxu0 0.0
        %1136 = vmatpush1.msra.mxu0 0.0
        %1137 = vmatprep.subr.mxu0 0.0
        %1138 = vmatpush1.msra.mxu0 0.0
        %1139 = vmatprep.mubr.f32.mxu0 0.0
        %1140 = vmatmul.mubr.f32.gmra.mrb[0].mxu0 %v1073
        %v1141 = vpop.f32.mrb[0].mxu0
        %v1142 = vadd.f32 0.0, %v1141
        %v1143 = vpop.f32.mrb[0].mxu0
        %v1144 = vadd.f32 0.0, %v1143
        %1145 = vdwg.mxu0
        %v1147 = vsel %vm1059, %v903, 0
        %1149 = vmatprep.subr.mxu0 %v1021
        %1150 = vmatpush1.msra.mxu0 %v1020
        %1151 = vmatprep.subr.mxu0 %v1023
        %1152 = vmatpush1.msra.mxu0 %v1022
        %1153 = vmatprep.subr.mxu0 0.0
        %1154 = vmatpush1.msra.mxu0 0.0
        %1155 = vmatprep.subr.mxu0 0.0
        %1156 = vmatpush1.msra.mxu0 0.0
        %1157 = vmatprep.subr.mxu0 0.0
        %1158 = vmatpush1.msra.mxu0 0.0
        %1159 = vmatprep.subr.mxu0 0.0
        %1160 = vmatpush1.msra.mxu0 0.0
        %1161 = vmatprep.subr.mxu0 0.0
        %1162 = vmatpush1.msra.mxu0 0.0
        %1163 = vmatprep.subr.mxu0 0.0
        %1164 = vmatpush1.msra.mxu0 0.0
        %1165 = vmatprep.subr.mxu0 0.0
        %1166 = vmatpush1.msra.mxu0 0.0
        %1167 = vmatprep.subr.mxu0 0.0
        %1168 = vmatpush1.msra.mxu0 0.0
        %1169 = vmatprep.subr.mxu0 0.0
        %1170 = vmatpush1.msra.mxu0 0.0
        %1171 = vmatprep.subr.mxu0 0.0
        %1172 = vmatpush1.msra.mxu0 0.0
        %1173 = vmatprep.subr.mxu0 0.0
        %1174 = vmatpush1.msra.mxu0 0.0
        %1175 = vmatprep.subr.mxu0 0.0
        %1176 = vmatpush1.msra.mxu0 0.0
        %1177 = vmatprep.subr.mxu0 0.0
        %1178 = vmatpush1.msra.mxu0 0.0
        %1179 = vmatprep.subr.mxu0 0.0
        %1180 = vmatpush1.msra.mxu0 0.0
        %1181 = vmatprep.subr.mxu0 0.0
        %1182 = vmatpush1.msra.mxu0 0.0
        %1183 = vmatprep.subr.mxu0 0.0
        %1184 = vmatpush1.msra.mxu0 0.0
        %1185 = vmatprep.subr.mxu0 0.0
        %1186 = vmatpush1.msra.mxu0 0.0
        %1187 = vmatprep.subr.mxu0 0.0
        %1188 = vmatpush1.msra.mxu0 0.0
        %1189 = vmatprep.subr.mxu0 0.0
        %1190 = vmatpush1.msra.mxu0 0.0
        %1191 = vmatprep.subr.mxu0 0.0
        %1192 = vmatpush1.msra.mxu0 0.0
        %1193 = vmatprep.subr.mxu0 0.0
        %1194 = vmatpush1.msra.mxu0 0.0
        %1195 = vmatprep.subr.mxu0 0.0
        %1196 = vmatpush1.msra.mxu0 0.0
        %1197 = vmatprep.subr.mxu0 0.0
        %1198 = vmatpush1.msra.mxu0 0.0
        %1199 = vmatprep.subr.mxu0 0.0
        %1200 = vmatpush1.msra.mxu0 0.0
        %1201 = vmatprep.subr.mxu0 0.0
        %1202 = vmatpush1.msra.mxu0 0.0
        %1203 = vmatprep.subr.mxu0 0.0
        %1204 = vmatpush1.msra.mxu0 0.0
        %1205 = vmatprep.subr.mxu0 0.0
        %1206 = vmatpush1.msra.mxu0 0.0
        %1207 = vmatprep.subr.mxu0 0.0
        %1208 = vmatpush1.msra.mxu0 0.0
        %1209 = vmatprep.subr.mxu0 0.0
        %1210 = vmatpush1.msra.mxu0 0.0
        %1211 = vmatprep.subr.mxu0 0.0
        %1212 = vmatpush1.msra.mxu0 0.0
        %1213 = vmatprep.mubr.f32.mxu0 0.0
        %1214 = vmatmul.mubr.f32.gmra.mrb[0].mxu0 %v1147
        %v1215 = vpop.f32.mrb[0].mxu0
        %v1216 = vadd.f32 %v1142, %v1215
        %v1217 = vpop.f32.mrb[0].mxu0
        %v1218 = vadd.f32 %v1144, %v1217
        %1219 = vdwg.mxu0
        %s1220 = scalar_lea.vmem [#allocation5], 16
        %v1221 = vld [vmem:[%s1220] sm:$0xff]
        %v1222 = vsel %vm881, %v950, %v929
        %v1223 = vsel %vm882, %v951, %v930
        %v1224 = vsel %vm883, %v952, %v931
        %v1225 = vsel %vm884, %v953, %v932
        %v1226 = vsel %vm881, %v1008, %v987
        %v1227 = vsel %vm882, %v1009, %v988
        %v1228 = vsel %vm883, %v1010, %v989
        %v1229 = vsel %vm884, %v1011, %v990
        %v1230 = vsel %vm890, %v1226, %v1222
        %v1231 = vsel %vm891, %v1227, %v1223
        %v1232 = vsel %vm892, %v1228, %v1224
        %v1233 = vsel %vm893, %v1229, %v1225
        %v1235 = vsel %vm1059, %v1221, 0
        %1237 = vmatprep.subr.mxu0 %v1231
        %1238 = vmatpush1.msra.mxu0 %v1230
        %1239 = vmatprep.subr.mxu0 %v1233
        %1240 = vmatpush1.msra.mxu0 %v1232
        %1241 = vmatprep.subr.mxu0 0.0
        %1242 = vmatpush1.msra.mxu0 0.0
        %1243 = vmatprep.subr.mxu0 0.0
        %1244 = vmatpush1.msra.mxu0 0.0
        %1245 = vmatprep.subr.mxu0 0.0
        %1246 = vmatpush1.msra.mxu0 0.0
        %1247 = vmatprep.subr.mxu0 0.0
        %1248 = vmatpush1.msra.mxu0 0.0
        %1249 = vmatprep.subr.mxu0 0.0
        %1250 = vmatpush1.msra.mxu0 0.0
        %1251 = vmatprep.subr.mxu0 0.0
        %1252 = vmatpush1.msra.mxu0 0.0
        %1253 = vmatprep.subr.mxu0 0.0
        %1254 = vmatpush1.msra.mxu0 0.0
        %1255 = vmatprep.subr.mxu0 0.0
        %1256 = vmatpush1.msra.mxu0 0.0
        %1257 = vmatprep.subr.mxu0 0.0
        %1258 = vmatpush1.msra.mxu0 0.0
        %1259 = vmatprep.subr.mxu0 0.0
        %1260 = vmatpush1.msra.mxu0 0.0
        %1261 = vmatprep.subr.mxu0 0.0
        %1262 = vmatpush1.msra.mxu0 0.0
        %1263 = vmatprep.subr.mxu0 0.0
        %1264 = vmatpush1.msra.mxu0 0.0
        %1265 = vmatprep.subr.mxu0 0.0
        %1266 = vmatpush1.msra.mxu0 0.0
        %1267 = vmatprep.subr.mxu0 0.0
        %1268 = vmatpush1.msra.mxu0 0.0
        %1269 = vmatprep.subr.mxu0 0.0
        %1270 = vmatpush1.msra.mxu0 0.0
        %1271 = vmatprep.subr.mxu0 0.0
        %1272 = vmatpush1.msra.mxu0 0.0
        %1273 = vmatprep.subr.mxu0 0.0
        %1274 = vmatpush1.msra.mxu0 0.0
        %1275 = vmatprep.subr.mxu0 0.0
        %1276 = vmatpush1.msra.mxu0 0.0
        %1277 = vmatprep.subr.mxu0 0.0
        %1278 = vmatpush1.msra.mxu0 0.0
        %1279 = vmatprep.subr.mxu0 0.0
        %1280 = vmatpush1.msra.mxu0 0.0
        %1281 = vmatprep.subr.mxu0 0.0
        %1282 = vmatpush1.msra.mxu0 0.0
        %1283 = vmatprep.subr.mxu0 0.0
        %1284 = vmatpush1.msra.mxu0 0.0
        %1285 = vmatprep.subr.mxu0 0.0
        %1286 = vmatpush1.msra.mxu0 0.0
        %1287 = vmatprep.subr.mxu0 0.0
        %1288 = vmatpush1.msra.mxu0 0.0
        %1289 = vmatprep.subr.mxu0 0.0
        %1290 = vmatpush1.msra.mxu0 0.0
        %1291 = vmatprep.subr.mxu0 0.0
        %1292 = vmatpush1.msra.mxu0 0.0
        %1293 = vmatprep.subr.mxu0 0.0
        %1294 = vmatpush1.msra.mxu0 0.0
        %1295 = vmatprep.subr.mxu0 0.0
        %1296 = vmatpush1.msra.mxu0 0.0
        %1297 = vmatprep.subr.mxu0 0.0
        %1298 = vmatpush1.msra.mxu0 0.0
        %1299 = vmatprep.subr.mxu0 0.0
        %1300 = vmatpush1.msra.mxu0 0.0
        %1301 = vmatprep.mubr.f32.mxu0 0.0
        %1302 = vmatmul.mubr.f32.gmra.mrb[0].mxu0 %v1235
        %v1303 = vpop.f32.mrb[0].mxu0
        %v1304 = vadd.f32 0.0, %v1303
        %v1305 = vpop.f32.mrb[0].mxu0
        %v1306 = vadd.f32 0.0, %v1305
        %1307 = vdwg.mxu0
        %v1308 = vadd.f32 %v1216, %v1304
        %v1309 = vadd.f32 %v1218, %v1306
        %s1310 = scalar_lea.vmem [#allocation5], 24
        %v1311 = vld [vmem:[%s1310] sm:$0xff]
        %1312 = vrot.lane.b32.xlu0 %v962, 127
        %v1313 = vpop.permute.xlu0 %1312
        %1314 = vrot.lane.b32.xlu0 %v963, 127
        %v1315 = vpop.permute.xlu0 %1314
        %1316 = vrot.lane.b32.xlu0 %v964, 127
        %v1317 = vpop.permute.xlu0 %1316
        %1318 = vrot.lane.b32.xlu0 %v965, 127
        %v1319 = vpop.permute.xlu0 %1318
        %1320 = vrot.lane.b32.xlu0 %v966, 127
        %v1321 = vpop.permute.xlu0 %1320
        %1322 = vrot.lane.b32.xlu0 %v967, 127
        %v1323 = vpop.permute.xlu0 %1322
        %vm1324 = vcmask 1039360
        %v1325 = vsel %vm1324, %v1313, %v1315
        %v1326 = vsel %vm1324, %v1315, %v1317
        %v1327 = vsel %vm1324, %v1319, %v1321
        %v1328 = vsel %vm1324, %v1321, %v1323
        %1333 = vrot.lane.b32.xlu0 %v904, 1
        %v1334 = vpop.permute.xlu0 %1333
        %1335 = vrot.lane.b32.xlu0 %v905, 1
        %v1336 = vpop.permute.xlu0 %1335
        %1337 = vrot.lane.b32.xlu0 %v906, 1
        %v1338 = vpop.permute.xlu0 %1337
        %1339 = vrot.lane.b32.xlu0 %v907, 1
        %v1340 = vpop.permute.xlu0 %1339
        %1341 = vrot.lane.b32.xlu0 %v908, 1
        %v1342 = vpop.permute.xlu0 %1341
        %1343 = vrot.lane.b32.xlu0 %v909, 1
        %v1344 = vpop.permute.xlu0 %1343
        %vm1345 = vcmask 7168
        %v1346 = vsel %vm1345, %v1334, %v1336
        %v1347 = vsel %vm1345, %v1336, %v1338
        %v1348 = vsel %vm1345, %v1340, %v1342
        %v1349 = vsel %vm1345, %v1342, %v1344
        %v1354 = vsel %vm872, %v1325, %v1346
        %v1355 = vsel %vm873, %v1326, %v1347
        %v1356 = vsel %vm874, %v1327, %v1348
        %v1357 = vsel %vm875, %v1328, %v1349
        %v1359 = vsel %vm1059, %v1311, 0
        %1361 = vmatprep.subr.mxu0 %v1355
        %1362 = vmatpush1.msra.mxu0 %v1354
        %1363 = vmatprep.subr.mxu0 %v1357
        %1364 = vmatpush1.msra.mxu0 %v1356
        %1365 = vmatprep.subr.mxu0 0.0
        %1366 = vmatpush1.msra.mxu0 0.0
        %1367 = vmatprep.subr.mxu0 0.0
        %1368 = vmatpush1.msra.mxu0 0.0
        %1369 = vmatprep.subr.mxu0 0.0
        %1370 = vmatpush1.msra.mxu0 0.0
        %1371 = vmatprep.subr.mxu0 0.0
        %1372 = vmatpush1.msra.mxu0 0.0
        %1373 = vmatprep.subr.mxu0 0.0
        %1374 = vmatpush1.msra.mxu0 0.0
        %1375 = vmatprep.subr.mxu0 0.0
        %1376 = vmatpush1.msra.mxu0 0.0
        %1377 = vmatprep.subr.mxu0 0.0
        %1378 = vmatpush1.msra.mxu0 0.0
        %1379 = vmatprep.subr.mxu0 0.0
        %1380 = vmatpush1.msra.mxu0 0.0
        %1381 = vmatprep.subr.mxu0 0.0
        %1382 = vmatpush1.msra.mxu0 0.0
        %1383 = vmatprep.subr.mxu0 0.0
        %1384 = vmatpush1.msra.mxu0 0.0
        %1385 = vmatprep.subr.mxu0 0.0
        %1386 = vmatpush1.msra.mxu0 0.0
        %1387 = vmatprep.subr.mxu0 0.0
        %1388 = vmatpush1.msra.mxu0 0.0
        %1389 = vmatprep.subr.mxu0 0.0
        %1390 = vmatpush1.msra.mxu0 0.0
        %1391 = vmatprep.subr.mxu0 0.0
        %1392 = vmatpush1.msra.mxu0 0.0
        %1393 = vmatprep.subr.mxu0 0.0
        %1394 = vmatpush1.msra.mxu0 0.0
        %1395 = vmatprep.subr.mxu0 0.0
        %1396 = vmatpush1.msra.mxu0 0.0
        %1397 = vmatprep.subr.mxu0 0.0
        %1398 = vmatpush1.msra.mxu0 0.0
        %1399 = vmatprep.subr.mxu0 0.0
        %1400 = vmatpush1.msra.mxu0 0.0
        %1401 = vmatprep.subr.mxu0 0.0
        %1402 = vmatpush1.msra.mxu0 0.0
        %1403 = vmatprep.subr.mxu0 0.0
        %1404 = vmatpush1.msra.mxu0 0.0
        %1405 = vmatprep.subr.mxu0 0.0
        %1406 = vmatpush1.msra.mxu0 0.0
        %1407 = vmatprep.subr.mxu0 0.0
        %1408 = vmatpush1.msra.mxu0 0.0
        %1409 = vmatprep.subr.mxu0 0.0
        %1410 = vmatpush1.msra.mxu0 0.0
        %1411 = vmatprep.subr.mxu0 0.0
        %1412 = vmatpush1.msra.mxu0 0.0
        %1413 = vmatprep.subr.mxu0 0.0
        %1414 = vmatpush1.msra.mxu0 0.0
        %1415 = vmatprep.subr.mxu0 0.0
        %1416 = vmatpush1.msra.mxu0 0.0
        %1417 = vmatprep.subr.mxu0 0.0
        %1418 = vmatpush1.msra.mxu0 0.0
        %1419 = vmatprep.subr.mxu0 0.0
        %1420 = vmatpush1.msra.mxu0 0.0
        %1421 = vmatprep.subr.mxu0 0.0
        %1422 = vmatpush1.msra.mxu0 0.0
        %1423 = vmatprep.subr.mxu0 0.0
        %1424 = vmatpush1.msra.mxu0 0.0
        %1425 = vmatprep.mubr.f32.mxu0 0.0
        %1426 = vmatmul.mubr.f32.gmra.mrb[0].mxu0 %v1359
        %v1427 = vpop.f32.mrb[0].mxu0
        %v1428 = vadd.f32 0.0, %v1427
        %v1429 = vpop.f32.mrb[0].mxu0
        %v1430 = vadd.f32 0.0, %v1429
        %1431 = vdwg.mxu0
        %v1432 = vadd.f32 %v1308, %v1428
        %v1433 = vadd.f32 %v1309, %v1430
        %s1434 = scalar_lea.vmem [#allocation5], 32
        %v1435 = vld [vmem:[%s1434] sm:$0xff]
        %v1437 = vsel %vm1059, %v1435, 0
        %1439 = vmatprep.subr.mxu0 %v906
        %1440 = vmatpush1.msra.mxu0 %v905
        %1441 = vmatprep.subr.mxu0 %v909
        %1442 = vmatpush1.msra.mxu0 %v908
        %1443 = vmatprep.subr.mxu0 0.0
        %1444 = vmatpush1.msra.mxu0 0.0
        %1445 = vmatprep.subr.mxu0 0.0
        %1446 = vmatpush1.msra.mxu0 0.0
        %1447 = vmatprep.subr.mxu0 0.0
        %1448 = vmatpush1.msra.mxu0 0.0
        %1449 = vmatprep.subr.mxu0 0.0
        %1450 = vmatpush1.msra.mxu0 0.0
        %1451 = vmatprep.subr.mxu0 0.0
        %1452 = vmatpush1.msra.mxu0 0.0
        %1453 = vmatprep.subr.mxu0 0.0
        %1454 = vmatpush1.msra.mxu0 0.0
        %1455 = vmatprep.subr.mxu0 0.0
        %1456 = vmatpush1.msra.mxu0 0.0
        %1457 = vmatprep.subr.mxu0 0.0
        %1458 = vmatpush1.msra.mxu0 0.0
        %1459 = vmatprep.subr.mxu0 0.0
        %1460 = vmatpush1.msra.mxu0 0.0
        %1461 = vmatprep.subr.mxu0 0.0
        %1462 = vmatpush1.msra.mxu0 0.0
        %1463 = vmatprep.subr.mxu0 0.0
        %1464 = vmatpush1.msra.mxu0 0.0
        %1465 = vmatprep.subr.mxu0 0.0
        %1466 = vmatpush1.msra.mxu0 0.0
        %1467 = vmatprep.subr.mxu0 0.0
        %1468 = vmatpush1.msra.mxu0 0.0
        %1469 = vmatprep.subr.mxu0 0.0
        %1470 = vmatpush1.msra.mxu0 0.0
        %1471 = vmatprep.subr.mxu0 0.0
        %1472 = vmatpush1.msra.mxu0 0.0
        %1473 = vmatprep.subr.mxu0 0.0
        %1474 = vmatpush1.msra.mxu0 0.0
        %1475 = vmatprep.subr.mxu0 0.0
        %1476 = vmatpush1.msra.mxu0 0.0
        %1477 = vmatprep.subr.mxu0 0.0
        %1478 = vmatpush1.msra.mxu0 0.0
        %1479 = vmatprep.subr.mxu0 0.0
        %1480 = vmatpush1.msra.mxu0 0.0
        %1481 = vmatprep.subr.mxu0 0.0
        %1482 = vmatpush1.msra.mxu0 0.0
        %1483 = vmatprep.subr.mxu0 0.0
        %1484 = vmatpush1.msra.mxu0 0.0
        %1485 = vmatprep.subr.mxu0 0.0
        %1486 = vmatpush1.msra.mxu0 0.0
        %1487 = vmatprep.subr.mxu0 0.0
        %1488 = vmatpush1.msra.mxu0 0.0
        %1489 = vmatprep.subr.mxu0 0.0
        %1490 = vmatpush1.msra.mxu0 0.0
        %1491 = vmatprep.subr.mxu0 0.0
        %1492 = vmatpush1.msra.mxu0 0.0
        %1493 = vmatprep.subr.mxu0 0.0
        %1494 = vmatpush1.msra.mxu0 0.0
        %1495 = vmatprep.subr.mxu0 0.0
        %1496 = vmatpush1.msra.mxu0 0.0
        %1497 = vmatprep.subr.mxu0 0.0
        %1498 = vmatpush1.msra.mxu0 0.0
        %1499 = vmatprep.subr.mxu0 0.0
        %1500 = vmatpush1.msra.mxu0 0.0
        %1501 = vmatprep.subr.mxu0 0.0
        %1502 = vmatpush1.msra.mxu0 0.0
        %1503 = vmatprep.mubr.f32.mxu0 0.0
        %1504 = vmatmul.mubr.f32.gmra.mrb[0].mxu0 %v1437
        %v1505 = vpop.f32.mrb[0].mxu0
        %v1506 = vadd.f32 0.0, %v1505
        %v1507 = vpop.f32.mrb[0].mxu0
        %v1508 = vadd.f32 0.0, %v1507
        %1509 = vdwg.mxu0
        %v1510 = vadd.f32 %v1432, %v1506
        %v1511 = vadd.f32 %v1433, %v1508
        %s1512 = scalar_lea.vmem [#allocation5], 40
        %v1513 = vld [vmem:[%s1512] sm:$0xff]
        %v1514 = vsel %vm881, %v1346, %v1325
        %v1515 = vsel %vm882, %v1347, %v1326
        %v1516 = vsel %vm883, %v1348, %v1327
        %v1517 = vsel %vm884, %v1349, %v1328
        %v1519 = vsel %vm1059, %v1513, 0
        %1521 = vmatprep.subr.mxu0 %v1515
        %1522 = vmatpush1.msra.mxu0 %v1514
        %1523 = vmatprep.subr.mxu0 %v1517
        %1524 = vmatpush1.msra.mxu0 %v1516
        %1525 = vmatprep.subr.mxu0 0.0
        %1526 = vmatpush1.msra.mxu0 0.0
        %1527 = vmatprep.subr.mxu0 0.0
        %1528 = vmatpush1.msra.mxu0 0.0
        %1529 = vmatprep.subr.mxu0 0.0
        %1530 = vmatpush1.msra.mxu0 0.0
        %1531 = vmatprep.subr.mxu0 0.0
        %1532 = vmatpush1.msra.mxu0 0.0
        %1533 = vmatprep.subr.mxu0 0.0
        %1534 = vmatpush1.msra.mxu0 0.0
        %1535 = vmatprep.subr.mxu0 0.0
        %1536 = vmatpush1.msra.mxu0 0.0
        %1537 = vmatprep.subr.mxu0 0.0
        %1538 = vmatpush1.msra.mxu0 0.0
        %1539 = vmatprep.subr.mxu0 0.0
        %1540 = vmatpush1.msra.mxu0 0.0
        %1541 = vmatprep.subr.mxu0 0.0
        %1542 = vmatpush1.msra.mxu0 0.0
        %1543 = vmatprep.subr.mxu0 0.0
        %1544 = vmatpush1.msra.mxu0 0.0
        %1545 = vmatprep.subr.mxu0 0.0
        %1546 = vmatpush1.msra.mxu0 0.0
        %1547 = vmatprep.subr.mxu0 0.0
        %1548 = vmatpush1.msra.mxu0 0.0
        %1549 = vmatprep.subr.mxu0 0.0
        %1550 = vmatpush1.msra.mxu0 0.0
        %1551 = vmatprep.subr.mxu0 0.0
        %1552 = vmatpush1.msra.mxu0 0.0
        %1553 = vmatprep.subr.mxu0 0.0
        %1554 = vmatpush1.msra.mxu0 0.0
        %1555 = vmatprep.subr.mxu0 0.0
        %1556 = vmatpush1.msra.mxu0 0.0
        %1557 = vmatprep.subr.mxu0 0.0
        %1558 = vmatpush1.msra.mxu0 0.0
        %1559 = vmatprep.subr.mxu0 0.0
        %1560 = vmatpush1.msra.mxu0 0.0
        %1561 = vmatprep.subr.mxu0 0.0
        %1562 = vmatpush1.msra.mxu0 0.0
        %1563 = vmatprep.subr.mxu0 0.0
        %1564 = vmatpush1.msra.mxu0 0.0
        %1565 = vmatprep.subr.mxu0 0.0
        %1566 = vmatpush1.msra.mxu0 0.0
        %1567 = vmatprep.subr.mxu0 0.0
        %1568 = vmatpush1.msra.mxu0 0.0
        %1569 = vmatprep.subr.mxu0 0.0
        %1570 = vmatpush1.msra.mxu0 0.0
        %1571 = vmatprep.subr.mxu0 0.0
        %1572 = vmatpush1.msra.mxu0 0.0
        %1573 = vmatprep.subr.mxu0 0.0
        %1574 = vmatpush1.msra.mxu0 0.0
        %1575 = vmatprep.subr.mxu0 0.0
        %1576 = vmatpush1.msra.mxu0 0.0
        %1577 = vmatprep.subr.mxu0 0.0
        %1578 = vmatpush1.msra.mxu0 0.0
        %1579 = vmatprep.subr.mxu0 0.0
        %1580 = vmatpush1.msra.mxu0 0.0
        %1581 = vmatprep.subr.mxu0 0.0
        %1582 = vmatpush1.msra.mxu0 0.0
        %1583 = vmatprep.subr.mxu0 0.0
        %1584 = vmatpush1.msra.mxu0 0.0
        %1585 = vmatprep.mubr.f32.mxu0 0.0
        %1586 = vmatmul.mubr.f32.gmra.mrb[0].mxu0 %v1519
        %v1587 = vpop.f32.mrb[0].mxu0
        %v1588 = vadd.f32 0.0, %v1587
        %v1589 = vpop.f32.mrb[0].mxu0
        %v1590 = vadd.f32 0.0, %v1589
        %1591 = vdwg.mxu0
        %v1592 = vadd.f32 %v1510, %v1588
        %v1593 = vadd.f32 %v1511, %v1590
        %s1594 = scalar_lea.vmem [#allocation5], 48
        %v1595 = vld [vmem:[%s1594] sm:$0xff]
        %v1596 = vsel %vm899, %v958, %v1016
        %v1597 = vsel %vm900, %v959, %v1017
        %v1598 = vsel %vm901, %v960, %v1018
        %v1599 = vsel %vm902, %v961, %v1019
        %v1601 = vsel %vm1059, %v1595, 0
        %1603 = vmatprep.subr.mxu0 %v1597
        %1604 = vmatpush1.msra.mxu0 %v1596
        %1605 = vmatprep.subr.mxu0 %v1599
        %1606 = vmatpush1.msra.mxu0 %v1598
        %1607 = vmatprep.subr.mxu0 0.0
        %1608 = vmatpush1.msra.mxu0 0.0
        %1609 = vmatprep.subr.mxu0 0.0
        %1610 = vmatpush1.msra.mxu0 0.0
        %1611 = vmatprep.subr.mxu0 0.0
        %1612 = vmatpush1.msra.mxu0 0.0
        %1613 = vmatprep.subr.mxu0 0.0
        %1614 = vmatpush1.msra.mxu0 0.0
        %1615 = vmatprep.subr.mxu0 0.0
        %1616 = vmatpush1.msra.mxu0 0.0
        %1617 = vmatprep.subr.mxu0 0.0
        %1618 = vmatpush1.msra.mxu0 0.0
        %1619 = vmatprep.subr.mxu0 0.0
        %1620 = vmatpush1.msra.mxu0 0.0
        %1621 = vmatprep.subr.mxu0 0.0
        %1622 = vmatpush1.msra.mxu0 0.0
        %1623 = vmatprep.subr.mxu0 0.0
        %1624 = vmatpush1.msra.mxu0 0.0
        %1625 = vmatprep.subr.mxu0 0.0
        %1626 = vmatpush1.msra.mxu0 0.0
        %1627 = vmatprep.subr.mxu0 0.0
        %1628 = vmatpush1.msra.mxu0 0.0
        %1629 = vmatprep.subr.mxu0 0.0
        %1630 = vmatpush1.msra.mxu0 0.0
        %1631 = vmatprep.subr.mxu0 0.0
        %1632 = vmatpush1.msra.mxu0 0.0
        %1633 = vmatprep.subr.mxu0 0.0
        %1634 = vmatpush1.msra.mxu0 0.0
        %1635 = vmatprep.subr.mxu0 0.0
        %1636 = vmatpush1.msra.mxu0 0.0
        %1637 = vmatprep.subr.mxu0 0.0
        %1638 = vmatpush1.msra.mxu0 0.0
        %1639 = vmatprep.subr.mxu0 0.0
        %1640 = vmatpush1.msra.mxu0 0.0
        %1641 = vmatprep.subr.mxu0 0.0
        %1642 = vmatpush1.msra.mxu0 0.0
        %1643 = vmatprep.subr.mxu0 0.0
        %1644 = vmatpush1.msra.mxu0 0.0
        %1645 = vmatprep.subr.mxu0 0.0
        %1646 = vmatpush1.msra.mxu0 0.0
        %1647 = vmatprep.subr.mxu0 0.0
        %1648 = vmatpush1.msra.mxu0 0.0
        %1649 = vmatprep.subr.mxu0 0.0
        %1650 = vmatpush1.msra.mxu0 0.0
        %1651 = vmatprep.subr.mxu0 0.0
        %1652 = vmatpush1.msra.mxu0 0.0
        %1653 = vmatprep.subr.mxu0 0.0
        %1654 = vmatpush1.msra.mxu0 0.0
        %1655 = vmatprep.subr.mxu0 0.0
        %1656 = vmatpush1.msra.mxu0 0.0
        %1657 = vmatprep.subr.mxu0 0.0
        %1658 = vmatpush1.msra.mxu0 0.0
        %1659 = vmatprep.subr.mxu0 0.0
        %1660 = vmatpush1.msra.mxu0 0.0
        %1661 = vmatprep.subr.mxu0 0.0
        %1662 = vmatpush1.msra.mxu0 0.0
        %1663 = vmatprep.subr.mxu0 0.0
        %1664 = vmatpush1.msra.mxu0 0.0
        %1665 = vmatprep.subr.mxu0 0.0
        %1666 = vmatpush1.msra.mxu0 0.0
        %1667 = vmatprep.mubr.f32.mxu0 0.0
        %1668 = vmatmul.mubr.f32.gmra.mrb[0].mxu0 %v1601
        %v1669 = vpop.f32.mrb[0].mxu0
        %v1670 = vadd.f32 0.0, %v1669
        %v1671 = vpop.f32.mrb[0].mxu0
        %v1672 = vadd.f32 0.0, %v1671
        %1673 = vdwg.mxu0
        %v1674 = vadd.f32 %v1592, %v1670
        %v1675 = vadd.f32 %v1593, %v1672
        %s1676 = scalar_lea.vmem [#allocation5], 56
        %v1677 = vld [vmem:[%s1676] sm:$0xff]
        %v1678 = vsel %vm899, %v1060, %v1039
        %v1679 = vsel %vm900, %v1061, %v1040
        %v1680 = vsel %vm901, %v1062, %v1041
        %v1681 = vsel %vm902, %v1063, %v1042
        %v1683 = vsel %vm1059, %v1677, 0
        %1685 = vmatprep.subr.mxu0 %v1679
        %1686 = vmatpush1.msra.mxu0 %v1678
        %1687 = vmatprep.subr.mxu0 %v1681
        %1688 = vmatpush1.msra.mxu0 %v1680
        %1689 = vmatprep.subr.mxu0 0.0
        %1690 = vmatpush1.msra.mxu0 0.0
        %1691 = vmatprep.subr.mxu0 0.0
        %1692 = vmatpush1.msra.mxu0 0.0
        %1693 = vmatprep.subr.mxu0 0.0
        %1694 = vmatpush1.msra.mxu0 0.0
        %1695 = vmatprep.subr.mxu0 0.0
        %1696 = vmatpush1.msra.mxu0 0.0
        %1697 = vmatprep.subr.mxu0 0.0
        %1698 = vmatpush1.msra.mxu0 0.0
        %1699 = vmatprep.subr.mxu0 0.0
        %1700 = vmatpush1.msra.mxu0 0.0
        %1701 = vmatprep.subr.mxu0 0.0
        %1702 = vmatpush1.msra.mxu0 0.0
        %1703 = vmatprep.subr.mxu0 0.0
        %1704 = vmatpush1.msra.mxu0 0.0
        %1705 = vmatprep.subr.mxu0 0.0
        %1706 = vmatpush1.msra.mxu0 0.0
        %1707 = vmatprep.subr.mxu0 0.0
        %1708 = vmatpush1.msra.mxu0 0.0
        %1709 = vmatprep.subr.mxu0 0.0
        %1710 = vmatpush1.msra.mxu0 0.0
        %1711 = vmatprep.subr.mxu0 0.0
        %1712 = vmatpush1.msra.mxu0 0.0
        %1713 = vmatprep.subr.mxu0 0.0
        %1714 = vmatpush1.msra.mxu0 0.0
        %1715 = vmatprep.subr.mxu0 0.0
        %1716 = vmatpush1.msra.mxu0 0.0
        %1717 = vmatprep.subr.mxu0 0.0
        %1718 = vmatpush1.msra.mxu0 0.0
        %1719 = vmatprep.subr.mxu0 0.0
        %1720 = vmatpush1.msra.mxu0 0.0
        %1721 = vmatprep.subr.mxu0 0.0
        %1722 = vmatpush1.msra.mxu0 0.0
        %1723 = vmatprep.subr.mxu0 0.0
        %1724 = vmatpush1.msra.mxu0 0.0
        %1725 = vmatprep.subr.mxu0 0.0
        %1726 = vmatpush1.msra.mxu0 0.0
        %1727 = vmatprep.subr.mxu0 0.0
        %1728 = vmatpush1.msra.mxu0 0.0
        %1729 = vmatprep.subr.mxu0 0.0
        %1730 = vmatpush1.msra.mxu0 0.0
        %1731 = vmatprep.subr.mxu0 0.0
        %1732 = vmatpush1.msra.mxu0 0.0
        %1733 = vmatprep.subr.mxu0 0.0
        %1734 = vmatpush1.msra.mxu0 0.0
        %1735 = vmatprep.subr.mxu0 0.0
        %1736 = vmatpush1.msra.mxu0 0.0
        %1737 = vmatprep.subr.mxu0 0.0
        %1738 = vmatpush1.msra.mxu0 0.0
        %1739 = vmatprep.subr.mxu0 0.0
        %1740 = vmatpush1.msra.mxu0 0.0
        %1741 = vmatprep.subr.mxu0 0.0
        %1742 = vmatpush1.msra.mxu0 0.0
        %1743 = vmatprep.subr.mxu0 0.0
        %1744 = vmatpush1.msra.mxu0 0.0
        %1745 = vmatprep.subr.mxu0 0.0
        %1746 = vmatpush1.msra.mxu0 0.0
        %1747 = vmatprep.subr.mxu0 0.0
        %1748 = vmatpush1.msra.mxu0 0.0
        %1749 = vmatprep.mubr.f32.mxu0 0.0
        %1750 = vmatmul.mubr.f32.gmra.mrb[0].mxu0 %v1683
        %v1751 = vpop.f32.mrb[0].mxu0
        %v1752 = vadd.f32 0.0, %v1751
        %v1753 = vpop.f32.mrb[0].mxu0
        %v1754 = vadd.f32 0.0, %v1753
        %1755 = vdwg.mxu0
        %v1756 = vadd.f32 %v1674, %v1752
        %v1757 = vadd.f32 %v1675, %v1754
        %s1758 = scalar_lea.vmem [#allocation5], 64
        %v1759 = vld [vmem:[%s1758] sm:$0xff]
        %v1760 = vsel %vm899, %v1222, %v1226
        %v1761 = vsel %vm900, %v1223, %v1227
        %v1762 = vsel %vm901, %v1224, %v1228
        %v1763 = vsel %vm902, %v1225, %v1229
        %v1765 = vsel %vm1059, %v1759, 0
        %1767 = vmatprep.subr.mxu0 %v1761
        %1768 = vmatpush1.msra.mxu0 %v1760
        %1769 = vmatprep.subr.mxu0 %v1763
        %1770 = vmatpush1.msra.mxu0 %v1762
        %1771 = vmatprep.subr.mxu0 0.0
        %1772 = vmatpush1.msra.mxu0 0.0
        %1773 = vmatprep.subr.mxu0 0.0
        %1774 = vmatpush1.msra.mxu0 0.0
        %1775 = vmatprep.subr.mxu0 0.0
        %1776 = vmatpush1.msra.mxu0 0.0
        %1777 = vmatprep.subr.mxu0 0.0
        %1778 = vmatpush1.msra.mxu0 0.0
        %1779 = vmatprep.subr.mxu0 0.0
        %1780 = vmatpush1.msra.mxu0 0.0
        %1781 = vmatprep.subr.mxu0 0.0
        %1782 = vmatpush1.msra.mxu0 0.0
        %1783 = vmatprep.subr.mxu0 0.0
        %1784 = vmatpush1.msra.mxu0 0.0
        %1785 = vmatprep.subr.mxu0 0.0
        %1786 = vmatpush1.msra.mxu0 0.0
        %1787 = vmatprep.subr.mxu0 0.0
        %1788 = vmatpush1.msra.mxu0 0.0
        %1789 = vmatprep.subr.mxu0 0.0
        %1790 = vmatpush1.msra.mxu0 0.0
        %1791 = vmatprep.subr.mxu0 0.0
        %1792 = vmatpush1.msra.mxu0 0.0
        %1793 = vmatprep.subr.mxu0 0.0
        %1794 = vmatpush1.msra.mxu0 0.0
        %1795 = vmatprep.subr.mxu0 0.0
        %1796 = vmatpush1.msra.mxu0 0.0
        %1797 = vmatprep.subr.mxu0 0.0
        %1798 = vmatpush1.msra.mxu0 0.0
        %1799 = vmatprep.subr.mxu0 0.0
        %1800 = vmatpush1.msra.mxu0 0.0
        %1801 = vmatprep.subr.mxu0 0.0
        %1802 = vmatpush1.msra.mxu0 0.0
        %1803 = vmatprep.subr.mxu0 0.0
        %1804 = vmatpush1.msra.mxu0 0.0
        %1805 = vmatprep.subr.mxu0 0.0
        %1806 = vmatpush1.msra.mxu0 0.0
        %1807 = vmatprep.subr.mxu0 0.0
        %1808 = vmatpush1.msra.mxu0 0.0
        %1809 = vmatprep.subr.mxu0 0.0
        %1810 = vmatpush1.msra.mxu0 0.0
        %1811 = vmatprep.subr.mxu0 0.0
        %1812 = vmatpush1.msra.mxu0 0.0
        %1813 = vmatprep.subr.mxu0 0.0
        %1814 = vmatpush1.msra.mxu0 0.0
        %1815 = vmatprep.subr.mxu0 0.0
        %1816 = vmatpush1.msra.mxu0 0.0
        %1817 = vmatprep.subr.mxu0 0.0
        %1818 = vmatpush1.msra.mxu0 0.0
        %1819 = vmatprep.subr.mxu0 0.0
        %1820 = vmatpush1.msra.mxu0 0.0
        %1821 = vmatprep.subr.mxu0 0.0
        %1822 = vmatpush1.msra.mxu0 0.0
        %1823 = vmatprep.subr.mxu0 0.0
        %1824 = vmatpush1.msra.mxu0 0.0
        %1825 = vmatprep.subr.mxu0 0.0
        %1826 = vmatpush1.msra.mxu0 0.0
        %1827 = vmatprep.subr.mxu0 0.0
        %1828 = vmatpush1.msra.mxu0 0.0
        %1829 = vmatprep.subr.mxu0 0.0
        %1830 = vmatpush1.msra.mxu0 0.0
        %1831 = vmatprep.mubr.f32.mxu0 0.0
        %1832 = vmatmul.mubr.f32.gmra.mrb[0].mxu0 %v1765
        %v1833 = vpop.f32.mrb[0].mxu0
        %v1834 = vadd.f32 0.0, %v1833
        %v1835 = vpop.f32.mrb[0].mxu0
        %v1836 = vadd.f32 0.0, %v1835
        %1837 = vdwg.mxu0
        %v1838 = vadd.f32 %v1756, %v1834
        %v1839 = vadd.f32 %v1757, %v1836
        %v1840 = vadd.f32 %v1838, %v1839
        %1841 = vadd.xlane.f32.xlu0 %v1840
        %v1842 = vpop.xlane.xlu0 %1841
        %v1843 = vrcp.pop 256.0
        %v1844 = vmul.f32 %v1842, %v1843
        %v1845 = vsub.f32 %v1838, %v1844
        %v1846 = vsub.f32 %v1839, %v1844
        %v1847 = vmul.f32 %v1845, %v1845
        %v1848 = vmul.f32 %v1846, %v1846
        %v1849 = vadd.f32 %v1847, %v1848
        %1850 = vadd.xlane.f32.xlu0 %v1849
        %v1851 = vpop.xlane.xlu0 %1850
        %v1852 = vmul.f32 %v1851, %v1843
        %v1853 = vadd.f32 %v1852, 1e-05
        %v1854 = vrsqrt.pop %v1853
        %v1855 = vmul.f32 %v1845, %v1854
        %v1856 = vmul.f32 %v1846, %v1854
        %v1857 = vmax.f32 %v1855, 0.0
        %v1858 = vmax.f32 %v1856, 0.0
        %1859 = vst [vmem:[#allocation2 + $0x8] sm:$0xff] %v1857
        %1860 = vst [vmem:[#allocation2 + $0x10] sm:$0xff] %v1858
        %v1861 = vld [vmem:[#allocation3] sm:$0xff]
        %v1862 = vld [vmem:[#allocation3 + $0x8] sm:$0xff]
        %vm1863 = vcmp.gt.f32.partialorder %v1861, 0.5
        %vm1864 = vcmp.gt.f32.partialorder %v1862, 0.5
        %v1865 = vld [vmem:[%s876] sm:$0xff]
        %v1866 = vld [vmem:[%s876 + $0x8] sm:$0xff]
        %vm1867 = vcmp.gt.f32.partialorder %v1865, 0.5
        %vm1868 = vcmp.gt.f32.partialorder %v1866, 0.5
        %v1869 = vld [vmem:[%s885] sm:$0xff]
        %v1870 = vld [vmem:[%s885 + $0x8] sm:$0xff]
        %vm1871 = vcmp.gt.f32.partialorder %v1869, 0.5
        %vm1872 = vcmp.gt.f32.partialorder %v1870, 0.5
        %v1873 = vld [vmem:[%s894] sm:$0xff]
        %v1874 = vld [vmem:[%s894 + $0x8] sm:$0xff]
        %vm1875 = vcmp.gt.f32.partialorder %v1873, 0.5
        %vm1876 = vcmp.gt.f32.partialorder %v1874, 0.5
        %v1877 = vld [vmem:[#allocation7] sm:$0xff]
        %v1878 = vld [vmem:[#allocation2] sm:$0xff]
        %v1879 = vld [vmem:[#allocation2 + $0x8] sm:$0xff]
        %v1880 = vld [vmem:[#allocation2 + $0x10] sm:$0xff]
        %1884 = vrot.lane.b32.xlu0 %v1878, 15
        %v1885 = vpop.permute.xlu0 %1884
        %1886 = vrot.lane.b32.xlu0 %v1879, 15
        %v1887 = vpop.permute.xlu0 %1886
        %1888 = vrot.lane.b32.xlu0 %v1880, 15
        %v1889 = vpop.permute.xlu0 %1888
        %v1890 = vsel %vm928, %v1885, %v1887
        %v1891 = vsel %vm928, %v1887, %v1889
        %1894 = vrot.lane.b32.xlu0 %v1878, 17
        %v1895 = vpop.permute.xlu0 %1894
        %1896 = vrot.lane.b32.xlu0 %v1879, 17
        %v1897 = vpop.permute.xlu0 %1896
        %1898 = vrot.lane.b32.xlu0 %v1880, 17
        %v1899 = vpop.permute.xlu0 %1898
        %v1900 = vsel %vm949, %v1895, %v1897
        %v1901 = vsel %vm949, %v1897, %v1899
        %v1904 = vsel %vm1863, %v1890, %v1900
        %v1905 = vsel %vm1864, %v1891, %v1901
        %v1906 = vld [vmem:[#allocation2 + $0x18] sm:$0xff]
        %1908 = vrot.lane.b32.xlu0 %v1879, 111
        %v1909 = vpop.permute.xlu0 %1908
        %1910 = vrot.lane.b32.xlu0 %v1880, 111
        %v1911 = vpop.permute.xlu0 %1910
        %1912 = vrot.lane.b32.xlu0 %v1906, 111
        %v1913 = vpop.permute.xlu0 %1912
        %v1914 = vsel %vm986, %v1909, %v1911
        %v1915 = vsel %vm986, %v1911, %v1913
        %1918 = vrot.lane.b32.xlu0 %v1879, 113
        %v1919 = vpop.permute.xlu0 %1918
        %1920 = vrot.lane.b32.xlu0 %v1880, 113
        %v1921 = vpop.permute.xlu0 %1920
        %1922 = vrot.lane.b32.xlu0 %v1906, 113
        %v1923 = vpop.permute.xlu0 %1922
        %v1924 = vsel %vm1007, %v1919, %v1921
        %v1925 = vsel %vm1007, %v1921, %v1923
        %v1928 = vsel %vm1863, %v1914, %v1924
        %v1929 = vsel %vm1864, %v1915, %v1925
        %v1930 = vsel %vm1871, %v1928, %v1904
        %v1931 = vsel %vm1872, %v1929, %v1905
        %s1932 = scalar_lea.vmem [#allocation7], 8
        %v1933 = vld [vmem:[%s1932] sm:$0xff]
        %1934 = vrot.lane.b32.xlu0 %v1879, 112
        %v1935 = vpop.permute.xlu0 %1934
        %1936 = vrot.lane.b32.xlu0 %v1880, 112
        %v1937 = vpop.permute.xlu0 %1936
        %1938 = vrot.lane.b32.xlu0 %v1906, 112
        %v1939 = vpop.permute.xlu0 %1938
        %v1940 = vsel %vm1038, %v1935, %v1937
        %v1941 = vsel %vm1038, %v1937, %v1939
        %1944 = vrot.lane.b32.xlu0 %v1878, 16
        %v1945 = vpop.permute.xlu0 %1944
        %1946 = vrot.lane.b32.xlu0 %v1879, 16
        %v1947 = vpop.permute.xlu0 %1946
        %1948 = vrot.lane.b32.xlu0 %v1880, 16
        %v1949 = vpop.permute.xlu0 %1948
        %v1950 = vsel %vm1059, %v1945, %v1947
        %v1951 = vsel %vm1059, %v1947, %v1949
        %v1954 = vsel %vm1871, %v1940, %v1950
        %v1955 = vsel %vm1872, %v1941, %v1951
        %v1957 = vsel %vm396, %v1933, 0
        %1959 = vmatprep.subr.mxu0 %v1955
        %1960 = vmatpush1.msra.mxu0 %v1954
        %1961 = vmatprep.subr.mxu0 0.0
        %1962 = vmatpush1.msra.mxu0 0.0
        %1963 = vmatprep.subr.mxu0 0.0
        %1964 = vmatpush1.msra.mxu0 0.0
        %1965 = vmatprep.subr.mxu0 0.0
        %1966 = vmatpush1.msra.mxu0 0.0
        %1967 = vmatprep.subr.mxu0 0.0
        %1968 = vmatpush1.msra.mxu0 0.0
        %1969 = vmatprep.subr.mxu0 0.0
        %1970 = vmatpush1.msra.mxu0 0.0
        %1971 = vmatprep.subr.mxu0 0.0
        %1972 = vmatpush1.msra.mxu0 0.0
        %1973 = vmatprep.subr.mxu0 0.0
        %1974 = vmatpush1.msra.mxu0 0.0
        %1975 = vmatprep.subr.mxu0 0.0
        %1976 = vmatpush1.msra.mxu0 0.0
        %1977 = vmatprep.subr.mxu0 0.0
        %1978 = vmatpush1.msra.mxu0 0.0
        %1979 = vmatprep.subr.mxu0 0.0
        %1980 = vmatpush1.msra.mxu0 0.0
        %1981 = vmatprep.subr.mxu0 0.0
        %1982 = vmatpush1.msra.mxu0 0.0
        %1983 = vmatprep.subr.mxu0 0.0
        %1984 = vmatpush1.msra.mxu0 0.0
        %1985 = vmatprep.subr.mxu0 0.0
        %1986 = vmatpush1.msra.mxu0 0.0
        %1987 = vmatprep.subr.mxu0 0.0
        %1988 = vmatpush1.msra.mxu0 0.0
        %1989 = vmatprep.subr.mxu0 0.0
        %1990 = vmatpush1.msra.mxu0 0.0
        %1991 = vmatprep.subr.mxu0 0.0
        %1992 = vmatpush1.msra.mxu0 0.0
        %1993 = vmatprep.subr.mxu0 0.0
        %1994 = vmatpush1.msra.mxu0 0.0
        %1995 = vmatprep.subr.mxu0 0.0
        %1996 = vmatpush1.msra.mxu0 0.0
        %1997 = vmatprep.subr.mxu0 0.0
        %1998 = vmatpush1.msra.mxu0 0.0
        %1999 = vmatprep.subr.mxu0 0.0
        %2000 = vmatpush1.msra.mxu0 0.0
        %2001 = vmatprep.subr.mxu0 0.0
        %2002 = vmatpush1.msra.mxu0 0.0
        %2003 = vmatprep.subr.mxu0 0.0
        %2004 = vmatpush1.msra.mxu0 0.0
        %2005 = vmatprep.subr.mxu0 0.0
        %2006 = vmatpush1.msra.mxu0 0.0
        %2007 = vmatprep.subr.mxu0 0.0
        %2008 = vmatpush1.msra.mxu0 0.0
        %2009 = vmatprep.subr.mxu0 0.0
        %2010 = vmatpush1.msra.mxu0 0.0
        %2011 = vmatprep.subr.mxu0 0.0
        %2012 = vmatpush1.msra.mxu0 0.0
        %2013 = vmatprep.subr.mxu0 0.0
        %2014 = vmatpush1.msra.mxu0 0.0
        %2015 = vmatprep.subr.mxu0 0.0
        %2016 = vmatpush1.msra.mxu0 0.0
        %2017 = vmatprep.subr.mxu0 0.0
        %2018 = vmatpush1.msra.mxu0 0.0
        %2019 = vmatprep.subr.mxu0 0.0
        %2020 = vmatpush1.msra.mxu0 0.0
        %2021 = vmatprep.subr.mxu0 0.0
        %2022 = vmatpush1.msra.mxu0 0.0
        %2023 = vmatprep.mubr.f32.mxu0 0.0
        %2024 = vmatmul.mubr.f32.gmra.mrb[0].mxu0 %v1957
        %v2025 = vpop.f32.mrb[0].mxu0
        %v2026 = vadd.f32 0.0, %v2025
        %v2027 = vpop.f32.mrb[0].mxu0
        %v2028 = vadd.f32 0.0, %v2027
        %2029 = vdwg.mxu0
        %v2031 = vsel %vm396, %v1877, 0
        %2033 = vmatprep.subr.mxu0 %v1931
        %2034 = vmatpush1.msra.mxu0 %v1930
        %2035 = vmatprep.subr.mxu0 0.0
        %2036 = vmatpush1.msra.mxu0 0.0
        %2037 = vmatprep.subr.mxu0 0.0
        %2038 = vmatpush1.msra.mxu0 0.0
        %2039 = vmatprep.subr.mxu0 0.0
        %2040 = vmatpush1.msra.mxu0 0.0
        %2041 = vmatprep.subr.mxu0 0.0
        %2042 = vmatpush1.msra.mxu0 0.0
        %2043 = vmatprep.subr.mxu0 0.0
        %2044 = vmatpush1.msra.mxu0 0.0
        %2045 = vmatprep.subr.mxu0 0.0
        %2046 = vmatpush1.msra.mxu0 0.0
        %2047 = vmatprep.subr.mxu0 0.0
        %2048 = vmatpush1.msra.mxu0 0.0
        %2049 = vmatprep.subr.mxu0 0.0
        %2050 = vmatpush1.msra.mxu0 0.0
        %2051 = vmatprep.subr.mxu0 0.0
        %2052 = vmatpush1.msra.mxu0 0.0
        %2053 = vmatprep.subr.mxu0 0.0
        %2054 = vmatpush1.msra.mxu0 0.0
        %2055 = vmatprep.subr.mxu0 0.0
        %2056 = vmatpush1.msra.mxu0 0.0
        %2057 = vmatprep.subr.mxu0 0.0
        %2058 = vmatpush1.msra.mxu0 0.0
        %2059 = vmatprep.subr.mxu0 0.0
        %2060 = vmatpush1.msra.mxu0 0.0
        %2061 = vmatprep.subr.mxu0 0.0
        %2062 = vmatpush1.msra.mxu0 0.0
        %2063 = vmatprep.subr.mxu0 0.0
        %2064 = vmatpush1.msra.mxu0 0.0
        %2065 = vmatprep.subr.mxu0 0.0
        %2066 = vmatpush1.msra.mxu0 0.0
        %2067 = vmatprep.subr.mxu0 0.0
        %2068 = vmatpush1.msra.mxu0 0.0
        %2069 = vmatprep.subr.mxu0 0.0
        %2070 = vmatpush1.msra.mxu0 0.0
        %2071 = vmatprep.subr.mxu0 0.0
        %2072 = vmatpush1.msra.mxu0 0.0
        %2073 = vmatprep.subr.mxu0 0.0
        %2074 = vmatpush1.msra.mxu0 0.0
        %2075 = vmatprep.subr.mxu0 0.0
        %2076 = vmatpush1.msra.mxu0 0.0
        %2077 = vmatprep.subr.mxu0 0.0
        %2078 = vmatpush1.msra.mxu0 0.0
        %2079 = vmatprep.subr.mxu0 0.0
        %2080 = vmatpush1.msra.mxu0 0.0
        %2081 = vmatprep.subr.mxu0 0.0
        %2082 = vmatpush1.msra.mxu0 0.0
        %2083 = vmatprep.subr.mxu0 0.0
        %2084 = vmatpush1.msra.mxu0 0.0
        %2085 = vmatprep.subr.mxu0 0.0
        %2086 = vmatpush1.msra.mxu0 0.0
        %2087 = vmatprep.subr.mxu0 0.0
        %2088 = vmatpush1.msra.mxu0 0.0
        %2089 = vmatprep.subr.mxu0 0.0
        %2090 = vmatpush1.msra.mxu0 0.0
        %2091 = vmatprep.subr.mxu0 0.0
        %2092 = vmatpush1.msra.mxu0 0.0
        %2093 = vmatprep.subr.mxu0 0.0
        %2094 = vmatpush1.msra.mxu0 0.0
        %2095 = vmatprep.subr.mxu0 0.0
        %2096 = vmatpush1.msra.mxu0 0.0
        %2097 = vmatprep.mubr.f32.mxu0 0.0
        %2098 = vmatmul.mubr.f32.gmra.mrb[0].mxu0 %v2031
        %v2099 = vpop.f32.mrb[0].mxu0
        %v2100 = vadd.f32 %v2026, %v2099
        %v2101 = vpop.f32.mrb[0].mxu0
        %v2102 = vadd.f32 %v2028, %v2101
        %2103 = vdwg.mxu0
        %s2104 = scalar_lea.vmem [#allocation7], 16
        %v2105 = vld [vmem:[%s2104] sm:$0xff]
        %v2106 = vsel %vm1867, %v1900, %v1890
        %v2107 = vsel %vm1868, %v1901, %v1891
        %v2108 = vsel %vm1867, %v1924, %v1914
        %v2109 = vsel %vm1868, %v1925, %v1915
        %v2110 = vsel %vm1871, %v2108, %v2106
        %v2111 = vsel %vm1872, %v2109, %v2107
        %v2113 = vsel %vm396, %v2105, 0
        %2115 = vmatprep.subr.mxu0 %v2111
        %2116 = vmatpush1.msra.mxu0 %v2110
        %2117 = vmatprep.subr.mxu0 0.0
        %2118 = vmatpush1.msra.mxu0 0.0
        %2119 = vmatprep.subr.mxu0 0.0
        %2120 = vmatpush1.msra.mxu0 0.0
        %2121 = vmatprep.subr.mxu0 0.0
        %2122 = vmatpush1.msra.mxu0 0.0
        %2123 = vmatprep.subr.mxu0 0.0
        %2124 = vmatpush1.msra.mxu0 0.0
        %2125 = vmatprep.subr.mxu0 0.0
        %2126 = vmatpush1.msra.mxu0 0.0
        %2127 = vmatprep.subr.mxu0 0.0
        %2128 = vmatpush1.msra.mxu0 0.0
        %2129 = vmatprep.subr.mxu0 0.0
        %2130 = vmatpush1.msra.mxu0 0.0
        %2131 = vmatprep.subr.mxu0 0.0
        %2132 = vmatpush1.msra.mxu0 0.0
        %2133 = vmatprep.subr.mxu0 0.0
        %2134 = vmatpush1.msra.mxu0 0.0
        %2135 = vmatprep.subr.mxu0 0.0
        %2136 = vmatpush1.msra.mxu0 0.0
        %2137 = vmatprep.subr.mxu0 0.0
        %2138 = vmatpush1.msra.mxu0 0.0
        %2139 = vmatprep.subr.mxu0 0.0
        %2140 = vmatpush1.msra.mxu0 0.0
        %2141 = vmatprep.subr.mxu0 0.0
        %2142 = vmatpush1.msra.mxu0 0.0
        %2143 = vmatprep.subr.mxu0 0.0
        %2144 = vmatpush1.msra.mxu0 0.0
        %2145 = vmatprep.subr.mxu0 0.0
        %2146 = vmatpush1.msra.mxu0 0.0
        %2147 = vmatprep.subr.mxu0 0.0
        %2148 = vmatpush1.msra.mxu0 0.0
        %2149 = vmatprep.subr.mxu0 0.0
        %2150 = vmatpush1.msra.mxu0 0.0
        %2151 = vmatprep.subr.mxu0 0.0
        %2152 = vmatpush1.msra.mxu0 0.0
        %2153 = vmatprep.subr.mxu0 0.0
        %2154 = vmatpush1.msra.mxu0 0.0
        %2155 = vmatprep.subr.mxu0 0.0
        %2156 = vmatpush1.msra.mxu0 0.0
        %2157 = vmatprep.subr.mxu0 0.0
        %2158 = vmatpush1.msra.mxu0 0.0
        %2159 = vmatprep.subr.mxu0 0.0
        %2160 = vmatpush1.msra.mxu0 0.0
        %2161 = vmatprep.subr.mxu0 0.0
        %2162 = vmatpush1.msra.mxu0 0.0
        %2163 = vmatprep.subr.mxu0 0.0
        %2164 = vmatpush1.msra.mxu0 0.0
        %2165 = vmatprep.subr.mxu0 0.0
        %2166 = vmatpush1.msra.mxu0 0.0
        %2167 = vmatprep.subr.mxu0 0.0
        %2168 = vmatpush1.msra.mxu0 0.0
        %2169 = vmatprep.subr.mxu0 0.0
        %2170 = vmatpush1.msra.mxu0 0.0
        %2171 = vmatprep.subr.mxu0 0.0
        %2172 = vmatpush1.msra.mxu0 0.0
        %2173 = vmatprep.subr.mxu0 0.0
        %2174 = vmatpush1.msra.mxu0 0.0
        %2175 = vmatprep.subr.mxu0 0.0
        %2176 = vmatpush1.msra.mxu0 0.0
        %2177 = vmatprep.subr.mxu0 0.0
        %2178 = vmatpush1.msra.mxu0 0.0
        %2179 = vmatprep.mubr.f32.mxu0 0.0
        %2180 = vmatmul.mubr.f32.gmra.mrb[0].mxu0 %v2113
        %v2181 = vpop.f32.mrb[0].mxu0
        %v2182 = vadd.f32 0.0, %v2181
        %v2183 = vpop.f32.mrb[0].mxu0
        %v2184 = vadd.f32 0.0, %v2183
        %2185 = vdwg.mxu0
        %v2186 = vadd.f32 %v2100, %v2182
        %v2187 = vadd.f32 %v2102, %v2184
        %s2188 = scalar_lea.vmem [#allocation7], 24
        %v2189 = vld [vmem:[%s2188] sm:$0xff]
        %2190 = vrot.lane.b32.xlu0 %v1879, 127
        %v2191 = vpop.permute.xlu0 %2190
        %2192 = vrot.lane.b32.xlu0 %v1880, 127
        %v2193 = vpop.permute.xlu0 %2192
        %2194 = vrot.lane.b32.xlu0 %v1906, 127
        %v2195 = vpop.permute.xlu0 %2194
        %v2196 = vsel %vm1324, %v2191, %v2193
        %v2197 = vsel %vm1324, %v2193, %v2195
        %2200 = vrot.lane.b32.xlu0 %v1878, 1
        %v2201 = vpop.permute.xlu0 %2200
        %2202 = vrot.lane.b32.xlu0 %v1879, 1
        %v2203 = vpop.permute.xlu0 %2202
        %2204 = vrot.lane.b32.xlu0 %v1880, 1
        %v2205 = vpop.permute.xlu0 %2204
        %v2206 = vsel %vm1345, %v2201, %v2203
        %v2207 = vsel %vm1345, %v2203, %v2205
        %v2210 = vsel %vm1863, %v2196, %v2206
        %v2211 = vsel %vm1864, %v2197, %v2207
        %v2213 = vsel %vm396, %v2189, 0
        %2215 = vmatprep.subr.mxu0 %v2211
        %2216 = vmatpush1.msra.mxu0 %v2210
        %2217 = vmatprep.subr.mxu0 0.0
        %2218 = vmatpush1.msra.mxu0 0.0
        %2219 = vmatprep.subr.mxu0 0.0
        %2220 = vmatpush1.msra.mxu0 0.0
        %2221 = vmatprep.subr.mxu0 0.0
        %2222 = vmatpush1.msra.mxu0 0.0
        %2223 = vmatprep.subr.mxu0 0.0
        %2224 = vmatpush1.msra.mxu0 0.0
        %2225 = vmatprep.subr.mxu0 0.0
        %2226 = vmatpush1.msra.mxu0 0.0
        %2227 = vmatprep.subr.mxu0 0.0
        %2228 = vmatpush1.msra.mxu0 0.0
        %2229 = vmatprep.subr.mxu0 0.0
        %2230 = vmatpush1.msra.mxu0 0.0
        %2231 = vmatprep.subr.mxu0 0.0
        %2232 = vmatpush1.msra.mxu0 0.0
        %2233 = vmatprep.subr.mxu0 0.0
        %2234 = vmatpush1.msra.mxu0 0.0
        %2235 = vmatprep.subr.mxu0 0.0
        %2236 = vmatpush1.msra.mxu0 0.0
        %2237 = vmatprep.subr.mxu0 0.0
        %2238 = vmatpush1.msra.mxu0 0.0
        %2239 = vmatprep.subr.mxu0 0.0
        %2240 = vmatpush1.msra.mxu0 0.0
        %2241 = vmatprep.subr.mxu0 0.0
        %2242 = vmatpush1.msra.mxu0 0.0
        %2243 = vmatprep.subr.mxu0 0.0
        %2244 = vmatpush1.msra.mxu0 0.0
        %2245 = vmatprep.subr.mxu0 0.0
        %2246 = vmatpush1.msra.mxu0 0.0
        %2247 = vmatprep.subr.mxu0 0.0
        %2248 = vmatpush1.msra.mxu0 0.0
        %2249 = vmatprep.subr.mxu0 0.0
        %2250 = vmatpush1.msra.mxu0 0.0
        %2251 = vmatprep.subr.mxu0 0.0
        %2252 = vmatpush1.msra.mxu0 0.0
        %2253 = vmatprep.subr.mxu0 0.0
        %2254 = vmatpush1.msra.mxu0 0.0
        %2255 = vmatprep.subr.mxu0 0.0
        %2256 = vmatpush1.msra.mxu0 0.0
        %2257 = vmatprep.subr.mxu0 0.0
        %2258 = vmatpush1.msra.mxu0 0.0
        %2259 = vmatprep.subr.mxu0 0.0
        %2260 = vmatpush1.msra.mxu0 0.0
        %2261 = vmatprep.subr.mxu0 0.0
        %2262 = vmatpush1.msra.mxu0 0.0
        %2263 = vmatprep.subr.mxu0 0.0
        %2264 = vmatpush1.msra.mxu0 0.0
        %2265 = vmatprep.subr.mxu0 0.0
        %2266 = vmatpush1.msra.mxu0 0.0
        %2267 = vmatprep.subr.mxu0 0.0
        %2268 = vmatpush1.msra.mxu0 0.0
        %2269 = vmatprep.subr.mxu0 0.0
        %2270 = vmatpush1.msra.mxu0 0.0
        %2271 = vmatprep.subr.mxu0 0.0
        %2272 = vmatpush1.msra.mxu0 0.0
        %2273 = vmatprep.subr.mxu0 0.0
        %2274 = vmatpush1.msra.mxu0 0.0
        %2275 = vmatprep.subr.mxu0 0.0
        %2276 = vmatpush1.msra.mxu0 0.0
        %2277 = vmatprep.subr.mxu0 0.0
        %2278 = vmatpush1.msra.mxu0 0.0
        %2279 = vmatprep.mubr.f32.mxu0 0.0
        %2280 = vmatmul.mubr.f32.gmra.mrb[0].mxu0 %v2213
        %v2281 = vpop.f32.mrb[0].mxu0
        %v2282 = vadd.f32 0.0, %v2281
        %v2283 = vpop.f32.mrb[0].mxu0
        %v2284 = vadd.f32 0.0, %v2283
        %2285 = vdwg.mxu0
        %v2286 = vadd.f32 %v2186, %v2282
        %v2287 = vadd.f32 %v2187, %v2284
        %s2288 = scalar_lea.vmem [#allocation7], 32
        %v2289 = vld [vmem:[%s2288] sm:$0xff]
        %v2291 = vsel %vm396, %v2289, 0
        %2293 = vmatprep.subr.mxu0 %v1880
        %2294 = vmatpush1.msra.mxu0 %v1879
        %2295 = vmatprep.subr.mxu0 0.0
        %2296 = vmatpush1.msra.mxu0 0.0
        %2297 = vmatprep.subr.mxu0 0.0
        %2298 = vmatpush1.msra.mxu0 0.0
        %2299 = vmatprep.subr.mxu0 0.0
        %2300 = vmatpush1.msra.mxu0 0.0
        %2301 = vmatprep.subr.mxu0 0.0
        %2302 = vmatpush1.msra.mxu0 0.0
        %2303 = vmatprep.subr.mxu0 0.0
        %2304 = vmatpush1.msra.mxu0 0.0
        %2305 = vmatprep.subr.mxu0 0.0
        %2306 = vmatpush1.msra.mxu0 0.0
        %2307 = vmatprep.subr.mxu0 0.0
        %2308 = vmatpush1.msra.mxu0 0.0
        %2309 = vmatprep.subr.mxu0 0.0
        %2310 = vmatpush1.msra.mxu0 0.0
        %2311 = vmatprep.subr.mxu0 0.0
        %2312 = vmatpush1.msra.mxu0 0.0
        %2313 = vmatprep.subr.mxu0 0.0
        %2314 = vmatpush1.msra.mxu0 0.0
        %2315 = vmatprep.subr.mxu0 0.0
        %2316 = vmatpush1.msra.mxu0 0.0
        %2317 = vmatprep.subr.mxu0 0.0
        %2318 = vmatpush1.msra.mxu0 0.0
        %2319 = vmatprep.subr.mxu0 0.0
        %2320 = vmatpush1.msra.mxu0 0.0
        %2321 = vmatprep.subr.mxu0 0.0
        %2322 = vmatpush1.msra.mxu0 0.0
        %2323 = vmatprep.subr.mxu0 0.0
        %2324 = vmatpush1.msra.mxu0 0.0
        %2325 = vmatprep.subr.mxu0 0.0
        %2326 = vmatpush1.msra.mxu0 0.0
        %2327 = vmatprep.subr.mxu0 0.0
        %2328 = vmatpush1.msra.mxu0 0.0
        %2329 = vmatprep.subr.mxu0 0.0
        %2330 = vmatpush1.msra.mxu0 0.0
        %2331 = vmatprep.subr.mxu0 0.0
        %2332 = vmatpush1.msra.mxu0 0.0
        %2333 = vmatprep.subr.mxu0 0.0
        %2334 = vmatpush1.msra.mxu0 0.0
        %2335 = vmatprep.subr.mxu0 0.0
        %2336 = vmatpush1.msra.mxu0 0.0
        %2337 = vmatprep.subr.mxu0 0.0
        %2338 = vmatpush1.msra.mxu0 0.0
        %2339 = vmatprep.subr.mxu0 0.0
        %2340 = vmatpush1.msra.mxu0 0.0
        %2341 = vmatprep.subr.mxu0 0.0
        %2342 = vmatpush1.msra.mxu0 0.0
        %2343 = vmatprep.subr.mxu0 0.0
        %2344 = vmatpush1.msra.mxu0 0.0
        %2345 = vmatprep.subr.mxu0 0.0
        %2346 = vmatpush1.msra.mxu0 0.0
        %2347 = vmatprep.subr.mxu0 0.0
        %2348 = vmatpush1.msra.mxu0 0.0
        %2349 = vmatprep.subr.mxu0 0.0
        %2350 = vmatpush1.msra.mxu0 0.0
        %2351 = vmatprep.subr.mxu0 0.0
        %2352 = vmatpush1.msra.mxu0 0.0
        %2353 = vmatprep.subr.mxu0 0.0
        %2354 = vmatpush1.msra.mxu0 0.0
        %2355 = vmatprep.subr.mxu0 0.0
        %2356 = vmatpush1.msra.mxu0 0.0
        %2357 = vmatprep.mubr.f32.mxu0 0.0
        %2358 = vmatmul.mubr.f32.gmra.mrb[0].mxu0 %v2291
        %v2359 = vpop.f32.mrb[0].mxu0
        %v2360 = vadd.f32 0.0, %v2359
        %v2361 = vpop.f32.mrb[0].mxu0
        %v2362 = vadd.f32 0.0, %v2361
        %2363 = vdwg.mxu0
        %v2364 = vadd.f32 %v2286, %v2360
        %v2365 = vadd.f32 %v2287, %v2362
        %s2366 = scalar_lea.vmem [#allocation7], 40
        %v2367 = vld [vmem:[%s2366] sm:$0xff]
        %v2368 = vsel %vm1867, %v2206, %v2196
        %v2369 = vsel %vm1868, %v2207, %v2197
        %v2371 = vsel %vm396, %v2367, 0
        %2373 = vmatprep.subr.mxu0 %v2369
        %2374 = vmatpush1.msra.mxu0 %v2368
        %2375 = vmatprep.subr.mxu0 0.0
        %2376 = vmatpush1.msra.mxu0 0.0
        %2377 = vmatprep.subr.mxu0 0.0
        %2378 = vmatpush1.msra.mxu0 0.0
        %2379 = vmatprep.subr.mxu0 0.0
        %2380 = vmatpush1.msra.mxu0 0.0
        %2381 = vmatprep.subr.mxu0 0.0
        %2382 = vmatpush1.msra.mxu0 0.0
        %2383 = vmatprep.subr.mxu0 0.0
        %2384 = vmatpush1.msra.mxu0 0.0
        %2385 = vmatprep.subr.mxu0 0.0
        %2386 = vmatpush1.msra.mxu0 0.0
        %2387 = vmatprep.subr.mxu0 0.0
        %2388 = vmatpush1.msra.mxu0 0.0
        %2389 = vmatprep.subr.mxu0 0.0
        %2390 = vmatpush1.msra.mxu0 0.0
        %2391 = vmatprep.subr.mxu0 0.0
        %2392 = vmatpush1.msra.mxu0 0.0
        %2393 = vmatprep.subr.mxu0 0.0
        %2394 = vmatpush1.msra.mxu0 0.0
        %2395 = vmatprep.subr.mxu0 0.0
        %2396 = vmatpush1.msra.mxu0 0.0
        %2397 = vmatprep.subr.mxu0 0.0
        %2398 = vmatpush1.msra.mxu0 0.0
        %2399 = vmatprep.subr.mxu0 0.0
        %2400 = vmatpush1.msra.mxu0 0.0
        %2401 = vmatprep.subr.mxu0 0.0
        %2402 = vmatpush1.msra.mxu0 0.0
        %2403 = vmatprep.subr.mxu0 0.0
        %2404 = vmatpush1.msra.mxu0 0.0
        %2405 = vmatprep.subr.mxu0 0.0
        %2406 = vmatpush1.msra.mxu0 0.0
        %2407 = vmatprep.subr.mxu0 0.0
        %2408 = vmatpush1.msra.mxu0 0.0
        %2409 = vmatprep.subr.mxu0 0.0
        %2410 = vmatpush1.msra.mxu0 0.0
        %2411 = vmatprep.subr.mxu0 0.0
        %2412 = vmatpush1.msra.mxu0 0.0
        %2413 = vmatprep.subr.mxu0 0.0
        %2414 = vmatpush1.msra.mxu0 0.0
        %2415 = vmatprep.subr.mxu0 0.0
        %2416 = vmatpush1.msra.mxu0 0.0
        %2417 = vmatprep.subr.mxu0 0.0
        %2418 = vmatpush1.msra.mxu0 0.0
        %2419 = vmatprep.subr.mxu0 0.0
        %2420 = vmatpush1.msra.mxu0 0.0
        %2421 = vmatprep.subr.mxu0 0.0
        %2422 = vmatpush1.msra.mxu0 0.0
        %2423 = vmatprep.subr.mxu0 0.0
        %2424 = vmatpush1.msra.mxu0 0.0
        %2425 = vmatprep.subr.mxu0 0.0
        %2426 = vmatpush1.msra.mxu0 0.0
        %2427 = vmatprep.subr.mxu0 0.0
        %2428 = vmatpush1.msra.mxu0 0.0
        %2429 = vmatprep.subr.mxu0 0.0
        %2430 = vmatpush1.msra.mxu0 0.0
        %2431 = vmatprep.subr.mxu0 0.0
        %2432 = vmatpush1.msra.mxu0 0.0
        %2433 = vmatprep.subr.mxu0 0.0
        %2434 = vmatpush1.msra.mxu0 0.0
        %2435 = vmatprep.subr.mxu0 0.0
        %2436 = vmatpush1.msra.mxu0 0.0
        %2437 = vmatprep.mubr.f32.mxu0 0.0
        %2438 = vmatmul.mubr.f32.gmra.mrb[0].mxu0 %v2371
        %v2439 = vpop.f32.mrb[0].mxu0
        %v2440 = vadd.f32 0.0, %v2439
        %v2441 = vpop.f32.mrb[0].mxu0
        %v2442 = vadd.f32 0.0, %v2441
        %2443 = vdwg.mxu0
        %v2444 = vadd.f32 %v2364, %v2440
        %v2445 = vadd.f32 %v2365, %v2442
        %s2446 = scalar_lea.vmem [#allocation7], 48
        %v2447 = vld [vmem:[%s2446] sm:$0xff]
        %v2448 = vsel %vm1875, %v1904, %v1928
        %v2449 = vsel %vm1876, %v1905, %v1929
        %v2451 = vsel %vm396, %v2447, 0
        %2453 = vmatprep.subr.mxu0 %v2449
        %2454 = vmatpush1.msra.mxu0 %v2448
        %2455 = vmatprep.subr.mxu0 0.0
        %2456 = vmatpush1.msra.mxu0 0.0
        %2457 = vmatprep.subr.mxu0 0.0
        %2458 = vmatpush1.msra.mxu0 0.0
        %2459 = vmatprep.subr.mxu0 0.0
        %2460 = vmatpush1.msra.mxu0 0.0
        %2461 = vmatprep.subr.mxu0 0.0
        %2462 = vmatpush1.msra.mxu0 0.0
        %2463 = vmatprep.subr.mxu0 0.0
        %2464 = vmatpush1.msra.mxu0 0.0
        %2465 = vmatprep.subr.mxu0 0.0
        %2466 = vmatpush1.msra.mxu0 0.0
        %2467 = vmatprep.subr.mxu0 0.0
        %2468 = vmatpush1.msra.mxu0 0.0
        %2469 = vmatprep.subr.mxu0 0.0
        %2470 = vmatpush1.msra.mxu0 0.0
        %2471 = vmatprep.subr.mxu0 0.0
        %2472 = vmatpush1.msra.mxu0 0.0
        %2473 = vmatprep.subr.mxu0 0.0
        %2474 = vmatpush1.msra.mxu0 0.0
        %2475 = vmatprep.subr.mxu0 0.0
        %2476 = vmatpush1.msra.mxu0 0.0
        %2477 = vmatprep.subr.mxu0 0.0
        %2478 = vmatpush1.msra.mxu0 0.0
        %2479 = vmatprep.subr.mxu0 0.0
        %2480 = vmatpush1.msra.mxu0 0.0
        %2481 = vmatprep.subr.mxu0 0.0
        %2482 = vmatpush1.msra.mxu0 0.0
        %2483 = vmatprep.subr.mxu0 0.0
        %2484 = vmatpush1.msra.mxu0 0.0
        %2485 = vmatprep.subr.mxu0 0.0
        %2486 = vmatpush1.msra.mxu0 0.0
        %2487 = vmatprep.subr.mxu0 0.0
        %2488 = vmatpush1.msra.mxu0 0.0
        %2489 = vmatprep.subr.mxu0 0.0
        %2490 = vmatpush1.msra.mxu0 0.0
        %2491 = vmatprep.subr.mxu0 0.0
        %2492 = vmatpush1.msra.mxu0 0.0
        %2493 = vmatprep.subr.mxu0 0.0
        %2494 = vmatpush1.msra.mxu0 0.0
        %2495 = vmatprep.subr.mxu0 0.0
        %2496 = vmatpush1.msra.mxu0 0.0
        %2497 = vmatprep.subr.mxu0 0.0
        %2498 = vmatpush1.msra.mxu0 0.0
        %2499 = vmatprep.subr.mxu0 0.0
        %2500 = vmatpush1.msra.mxu0 0.0
        %2501 = vmatprep.subr.mxu0 0.0
        %2502 = vmatpush1.msra.mxu0 0.0
        %2503 = vmatprep.subr.mxu0 0.0
        %2504 = vmatpush1.msra.mxu0 0.0
        %2505 = vmatprep.subr.mxu0 0.0
        %2506 = vmatpush1.msra.mxu0 0.0
        %2507 = vmatprep.subr.mxu0 0.0
        %2508 = vmatpush1.msra.mxu0 0.0
        %2509 = vmatprep.subr.mxu0 0.0
        %2510 = vmatpush1.msra.mxu0 0.0
        %2511 = vmatprep.subr.mxu0 0.0
        %2512 = vmatpush1.msra.mxu0 0.0
        %2513 = vmatprep.subr.mxu0 0.0
        %2514 = vmatpush1.msra.mxu0 0.0
        %2515 = vmatprep.subr.mxu0 0.0
        %2516 = vmatpush1.msra.mxu0 0.0
        %2517 = vmatprep.mubr.f32.mxu0 0.0
        %2518 = vmatmul.mubr.f32.gmra.mrb[0].mxu0 %v2451
        %v2519 = vpop.f32.mrb[0].mxu0
        %v2520 = vadd.f32 0.0, %v2519
        %v2521 = vpop.f32.mrb[0].mxu0
        %v2522 = vadd.f32 0.0, %v2521
        %2523 = vdwg.mxu0
        %v2524 = vadd.f32 %v2444, %v2520
        %v2525 = vadd.f32 %v2445, %v2522
        %s2526 = scalar_lea.vmem [#allocation7], 56
        %v2527 = vld [vmem:[%s2526] sm:$0xff]
        %v2528 = vsel %vm1875, %v1950, %v1940
        %v2529 = vsel %vm1876, %v1951, %v1941
        %v2531 = vsel %vm396, %v2527, 0
        %2533 = vmatprep.subr.mxu0 %v2529
        %2534 = vmatpush1.msra.mxu0 %v2528
        %2535 = vmatprep.subr.mxu0 0.0
        %2536 = vmatpush1.msra.mxu0 0.0
        %2537 = vmatprep.subr.mxu0 0.0
        %2538 = vmatpush1.msra.mxu0 0.0
        %2539 = vmatprep.subr.mxu0 0.0
        %2540 = vmatpush1.msra.mxu0 0.0
        %2541 = vmatprep.subr.mxu0 0.0
        %2542 = vmatpush1.msra.mxu0 0.0
        %2543 = vmatprep.subr.mxu0 0.0
        %2544 = vmatpush1.msra.mxu0 0.0
        %2545 = vmatprep.subr.mxu0 0.0
        %2546 = vmatpush1.msra.mxu0 0.0
        %2547 = vmatprep.subr.mxu0 0.0
        %2548 = vmatpush1.msra.mxu0 0.0
        %2549 = vmatprep.subr.mxu0 0.0
        %2550 = vmatpush1.msra.mxu0 0.0
        %2551 = vmatprep.subr.mxu0 0.0
        %2552 = vmatpush1.msra.mxu0 0.0
        %2553 = vmatprep.subr.mxu0 0.0
        %2554 = vmatpush1.msra.mxu0 0.0
        %2555 = vmatprep.subr.mxu0 0.0
        %2556 = vmatpush1.msra.mxu0 0.0
        %2557 = vmatprep.subr.mxu0 0.0
        %2558 = vmatpush1.msra.mxu0 0.0
        %2559 = vmatprep.subr.mxu0 0.0
        %2560 = vmatpush1.msra.mxu0 0.0
        %2561 = vmatprep.subr.mxu0 0.0
        %2562 = vmatpush1.msra.mxu0 0.0
        %2563 = vmatprep.subr.mxu0 0.0
        %2564 = vmatpush1.msra.mxu0 0.0
        %2565 = vmatprep.subr.mxu0 0.0
        %2566 = vmatpush1.msra.mxu0 0.0
        %2567 = vmatprep.subr.mxu0 0.0
        %2568 = vmatpush1.msra.mxu0 0.0
        %2569 = vmatprep.subr.mxu0 0.0
        %2570 = vmatpush1.msra.mxu0 0.0
        %2571 = vmatprep.subr.mxu0 0.0
        %2572 = vmatpush1.msra.mxu0 0.0
        %2573 = vmatprep.subr.mxu0 0.0
        %2574 = vmatpush1.msra.mxu0 0.0
        %2575 = vmatprep.subr.mxu0 0.0
        %2576 = vmatpush1.msra.mxu0 0.0
        %2577 = vmatprep.subr.mxu0 0.0
        %2578 = vmatpush1.msra.mxu0 0.0
        %2579 = vmatprep.subr.mxu0 0.0
        %2580 = vmatpush1.msra.mxu0 0.0
        %2581 = vmatprep.subr.mxu0 0.0
        %2582 = vmatpush1.msra.mxu0 0.0
        %2583 = vmatprep.subr.mxu0 0.0
        %2584 = vmatpush1.msra.mxu0 0.0
        %2585 = vmatprep.subr.mxu0 0.0
        %2586 = vmatpush1.msra.mxu0 0.0
        %2587 = vmatprep.subr.mxu0 0.0
        %2588 = vmatpush1.msra.mxu0 0.0
        %2589 = vmatprep.subr.mxu0 0.0
        %2590 = vmatpush1.msra.mxu0 0.0
        %2591 = vmatprep.subr.mxu0 0.0
        %2592 = vmatpush1.msra.mxu0 0.0
        %2593 = vmatprep.subr.mxu0 0.0
        %2594 = vmatpush1.msra.mxu0 0.0
        %2595 = vmatprep.subr.mxu0 0.0
        %2596 = vmatpush1.msra.mxu0 0.0
        %2597 = vmatprep.mubr.f32.mxu0 0.0
        %2598 = vmatmul.mubr.f32.gmra.mrb[0].mxu0 %v2531
        %v2599 = vpop.f32.mrb[0].mxu0
        %v2600 = vadd.f32 0.0, %v2599
        %v2601 = vpop.f32.mrb[0].mxu0
        %v2602 = vadd.f32 0.0, %v2601
        %2603 = vdwg.mxu0
        %v2604 = vadd.f32 %v2524, %v2600
        %v2605 = vadd.f32 %v2525, %v2602
        %s2606 = scalar_lea.vmem [#allocation7], 64
        %v2607 = vld [vmem:[%s2606] sm:$0xff]
        %v2608 = vsel %vm1875, %v2106, %v2108
        %v2609 = vsel %vm1876, %v2107, %v2109
        %v2611 = vsel %vm396, %v2607, 0
        %2613 = vmatprep.subr.mxu0 %v2609
        %2614 = vmatpush1.msra.mxu0 %v2608
        %2615 = vmatprep.subr.mxu0 0.0
        %2616 = vmatpush1.msra.mxu0 0.0
        %2617 = vmatprep.subr.mxu0 0.0
        %2618 = vmatpush1.msra.mxu0 0.0
        %2619 = vmatprep.subr.mxu0 0.0
        %2620 = vmatpush1.msra.mxu0 0.0
        %2621 = vmatprep.subr.mxu0 0.0
        %2622 = vmatpush1.msra.mxu0 0.0
        %2623 = vmatprep.subr.mxu0 0.0
        %2624 = vmatpush1.msra.mxu0 0.0
        %2625 = vmatprep.subr.mxu0 0.0
        %2626 = vmatpush1.msra.mxu0 0.0
        %2627 = vmatprep.subr.mxu0 0.0
        %2628 = vmatpush1.msra.mxu0 0.0
        %2629 = vmatprep.subr.mxu0 0.0
        %2630 = vmatpush1.msra.mxu0 0.0
        %2631 = vmatprep.subr.mxu0 0.0
        %2632 = vmatpush1.msra.mxu0 0.0
        %2633 = vmatprep.subr.mxu0 0.0
        %2634 = vmatpush1.msra.mxu0 0.0
        %2635 = vmatprep.subr.mxu0 0.0
        %2636 = vmatpush1.msra.mxu0 0.0
        %2637 = vmatprep.subr.mxu0 0.0
        %2638 = vmatpush1.msra.mxu0 0.0
        %2639 = vmatprep.subr.mxu0 0.0
        %2640 = vmatpush1.msra.mxu0 0.0
        %2641 = vmatprep.subr.mxu0 0.0
        %2642 = vmatpush1.msra.mxu0 0.0
        %2643 = vmatprep.subr.mxu0 0.0
        %2644 = vmatpush1.msra.mxu0 0.0
        %2645 = vmatprep.subr.mxu0 0.0
        %2646 = vmatpush1.msra.mxu0 0.0
        %2647 = vmatprep.subr.mxu0 0.0
        %2648 = vmatpush1.msra.mxu0 0.0
        %2649 = vmatprep.subr.mxu0 0.0
        %2650 = vmatpush1.msra.mxu0 0.0
        %2651 = vmatprep.subr.mxu0 0.0
        %2652 = vmatpush1.msra.mxu0 0.0
        %2653 = vmatprep.subr.mxu0 0.0
        %2654 = vmatpush1.msra.mxu0 0.0
        %2655 = vmatprep.subr.mxu0 0.0
        %2656 = vmatpush1.msra.mxu0 0.0
        %2657 = vmatprep.subr.mxu0 0.0
        %2658 = vmatpush1.msra.mxu0 0.0
        %2659 = vmatprep.subr.mxu0 0.0
        %2660 = vmatpush1.msra.mxu0 0.0
        %2661 = vmatprep.subr.mxu0 0.0
        %2662 = vmatpush1.msra.mxu0 0.0
        %2663 = vmatprep.subr.mxu0 0.0
        %2664 = vmatpush1.msra.mxu0 0.0
        %2665 = vmatprep.subr.mxu0 0.0
        %2666 = vmatpush1.msra.mxu0 0.0
        %2667 = vmatprep.subr.mxu0 0.0
        %2668 = vmatpush1.msra.mxu0 0.0
        %2669 = vmatprep.subr.mxu0 0.0
        %2670 = vmatpush1.msra.mxu0 0.0
        %2671 = vmatprep.subr.mxu0 0.0
        %2672 = vmatpush1.msra.mxu0 0.0
        %2673 = vmatprep.subr.mxu0 0.0
        %2674 = vmatpush1.msra.mxu0 0.0
        %2675 = vmatprep.subr.mxu0 0.0
        %2676 = vmatpush1.msra.mxu0 0.0
        %2677 = vmatprep.mubr.f32.mxu0 0.0
        %2678 = vmatmul.mubr.f32.gmra.mrb[0].mxu0 %v2611
        %v2679 = vpop.f32.mrb[0].mxu0
        %v2680 = vadd.f32 0.0, %v2679
        %v2681 = vpop.f32.mrb[0].mxu0
        %v2682 = vadd.f32 0.0, %v2681
        %2683 = vdwg.mxu0
        %v2684 = vadd.f32 %v2604, %v2680
        %v2685 = vadd.f32 %v2605, %v2682
        %v2686 = vadd.f32 %v2684, %v2685
        %2687 = vadd.xlane.f32.xlu0 %v2686
        %v2688 = vpop.xlane.xlu0 %2687
        %v2689 = vmul.f32 %v2688, %v1843
        %v2690 = vsub.f32 %v2684, %v2689
        %v2691 = vsub.f32 %v2685, %v2689
        %v2692 = vmul.f32 %v2690, %v2690
        %v2693 = vmul.f32 %v2691, %v2691
        %v2694 = vadd.f32 %v2692, %v2693
        %2695 = vadd.xlane.f32.xlu0 %v2694
        %v2696 = vpop.xlane.xlu0 %2695
        %v2697 = vmul.f32 %v2696, %v1843
        %v2698 = vadd.f32 %v2697, 1e-05
        %v2699 = vrsqrt.pop %v2698
        %v2700 = vmul.f32 %v2690, %v2699
        %v2701 = vmul.f32 %v2691, %v2699
        %v2702 = vmax.f32 %v2700, 0.0
        %v2703 = vmax.f32 %v2701, 0.0
        %2704 = vst [vmem:[%s366] sm:$0xff] %v2702
        %2705 = vst [vmem:[%s366 + $0x8] sm:$0xff] %v2703
        %p2706 = scmp.lt.s32.totalorder %s21, 1
        %s2707 = scalar_select %p2706, %s21, 1
        %s2708 = smul.addr %s2707, 2
        %s2709 = smul.addr %s2708, 8
        %s2710 = scalar_lea.vmem %s8, %s2709
        // Predicated region
        $region65: #{up_conv_pallas.1} parent=51 // pred_check
          %p2711 = pneg %p217
        $region66: #{up_conv_pallas.1} parent=51 // pred_check_branch
          %2713 = sbr.rel (%p2711) target = $region68
        $region67: #{up_conv_pallas.1} parent=51 // pred_region
          _
        $region68: #{up_conv_pallas.1} parent=51 // pred_fallthru
          _
      $region52: #{up_conv_pallas.1} parent=5 // pred_fallthru
        _
      %p2714 = scmp.le.s32.totalorder 2, %s16
      // Predicated region
      $region69: #{up_conv_pallas.1} parent=5 // pred_check
        %p2715 = pneg %p2714
      $region70: #{up_conv_pallas.1} parent=5 // pred_check_branch
        %2717 = sbr.rel (%p2715) target = $region72
      $region71: #{up_conv_pallas.1} parent=5 // pred_region
        %s2718 = ssub.s32 %s16, 2
        // Predicated region
        $region73: #{up_conv_pallas.1} parent=71 // pred_check
          %p2719 = pneg %p223
        $region74: #{up_conv_pallas.1} parent=71 // pred_check_branch
          %2721 = sbr.rel (%p2719) target = $region76
        $region75: #{up_conv_pallas.1} parent=71 // pred_region
          %p2722 = scmp.lt.s32.totalorder %s22, 1
          %s2723 = scalar_select %p2722, %s22, 1
          %s2724 = smul.addr %s2723, 2
          %s2725 = smul.addr %s2724, 8
          %s2726 = scalar_lea.vmem %s8, %s2725
        $region76: #{up_conv_pallas.1} parent=71 // pred_fallthru
          _
      $region72: #{up_conv_pallas.1} parent=5 // pred_fallthru
        _
    $region6: #{up_conv_pallas.1} parent=1 // loop_footer
      %s20 = sadd.s32 1, %s16
    $region7: #{up_conv_pallas.1} parent=1 // loop_footer_branch
      %15 = sbr.rel target = $region3
    $region8: #{up_conv_pallas.1} parent=1 // loop_exit
      _
    %2727 = vsyncpa [#allocation4], 1
    %s2728 = scalar_lea.sflag [#allocation4], 1
    %2729 = vsyncpa %s2728, 1
    %2730 = vsyncpa [#allocation6], 1

</llo_original>
